<compile_context>
chip_gen: v5e
topology: v5e:2x2
jax: 0.10.0
libtpu: 0.0.40
codegen_flags: <defaults>
</compile_context>

<pallas_src>
import functools
import math

import jax
import jax.numpy as jnp
from jax.experimental import pallas as pl
from jax.experimental.pallas import tpu as pltpu


_LANE = 128    # TPU vreg lane width
_LTILE = 256   # lane tile for streamed matmuls (bounds live vregs)


# ----------------------------- Pallas kernel --------------------------------

def _krylov_kernel(Abd_ref, Astk_ref, dB_ref, Cbd_ref, k_ref, Apw_s, Xc_s,
                   *, L, N, G, CG):
    """Krylov recurrence + C-contraction for one group of G block-packed heads.

    Abd_ref : (1, GN, GN)  block-diagonal dA (pre-packed in the wrapper)
    Astk_ref: (1, GN, N)   vertical stack of the G diagonal (N,N) blocks
    dB_ref  : (1, GN, 1)   stacked dB column (Krylov column 0)
    Cbd_ref : (1, CG, GN)  block matrix of C; row c*G+g holds C[c, head g]
    k_ref   : (1, CG, L)   output block; row c*G+g = k[c, head g, :]
    Apw_s   : VMEM (GN, GN) persistent block-diag power  blockdiag(dA_g^l)
    Xc_s    : VMEM (GN, L)  Krylov columns (column l = dA^l dB, per head)
    """
    f32 = jnp.float32

    # Mutable copy of the block-diagonal power (updated in place per doubling).
    Apw_s[...] = Abd_ref[0]
    # Stacked diagonal blocks (register-resident): block g = dA_g^l.
    astk = Astk_ref[0]

    # Krylov column 0.
    Xc_s[:, 0:1] = dB_ref[0]

    def write_diag(stack):
        # Scatter the G (N, N) blocks of `stack` onto the diagonal of Apw_s.
        for g in range(G):
            Apw_s[g * N:(g + 1) * N, g * N:(g + 1) * N] = stack[g * N:(g + 1) * N, :]

    # log2(L) doubling: columns [l, l+chunk) = Apow @ columns [0, chunk), then
    # Apow <- Apow @ Apow done rectangularly on the stacked diagonal blocks.
    l = 1
    while l < L:
        chunk = min(l, L - l)
        need_square = (l + chunk) < L
        if need_square and chunk < _LANE:
            # Fused MXU pass: new columns and squared diagonal blocks in one
            # (GN, GN) @ (GN, chunk + N) matmul (early chunks are latency-bound).
            rhs = jnp.concatenate([Xc_s[:, 0:chunk], astk], axis=1)
            res = jnp.dot(Apw_s[...], rhs, preferred_element_type=f32)
            Xc_s[:, l:l + chunk] = res[:, :chunk]
            astk = res[:, chunk:]
            write_diag(astk)
        else:
            # Column extension streamed in lane tiles (bounds live vregs).
            for j in range(0, chunk, _LTILE):
                t = min(_LTILE, chunk - j)
                Xc_s[:, l + j:l + j + t] = jnp.dot(
                    Apw_s[...], Xc_s[:, j:j + t], preferred_element_type=f32)
            if need_square:
                # Rectangular squaring: block-diag x stacked blocks.
                astk = jnp.dot(Apw_s[...], astk, preferred_element_type=f32)
                write_diag(astk)
        l += chunk

    # Contraction with C, fused over channels/heads and streamed over L:
    #   k[c*G+g, :] = C[c, g, :] @ X_g   via  (CG, GN) @ (GN, Ltile).
    cbd = Cbd_ref[0]
    for l0 in range(0, L, _LTILE):
        t = min(_LTILE, L - l0)
        k_ref[0, :, l0:l0 + t] = jnp.dot(
            cbd, Xc_s[:, l0:l0 + t], preferred_element_type=f32).astype(k_ref.dtype)


def _pick_group_size(H, N):
    """Heads packed per grid step: fill ~128 MXU contraction lanes, divisor of H."""
    target = max(1, min(H, _LANE // max(N, 1)))
    for g in range(target, 0, -1):
        if H % g == 0:
            return g
    return 1


def krylov_pallas(dA, dB, C, L):
    """k[c, h, l] = C[c, h, :] @ dA[h]^l @ dB[h, :]  -> (Cch, H, L) float32."""
    H, N, _ = dA.shape
    Cch = C.shape[0]
    G = _pick_group_size(H, N)
    ng = H // G
    GN = G * N
    CG = Cch * G

    f32 = jnp.float32
    dA = dA.astype(f32)
    dB = dB.astype(f32)
    C = C.astype(f32)

    # --- wrapper-side packing (pure layout; DMA'd in, hidden by the pipeline) --
    eyeG = jnp.eye(G, dtype=f32)
    dAg = dA.reshape(ng, G, N, N)
    Abd = jnp.einsum('igmn,gj->igmjn', dAg, eyeG).reshape(ng, GN, GN)   # blockdiag(dA_g)
    Astk = dA.reshape(ng, GN, N)                                        # stacked blocks
    dBg = dB.reshape(ng, GN, 1)                                         # stacked dB column
    Cg = jnp.transpose(C, (1, 0, 2)).reshape(ng, G, Cch, N)             # [i, g, c, n]
    Cg = jnp.transpose(Cg, (0, 2, 1, 3))                                # [i, c, g, n]
    Cbd = jnp.einsum('icgn,gj->icgjn', Cg, eyeG).reshape(ng, CG, GN)    # block matrix of C

    kernel = functools.partial(_krylov_kernel, L=L, N=N, G=G, CG=CG)

    # Advisory cost estimate (executed MACs, incl. block-diag structural zeros).
    n_dbl = max(int(math.ceil(math.log2(L))) - 1, 0) if L > 1 else 0
    flops = int(2 * ng * (GN * GN * L + n_dbl * GN * GN * N + CG * GN * L))
    bytes_accessed = int(4 * ng * (GN * GN + GN * N + GN + CG * GN + CG * L))

    # VMEM sizing: double-buffered ins/outs + scratch, headroom for Mosaic.
    vmem_est = 4 * (2 * (GN * GN + GN * N + GN + CG * GN) + 2 * CG * L
                    + GN * GN + GN * L)
    try:
        phys_vmem = getattr(pltpu.get_tpu_info(), 'vmem_capacity_bytes',
                            128 * 2 ** 20)
    except Exception:
        phys_vmem = 128 * 2 ** 20
    # ~48 MiB cap on v7x (64 MiB physical), ~96 MiB on v5e/v6e.
    vmem_limit = int(min(int(0.75 * phys_vmem), max(32 * 2 ** 20, 2 * vmem_est)))

    # TODO(synk): for tiny H where ng == 1 the second v7x TensorCore stays idle;
    # a second parallel axis (over Cch or L-tiles) could recover it.
    k_blk = pl.pallas_call(
        kernel,
        out_shape=jax.ShapeDtypeStruct((ng, CG, L), f32),
        grid_spec=pltpu.PrefetchScalarGridSpec(
            num_scalar_prefetch=0,
            grid=(ng,),
            in_specs=[
                pl.BlockSpec((1, GN, GN), lambda i: (i, 0, 0)),
                pl.BlockSpec((1, GN, N), lambda i: (i, 0, 0)),
                pl.BlockSpec((1, GN, 1), lambda i: (i, 0, 0)),
                pl.BlockSpec((1, CG, GN), lambda i: (i, 0, 0)),
            ],
            out_specs=pl.BlockSpec((1, CG, L), lambda i: (i, 0, 0)),
            scratch_shapes=[pltpu.VMEM((GN, GN), f32),
                            pltpu.VMEM((GN, L), f32)],
        ),
        compiler_params=pltpu.CompilerParams(
            dimension_semantics=("parallel",),
            vmem_limit_bytes=vmem_limit),
        cost_estimate=pl.CostEstimate(
            flops=flops, transcendentals=0, bytes_accessed=bytes_accessed),
    )(Abd, Astk, dBg, Cbd)

    # (ng, Cch*G, L) -> (Cch, H, L); a cheap output-sized transpose here buys
    # fully lane+sublane-dense stores inside the kernel.
    k = k_blk.reshape(ng, Cch, G, L).transpose(1, 0, 2, 3).reshape(Cch, H, L)
    return k


# ------------------------------- JAX glue ------------------------------------

def bilinear(dt, A, B):
    """Bilinear (Tustin) discretization, mirrors the torch helper."""
    N = A.shape[-1]
    I = jnp.eye(N, dtype=A.dtype)
    A_backwards = I - dt[:, None, None] / 2 * A
    A_forwards = I + dt[:, None, None] / 2 * A
    dB = dt[..., None] * jnp.linalg.solve(A_backwards, B[..., None])[..., 0]
    dA = jnp.linalg.solve(A_backwards, A_forwards)
    return dA, dB


def sskernel_forward(A, B, C, log_dt, L):
    """Equivalent of the module's forward(state=None, rate=1.0, L=L).

    Returns (k, k_state) with k: (Cch, H, L) float32, k_state: None.
    """
    dt = jnp.exp(log_dt)
    dA, dB = bilinear(dt, A, B)
    k = krylov_pallas(dA, dB, C, L)
    # TODO(synk): state != None branch (k_state via krylov(L, dA, dA@state, C))
    # not implemented; only the default state=None path is covered.
    return k, None


# ------------------------------- reference -----------------------------------

def _reference_k(A, B, C, log_dt, L):
    dt = jnp.exp(log_dt)
    dA, dB = bilinear(dt, A, B)

    def step(x, _):
        return jnp.einsum('hnm,hm->hn', dA, x), jnp.einsum('chn,hn->ch', C, x)

    _, ks = jax.lax.scan(step, dB, None, length=L)   # (L, Cch, H)
    return jnp.moveaxis(ks, 0, -1)                   # (Cch, H, L)


# --------------------------------- main ---------------------------------------

if __name__ == "__main__":
    # Module shapes: A:(H,N,N), B:(H,N), C:(Cch,H,N), log_dt:(H,), length L.
    H, N, Cch = 4, 32, 2

    key = jax.random.PRNGKey(0)
    kA, kB, kC, kdt = jax.random.split(key, 4)

    # Deterministic, stable synthetic parameters (real-valued dense SSM).
    A = (0.1 * jax.random.normal(kA, (H, N, N), dtype=jnp.float32)
         - 1.0 * jnp.eye(N, dtype=jnp.float32))
    B = jax.random.normal(kB, (H, N), dtype=jnp.float32)
    C = jax.random.normal(kC, (Cch, H, N), dtype=jnp.float32)
    # log_dt ~ Uniform(log 1e-3, log 1e-1), standard S4 init.
    log_dt = (jax.random.uniform(kdt, (H,), dtype=jnp.float32)
              * (jnp.log(0.1) - jnp.log(0.001)) + jnp.log(0.001))

    fwd = jax.jit(sskernel_forward, static_argnums=(4,))

    # L=128 exercises the fused small-chunk doubling path; L=512 additionally
    # exercises the wide unfused extension + rectangular squaring and the
    # multi-tile streamed contraction.
    for L in (128, 512):
        k, k_state = fwd(A, B, C, log_dt, L)
        k = jax.block_until_ready(k)

        assert k.shape == (Cch, H, L) and k.dtype == jnp.float32
        assert k_state is None

        k_ref = _reference_k(A, B, C, log_dt, L)
        max_err = float(jnp.max(jnp.abs(k - k_ref)))
        assert jnp.allclose(k, k_ref, rtol=1e-3, atol=1e-3), (L, max_err)

    print("KERNEL_OK")
</pallas_src>

<mosaic_0001>
module attributes {stable_mosaic.version = 11 : i64} {
  func.func @_krylov_kernel(%arg0: i32, %arg1: memref<1x128x128xf32, #tpu.memory_space<vmem>>, %arg2: memref<1x128x32xf32, #tpu.memory_space<vmem>>, %arg3: memref<1x128x1xf32, #tpu.memory_space<vmem>>, %arg4: memref<1x8x128xf32, #tpu.memory_space<vmem>>, %arg5: memref<1x8x128xf32, #tpu.memory_space<vmem>>, %arg6: memref<128x128xf32, #tpu.memory_space<vmem>>, %arg7: memref<128x128xf32, #tpu.memory_space<vmem>>) attributes {dimension_semantics = [#tpu.dimension_semantics<parallel>], iteration_bounds = array<i64: 1>, scalar_prefetch = 0 : i64, scratch_operands = 2 : i64, tpu.core_type = #tpu.core_type<tc>, window_params = [{transform_indices = @transform_0, window_bounds = array<i64: 1, 128, 128>}, {transform_indices = @transform_1, window_bounds = array<i64: 1, 128, 32>}, {transform_indices = @transform_2, window_bounds = array<i64: 1, 128, 1>}, {transform_indices = @transform_3, window_bounds = array<i64: 1, 8, 128>}, {transform_indices = @transform_4, window_bounds = array<i64: 1, 8, 128>}]} {
    %c0 = arith.constant 0 : index
    %c0_0 = arith.constant 0 : index
    %c0_1 = arith.constant 0 : index
    %0 = vector.load %arg1[%c0, %c0_0, %c0_1] : memref<1x128x128xf32, #tpu.memory_space<vmem>>, vector<1x128x128xf32>
    %1 = vector.shape_cast %0 : vector<1x128x128xf32> to vector<128x128xf32>
    %c0_2 = arith.constant 0 : index
    %c0_3 = arith.constant 0 : index
    %2 = vector.load %arg6[%c0_2, %c0_3] : memref<128x128xf32, #tpu.memory_space<vmem>>, vector<128x128xf32>
    tpu.vector_store %arg6[%c0_2, %c0_3], %1 {strides = array<i32>} : memref<128x128xf32, #tpu.memory_space<vmem>>, vector<128x128xf32>,
    %c0_4 = arith.constant 0 : index
    %c0_5 = arith.constant 0 : index
    %c0_6 = arith.constant 0 : index
    %3 = vector.load %arg2[%c0_4, %c0_5, %c0_6] : memref<1x128x32xf32, #tpu.memory_space<vmem>>, vector<1x128x32xf32>
    %4 = vector.shape_cast %3 : vector<1x128x32xf32> to vector<128x32xf32>
    %c0_7 = arith.constant 0 : index
    %c0_8 = arith.constant 0 : index
    %c0_9 = arith.constant 0 : index
    %5 = vector.load %arg3[%c0_7, %c0_8, %c0_9] : memref<1x128x1xf32, #tpu.memory_space<vmem>>, vector<1x128x1xf32>
    %6 = vector.shape_cast %5 : vector<1x128x1xf32> to vector<128x1xf32>
    %c0_10 = arith.constant 0 : index
    %c0_11 = arith.constant 0 : index
    %7 = vector.load %arg7[%c0_10, %c0_11] : memref<128x128xf32, #tpu.memory_space<vmem>>, vector<128x1xf32>
    tpu.vector_store %arg7[%c0_10, %c0_11], %6 {strides = array<i32>} : memref<128x128xf32, #tpu.memory_space<vmem>>, vector<128x1xf32>,
    %c0_12 = arith.constant 0 : index
    %c0_13 = arith.constant 0 : index
    %8 = vector.load %arg7[%c0_12, %c0_13] : memref<128x128xf32, #tpu.memory_space<vmem>>, vector<128x1xf32>
    %9 = tpu.concatenate %8, %4 in 1 : vector<128x1xf32>, vector<128x32xf32> -> vector<128x33xf32>
    %c0_14 = arith.constant 0 : index
    %c0_15 = arith.constant 0 : index
    %10 = vector.load %arg6[%c0_14, %c0_15] : memref<128x128xf32, #tpu.memory_space<vmem>>, vector<128x128xf32>
    %cst = arith.constant dense<0.000000e+00> : vector<128x33xf32>
    %11 = tpu.matmul %10, %9, %cst {dimension_numbers = #tpu.dot_dimension_numbers<[1], [0], [0], [1], [0, 0, 1, 1], [], []>} : vector<128x128xf32>, vector<128x33xf32>, vector<128x33xf32> -> vector<128x33xf32>
    %12 = vector.extract_strided_slice %11 {offsets = [0, 0], sizes = [128, 1], strides = [1, 1]} : vector<128x33xf32> to vector<128x1xf32>
    %c0_16 = arith.constant 0 : index
    %c1 = arith.constant 1 : index
    %13 = vector.load %arg7[%c0_16, %c1] : memref<128x128xf32, #tpu.memory_space<vmem>>, vector<128x1xf32>
    tpu.vector_store %arg7[%c0_16, %c1], %12 {strides = array<i32>} : memref<128x128xf32, #tpu.memory_space<vmem>>, vector<128x1xf32>,
    %14 = vector.extract_strided_slice %11 {offsets = [0, 1], sizes = [128, 32], strides = [1, 1]} : vector<128x33xf32> to vector<128x32xf32>
    %15 = vector.extract_strided_slice %14 {offsets = [0, 0], sizes = [32, 32], strides = [1, 1]} : vector<128x32xf32> to vector<32x32xf32>
    %c0_17 = arith.constant 0 : index
    %c0_18 = arith.constant 0 : index
    %16 = vector.load %arg6[%c0_17, %c0_18] : memref<128x128xf32, #tpu.memory_space<vmem>>, vector<32x32xf32>
    tpu.vector_store %arg6[%c0_17, %c0_18], %15 {strides = array<i32>} : memref<128x128xf32, #tpu.memory_space<vmem>>, vector<32x32xf32>,
    %17 = vector.extract_strided_slice %14 {offsets = [32, 0], sizes = [32, 32], strides = [1, 1]} : vector<128x32xf32> to vector<32x32xf32>
    %c32 = arith.constant 32 : index
    %c32_19 = arith.constant 32 : index
    %18 = vector.load %arg6[%c32, %c32_19] : memref<128x128xf32, #tpu.memory_space<vmem>>, vector<32x32xf32>
    tpu.vector_store %arg6[%c32, %c32_19], %17 {strides = array<i32>} : memref<128x128xf32, #tpu.memory_space<vmem>>, vector<32x32xf32>,
    %19 = vector.extract_strided_slice %14 {offsets = [64, 0], sizes = [32, 32], strides = [1, 1]} : vector<128x32xf32> to vector<32x32xf32>
    %c64 = arith.constant 64 : index
    %c64_20 = arith.constant 64 : index
    %20 = vector.load %arg6[%c64, %c64_20] : memref<128x128xf32, #tpu.memory_space<vmem>>, vector<32x32xf32>
    tpu.vector_store %arg6[%c64, %c64_20], %19 {strides = array<i32>} : memref<128x128xf32, #tpu.memory_space<vmem>>, vector<32x32xf32>,
    %21 = vector.extract_strided_slice %14 {offsets = [96, 0], sizes = [32, 32], strides = [1, 1]} : vector<128x32xf32> to vector<32x32xf32>
    %c96 = arith.constant 96 : index
    %c96_21 = arith.constant 96 : index
    %22 = vector.load %arg6[%c96, %c96_21] : memref<128x128xf32, #tpu.memory_space<vmem>>, vector<32x32xf32>
    tpu.vector_store %arg6[%c96, %c96_21], %21 {strides = array<i32>} : memref<128x128xf32, #tpu.memory_space<vmem>>, vector<32x32xf32>,
    %c0_22 = arith.constant 0 : index
    %c0_23 = arith.constant 0 : index
    %23 = vector.load %arg7[%c0_22, %c0_23] : memref<128x128xf32, #tpu.memory_space<vmem>>, vector<128x2xf32>
    %24 = tpu.concatenate %23, %14 in 1 : vector<128x2xf32>, vector<128x32xf32> -> vector<128x34xf32>
    %c0_24 = arith.constant 0 : index
    %c0_25 = arith.constant 0 : index
    %25 = vector.load %arg6[%c0_24, %c0_25] : memref<128x128xf32, #tpu.memory_space<vmem>>, vector<128x128xf32>
    %cst_26 = arith.constant dense<0.000000e+00> : vector<128x34xf32>
    %26 = tpu.matmul %25, %24, %cst_26 {dimension_numbers = #tpu.dot_dimension_numbers<[1], [0], [0], [1], [0, 0, 1, 1], [], []>} : vector<128x128xf32>, vector<128x34xf32>, vector<128x34xf32> -> vector<128x34xf32>
    %27 = vector.extract_strided_slice %26 {offsets = [0, 0], sizes = [128, 2], strides = [1, 1]} : vector<128x34xf32> to vector<128x2xf32>
    %c0_27 = arith.constant 0 : index
    %c2 = arith.constant 2 : index
    %28 = vector.load %arg7[%c0_27, %c2] : memref<128x128xf32, #tpu.memory_space<vmem>>, vector<128x2xf32>
    tpu.vector_store %arg7[%c0_27, %c2], %27 {strides = array<i32>} : memref<128x128xf32, #tpu.memory_space<vmem>>, vector<128x2xf32>,
    %29 = vector.extract_strided_slice %26 {offsets = [0, 2], sizes = [128, 32], strides = [1, 1]} : vector<128x34xf32> to vector<128x32xf32>
    %30 = vector.extract_strided_slice %29 {offsets = [0, 0], sizes = [32, 32], strides = [1, 1]} : vector<128x32xf32> to vector<32x32xf32>
    %c0_28 = arith.constant 0 : index
    %c0_29 = arith.constant 0 : index
    %31 = vector.load %arg6[%c0_28, %c0_29] : memref<128x128xf32, #tpu.memory_space<vmem>>, vector<32x32xf32>
    tpu.vector_store %arg6[%c0_28, %c0_29], %30 {strides = array<i32>} : memref<128x128xf32, #tpu.memory_space<vmem>>, vector<32x32xf32>,
    %32 = vector.extract_strided_slice %29 {offsets = [32, 0], sizes = [32, 32], strides = [1, 1]} : vector<128x32xf32> to vector<32x32xf32>
    %c32_30 = arith.constant 32 : index
    %c32_31 = arith.constant 32 : index
    %33 = vector.load %arg6[%c32_30, %c32_31] : memref<128x128xf32, #tpu.memory_space<vmem>>, vector<32x32xf32>
    tpu.vector_store %arg6[%c32_30, %c32_31], %32 {strides = array<i32>} : memref<128x128xf32, #tpu.memory_space<vmem>>, vector<32x32xf32>,
    %34 = vector.extract_strided_slice %29 {offsets = [64, 0], sizes = [32, 32], strides = [1, 1]} : vector<128x32xf32> to vector<32x32xf32>
    %c64_32 = arith.constant 64 : index
    %c64_33 = arith.constant 64 : index
    %35 = vector.load %arg6[%c64_32, %c64_33] : memref<128x128xf32, #tpu.memory_space<vmem>>, vector<32x32xf32>
    tpu.vector_store %arg6[%c64_32, %c64_33], %34 {strides = array<i32>} : memref<128x128xf32, #tpu.memory_space<vmem>>, vector<32x32xf32>,
    %36 = vector.extract_strided_slice %29 {offsets = [96, 0], sizes = [32, 32], strides = [1, 1]} : vector<128x32xf32> to vector<32x32xf32>
    %c96_34 = arith.constant 96 : index
    %c96_35 = arith.constant 96 : index
    %37 = vector.load %arg6[%c96_34, %c96_35] : memref<128x128xf32, #tpu.memory_space<vmem>>, vector<32x32xf32>
    tpu.vector_store %arg6[%c96_34, %c96_35], %36 {strides = array<i32>} : memref<128x128xf32, #tpu.memory_space<vmem>>, vector<32x32xf32>,
    %c0_36 = arith.constant 0 : index
    %c0_37 = arith.constant 0 : index
    %38 = vector.load %arg7[%c0_36, %c0_37] : memref<128x128xf32, #tpu.memory_space<vmem>>, vector<128x4xf32>
    %39 = tpu.concatenate %38, %29 in 1 : vector<128x4xf32>, vector<128x32xf32> -> vector<128x36xf32>
    %c0_38 = arith.constant 0 : index
    %c0_39 = arith.constant 0 : index
    %40 = vector.load %arg6[%c0_38, %c0_39] : memref<128x128xf32, #tpu.memory_space<vmem>>, vector<128x128xf32>
    %cst_40 = arith.constant dense<0.000000e+00> : vector<128x36xf32>
    %41 = tpu.matmul %40, %39, %cst_40 {dimension_numbers = #tpu.dot_dimension_numbers<[1], [0], [0], [1], [0, 0, 1, 1], [], []>} : vector<128x128xf32>, vector<128x36xf32>, vector<128x36xf32> -> vector<128x36xf32>
    %42 = vector.extract_strided_slice %41 {offsets = [0, 0], sizes = [128, 4], strides = [1, 1]} : vector<128x36xf32> to vector<128x4xf32>
    %c0_41 = arith.constant 0 : index
    %c4 = arith.constant 4 : index
    %43 = vector.load %arg7[%c0_41, %c4] : memref<128x128xf32, #tpu.memory_space<vmem>>, vector<128x4xf32>
    tpu.vector_store %arg7[%c0_41, %c4], %42 {strides = array<i32>} : memref<128x128xf32, #tpu.memory_space<vmem>>, vector<128x4xf32>,
    %44 = vector.extract_strided_slice %41 {offsets = [0, 4], sizes = [128, 32], strides = [1, 1]} : vector<128x36xf32> to vector<128x32xf32>
    %45 = vector.extract_strided_slice %44 {offsets = [0, 0], sizes = [32, 32], strides = [1, 1]} : vector<128x32xf32> to vector<32x32xf32>
    %c0_42 = arith.constant 0 : index
    %c0_43 = arith.constant 0 : index
    %46 = vector.load %arg6[%c0_42, %c0_43] : memref<128x128xf32, #tpu.memory_space<vmem>>, vector<32x32xf32>
    tpu.vector_store %arg6[%c0_42, %c0_43], %45 {strides = array<i32>} : memref<128x128xf32, #tpu.memory_space<vmem>>, vector<32x32xf32>,
    %47 = vector.extract_strided_slice %44 {offsets = [32, 0], sizes = [32, 32], strides = [1, 1]} : vector<128x32xf32> to vector<32x32xf32>
    %c32_44 = arith.constant 32 : index
    %c32_45 = arith.constant 32 : index
    %48 = vector.load %arg6[%c32_44, %c32_45] : memref<128x128xf32, #tpu.memory_space<vmem>>, vector<32x32xf32>
    tpu.vector_store %arg6[%c32_44, %c32_45], %47 {strides = array<i32>} : memref<128x128xf32, #tpu.memory_space<vmem>>, vector<32x32xf32>,
    %49 = vector.extract_strided_slice %44 {offsets = [64, 0], sizes = [32, 32], strides = [1, 1]} : vector<128x32xf32> to vector<32x32xf32>
    %c64_46 = arith.constant 64 : index
    %c64_47 = arith.constant 64 : index
    %50 = vector.load %arg6[%c64_46, %c64_47] : memref<128x128xf32, #tpu.memory_space<vmem>>, vector<32x32xf32>
    tpu.vector_store %arg6[%c64_46, %c64_47], %49 {strides = array<i32>} : memref<128x128xf32, #tpu.memory_space<vmem>>, vector<32x32xf32>,
    %51 = vector.extract_strided_slice %44 {offsets = [96, 0], sizes = [32, 32], strides = [1, 1]} : vector<128x32xf32> to vector<32x32xf32>
    %c96_48 = arith.constant 96 : index
    %c96_49 = arith.constant 96 : index
    %52 = vector.load %arg6[%c96_48, %c96_49] : memref<128x128xf32, #tpu.memory_space<vmem>>, vector<32x32xf32>
    tpu.vector_store %arg6[%c96_48, %c96_49], %51 {strides = array<i32>} : memref<128x128xf32, #tpu.memory_space<vmem>>, vector<32x32xf32>,
    %c0_50 = arith.constant 0 : index
    %c0_51 = arith.constant 0 : index
    %53 = vector.load %arg7[%c0_50, %c0_51] : memref<128x128xf32, #tpu.memory_space<vmem>>, vector<128x8xf32>
    %54 = tpu.concatenate %53, %44 in 1 : vector<128x8xf32>, vector<128x32xf32> -> vector<128x40xf32>
    %c0_52 = arith.constant 0 : index
    %c0_53 = arith.constant 0 : index
    %55 = vector.load %arg6[%c0_52, %c0_53] : memref<128x128xf32, #tpu.memory_space<vmem>>, vector<128x128xf32>
    %cst_54 = arith.constant dense<0.000000e+00> : vector<128x40xf32>
    %56 = tpu.matmul %55, %54, %cst_54 {dimension_numbers = #tpu.dot_dimension_numbers<[1], [0], [0], [1], [0, 0, 1, 1], [], []>} : vector<128x128xf32>, vector<128x40xf32>, vector<128x40xf32> -> vector<128x40xf32>
    %57 = vector.extract_strided_slice %56 {offsets = [0, 0], sizes = [128, 8], strides = [1, 1]} : vector<128x40xf32> to vector<128x8xf32>
    %c0_55 = arith.constant 0 : index
    %c8 = arith.constant 8 : index
    %58 = vector.load %arg7[%c0_55, %c8] : memref<128x128xf32, #tpu.memory_space<vmem>>, vector<128x8xf32>
    tpu.vector_store %arg7[%c0_55, %c8], %57 {strides = array<i32>} : memref<128x128xf32, #tpu.memory_space<vmem>>, vector<128x8xf32>,
    %59 = vector.extract_strided_slice %56 {offsets = [0, 8], sizes = [128, 32], strides = [1, 1]} : vector<128x40xf32> to vector<128x32xf32>
    %60 = vector.extract_strided_slice %59 {offsets = [0, 0], sizes = [32, 32], strides = [1, 1]} : vector<128x32xf32> to vector<32x32xf32>
    %c0_56 = arith.constant 0 : index
    %c0_57 = arith.constant 0 : index
    %61 = vector.load %arg6[%c0_56, %c0_57] : memref<128x128xf32, #tpu.memory_space<vmem>>, vector<32x32xf32>
    tpu.vector_store %arg6[%c0_56, %c0_57], %60 {strides = array<i32>} : memref<128x128xf32, #tpu.memory_space<vmem>>, vector<32x32xf32>,
    %62 = vector.extract_strided_slice %59 {offsets = [32, 0], sizes = [32, 32], strides = [1, 1]} : vector<128x32xf32> to vector<32x32xf32>
    %c32_58 = arith.constant 32 : index
    %c32_59 = arith.constant 32 : index
    %63 = vector.load %arg6[%c32_58, %c32_59] : memref<128x128xf32, #tpu.memory_space<vmem>>, vector<32x32xf32>
    tpu.vector_store %arg6[%c32_58, %c32_59], %62 {strides = array<i32>} : memref<128x128xf32, #tpu.memory_space<vmem>>, vector<32x32xf32>,
    %64 = vector.extract_strided_slice %59 {offsets = [64, 0], sizes = [32, 32], strides = [1, 1]} : vector<128x32xf32> to vector<32x32xf32>
    %c64_60 = arith.constant 64 : index
    %c64_61 = arith.constant 64 : index
    %65 = vector.load %arg6[%c64_60, %c64_61] : memref<128x128xf32, #tpu.memory_space<vmem>>, vector<32x32xf32>
    tpu.vector_store %arg6[%c64_60, %c64_61], %64 {strides = array<i32>} : memref<128x128xf32, #tpu.memory_space<vmem>>, vector<32x32xf32>,
    %66 = vector.extract_strided_slice %59 {offsets = [96, 0], sizes = [32, 32], strides = [1, 1]} : vector<128x32xf32> to vector<32x32xf32>
    %c96_62 = arith.constant 96 : index
    %c96_63 = arith.constant 96 : index
    %67 = vector.load %arg6[%c96_62, %c96_63] : memref<128x128xf32, #tpu.memory_space<vmem>>, vector<32x32xf32>
    tpu.vector_store %arg6[%c96_62, %c96_63], %66 {strides = array<i32>} : memref<128x128xf32, #tpu.memory_space<vmem>>, vector<32x32xf32>,
    %c0_64 = arith.constant 0 : index
    %c0_65 = arith.constant 0 : index
    %68 = vector.load %arg7[%c0_64, %c0_65] : memref<128x128xf32, #tpu.memory_space<vmem>>, vector<128x16xf32>
    %69 = tpu.concatenate %68, %59 in 1 : vector<128x16xf32>, vector<128x32xf32> -> vector<128x48xf32>
    %c0_66 = arith.constant 0 : index
    %c0_67 = arith.constant 0 : index
    %70 = vector.load %arg6[%c0_66, %c0_67] : memref<128x128xf32, #tpu.memory_space<vmem>>, vector<128x128xf32>
    %cst_68 = arith.constant dense<0.000000e+00> : vector<128x48xf32>
    %71 = tpu.matmul %70, %69, %cst_68 {dimension_numbers = #tpu.dot_dimension_numbers<[1], [0], [0], [1], [0, 0, 1, 1], [], []>} : vector<128x128xf32>, vector<128x48xf32>, vector<128x48xf32> -> vector<128x48xf32>
    %72 = vector.extract_strided_slice %71 {offsets = [0, 0], sizes = [128, 16], strides = [1, 1]} : vector<128x48xf32> to vector<128x16xf32>
    %c0_69 = arith.constant 0 : index
    %c16 = arith.constant 16 : index
    %73 = vector.load %arg7[%c0_69, %c16] : memref<128x128xf32, #tpu.memory_space<vmem>>, vector<128x16xf32>
    tpu.vector_store %arg7[%c0_69, %c16], %72 {strides = array<i32>} : memref<128x128xf32, #tpu.memory_space<vmem>>, vector<128x16xf32>,
    %74 = vector.extract_strided_slice %71 {offsets = [0, 16], sizes = [128, 32], strides = [1, 1]} : vector<128x48xf32> to vector<128x32xf32>
    %75 = vector.extract_strided_slice %74 {offsets = [0, 0], sizes = [32, 32], strides = [1, 1]} : vector<128x32xf32> to vector<32x32xf32>
    %c0_70 = arith.constant 0 : index
    %c0_71 = arith.constant 0 : index
    %76 = vector.load %arg6[%c0_70, %c0_71] : memref<128x128xf32, #tpu.memory_space<vmem>>, vector<32x32xf32>
    tpu.vector_store %arg6[%c0_70, %c0_71], %75 {strides = array<i32>} : memref<128x128xf32, #tpu.memory_space<vmem>>, vector<32x32xf32>,
    %77 = vector.extract_strided_slice %74 {offsets = [32, 0], sizes = [32, 32], strides = [1, 1]} : vector<128x32xf32> to vector<32x32xf32>
    %c32_72 = arith.constant 32 : index
    %c32_73 = arith.constant 32 : index
    %78 = vector.load %arg6[%c32_72, %c32_73] : memref<128x128xf32, #tpu.memory_space<vmem>>, vector<32x32xf32>
    tpu.vector_store %arg6[%c32_72, %c32_73], %77 {strides = array<i32>} : memref<128x128xf32, #tpu.memory_space<vmem>>, vector<32x32xf32>,
    %79 = vector.extract_strided_slice %74 {offsets = [64, 0], sizes = [32, 32], strides = [1, 1]} : vector<128x32xf32> to vector<32x32xf32>
    %c64_74 = arith.constant 64 : index
    %c64_75 = arith.constant 64 : index
    %80 = vector.load %arg6[%c64_74, %c64_75] : memref<128x128xf32, #tpu.memory_space<vmem>>, vector<32x32xf32>
    tpu.vector_store %arg6[%c64_74, %c64_75], %79 {strides = array<i32>} : memref<128x128xf32, #tpu.memory_space<vmem>>, vector<32x32xf32>,
    %81 = vector.extract_strided_slice %74 {offsets = [96, 0], sizes = [32, 32], strides = [1, 1]} : vector<128x32xf32> to vector<32x32xf32>
    %c96_76 = arith.constant 96 : index
    %c96_77 = arith.constant 96 : index
    %82 = vector.load %arg6[%c96_76, %c96_77] : memref<128x128xf32, #tpu.memory_space<vmem>>, vector<32x32xf32>
    tpu.vector_store %arg6[%c96_76, %c96_77], %81 {strides = array<i32>} : memref<128x128xf32, #tpu.memory_space<vmem>>, vector<32x32xf32>,
    %c0_78 = arith.constant 0 : index
    %c0_79 = arith.constant 0 : index
    %83 = vector.load %arg7[%c0_78, %c0_79] : memref<128x128xf32, #tpu.memory_space<vmem>>, vector<128x32xf32>
    %84 = tpu.concatenate %83, %74 in 1 : vector<128x32xf32>, vector<128x32xf32> -> vector<128x64xf32>
    %c0_80 = arith.constant 0 : index
    %c0_81 = arith.constant 0 : index
    %85 = vector.load %arg6[%c0_80, %c0_81] : memref<128x128xf32, #tpu.memory_space<vmem>>, vector<128x128xf32>
    %cst_82 = arith.constant dense<0.000000e+00> : vector<128x64xf32>
    %86 = tpu.matmul %85, %84, %cst_82 {dimension_numbers = #tpu.dot_dimension_numbers<[1], [0], [0], [1], [0, 0, 1, 1], [], []>} : vector<128x128xf32>, vector<128x64xf32>, vector<128x64xf32> -> vector<128x64xf32>
    %87 = vector.extract_strided_slice %86 {offsets = [0, 0], sizes = [128, 32], strides = [1, 1]} : vector<128x64xf32> to vector<128x32xf32>
    %c0_83 = arith.constant 0 : index
    %c32_84 = arith.constant 32 : index
    %88 = vector.load %arg7[%c0_83, %c32_84] : memref<128x128xf32, #tpu.memory_space<vmem>>, vector<128x32xf32>
    tpu.vector_store %arg7[%c0_83, %c32_84], %87 {strides = array<i32>} : memref<128x128xf32, #tpu.memory_space<vmem>>, vector<128x32xf32>,
    %89 = vector.extract_strided_slice %86 {offsets = [0, 32], sizes = [128, 32], strides = [1, 1]} : vector<128x64xf32> to vector<128x32xf32>
    %90 = vector.extract_strided_slice %89 {offsets = [0, 0], sizes = [32, 32], strides = [1, 1]} : vector<128x32xf32> to vector<32x32xf32>
    %c0_85 = arith.constant 0 : index
    %c0_86 = arith.constant 0 : index
    %91 = vector.load %arg6[%c0_85, %c0_86] : memref<128x128xf32, #tpu.memory_space<vmem>>, vector<32x32xf32>
    tpu.vector_store %arg6[%c0_85, %c0_86], %90 {strides = array<i32>} : memref<128x128xf32, #tpu.memory_space<vmem>>, vector<32x32xf32>,
    %92 = vector.extract_strided_slice %89 {offsets = [32, 0], sizes = [32, 32], strides = [1, 1]} : vector<128x32xf32> to vector<32x32xf32>
    %c32_87 = arith.constant 32 : index
    %c32_88 = arith.constant 32 : index
    %93 = vector.load %arg6[%c32_87, %c32_88] : memref<128x128xf32, #tpu.memory_space<vmem>>, vector<32x32xf32>
    tpu.vector_store %arg6[%c32_87, %c32_88], %92 {strides = array<i32>} : memref<128x128xf32, #tpu.memory_space<vmem>>, vector<32x32xf32>,
    %94 = vector.extract_strided_slice %89 {offsets = [64, 0], sizes = [32, 32], strides = [1, 1]} : vector<128x32xf32> to vector<32x32xf32>
    %c64_89 = arith.constant 64 : index
    %c64_90 = arith.constant 64 : index
    %95 = vector.load %arg6[%c64_89, %c64_90] : memref<128x128xf32, #tpu.memory_space<vmem>>, vector<32x32xf32>
    tpu.vector_store %arg6[%c64_89, %c64_90], %94 {strides = array<i32>} : memref<128x128xf32, #tpu.memory_space<vmem>>, vector<32x32xf32>,
    %96 = vector.extract_strided_slice %89 {offsets = [96, 0], sizes = [32, 32], strides = [1, 1]} : vector<128x32xf32> to vector<32x32xf32>
    %c96_91 = arith.constant 96 : index
    %c96_92 = arith.constant 96 : index
    %97 = vector.load %arg6[%c96_91, %c96_92] : memref<128x128xf32, #tpu.memory_space<vmem>>, vector<32x32xf32>
    tpu.vector_store %arg6[%c96_91, %c96_92], %96 {strides = array<i32>} : memref<128x128xf32, #tpu.memory_space<vmem>>, vector<32x32xf32>,
    %c0_93 = arith.constant 0 : index
    %c0_94 = arith.constant 0 : index
    %98 = vector.load %arg6[%c0_93, %c0_94] : memref<128x128xf32, #tpu.memory_space<vmem>>, vector<128x128xf32>
    %c0_95 = arith.constant 0 : index
    %c0_96 = arith.constant 0 : index
    %99 = vector.load %arg7[%c0_95, %c0_96] : memref<128x128xf32, #tpu.memory_space<vmem>>, vector<128x64xf32>
    %cst_97 = arith.constant dense<0.000000e+00> : vector<128x64xf32>
    %100 = tpu.matmul %98, %99, %cst_97 {dimension_numbers = #tpu.dot_dimension_numbers<[1], [0], [0], [1], [0, 0, 1, 1], [], []>} : vector<128x128xf32>, vector<128x64xf32>, vector<128x64xf32> -> vector<128x64xf32>
    %c0_98 = arith.constant 0 : index
    %c64_99 = arith.constant 64 : index
    %101 = vector.load %arg7[%c0_98, %c64_99] : memref<128x128xf32, #tpu.memory_space<vmem>>, vector<128x64xf32>
    tpu.vector_store %arg7[%c0_98, %c64_99], %100 {strides = array<i32>} : memref<128x128xf32, #tpu.memory_space<vmem>>, vector<128x64xf32>,
    %c0_100 = arith.constant 0 : index
    %c0_101 = arith.constant 0 : index
    %c0_102 = arith.constant 0 : index
    %102 = vector.load %arg4[%c0_100, %c0_101, %c0_102] : memref<1x8x128xf32, #tpu.memory_space<vmem>>, vector<1x8x128xf32>
    %103 = vector.shape_cast %102 : vector<1x8x128xf32> to vector<8x128xf32>
    %c0_103 = arith.constant 0 : index
    %c0_104 = arith.constant 0 : index
    %104 = vector.load %arg7[%c0_103, %c0_104] : memref<128x128xf32, #tpu.memory_space<vmem>>, vector<128x128xf32>
    %cst_105 = arith.constant dense<0.000000e+00> : vector<8x128xf32>
    %105 = tpu.matmul %103, %104, %cst_105 {dimension_numbers = #tpu.dot_dimension_numbers<[1], [0], [0], [1], [0, 0, 1, 1], [], []>} : vector<8x128xf32>, vector<128x128xf32>, vector<8x128xf32> -> vector<8x128xf32>
    %c0_106 = arith.constant 0 : index
    %c0_107 = arith.constant 0 : index
    %c0_108 = arith.constant 0 : index
    %106 = vector.load %arg5[%c0_106, %c0_107, %c0_108] : memref<1x8x128xf32, #tpu.memory_space<vmem>>, vector<1x8x128xf32>
    %107 = vector.shape_cast %106 : vector<1x8x128xf32> to vector<8x128xf32>
    %108 = vector.shape_cast %105 : vector<8x128xf32> to vector<1x8x128xf32>
    tpu.vector_store %arg5[%c0_106, %c0_107, %c0_108], %108 {strides = array<i32>} : memref<1x8x128xf32, #tpu.memory_space<vmem>>, vector<1x8x128xf32>,
    return
  }
  func.func @transform_0(%arg0: i32) -> (i32, i32, i32) {
    %c0_i32 = arith.constant 0 : i32
    %c0_i32_0 = arith.constant 0 : i32
    %c0_i32_1 = arith.constant 0 : i32
    return %arg0, %c0_i32, %c0_i32_0 : i32, i32, i32
  }
  func.func @transform_1(%arg0: i32) -> (i32, i32, i32) {
    %c0_i32 = arith.constant 0 : i32
    %c0_i32_0 = arith.constant 0 : i32
    %c0_i32_1 = arith.constant 0 : i32
    return %arg0, %c0_i32, %c0_i32_0 : i32, i32, i32
  }
  func.func @transform_2(%arg0: i32) -> (i32, i32, i32) {
    %c0_i32 = arith.constant 0 : i32
    %c0_i32_0 = arith.constant 0 : i32
    %c0_i32_1 = arith.constant 0 : i32
    return %arg0, %c0_i32, %c0_i32_0 : i32, i32, i32
  }
  func.func @transform_3(%arg0: i32) -> (i32, i32, i32) {
    %c0_i32 = arith.constant 0 : i32
    %c0_i32_0 = arith.constant 0 : i32
    %c0_i32_1 = arith.constant 0 : i32
    return %arg0, %c0_i32, %c0_i32_0 : i32, i32, i32
  }
  func.func @transform_4(%arg0: i32) -> (i32, i32, i32) {
    %c0_i32 = arith.constant 0 : i32
    %c0_i32_0 = arith.constant 0 : i32
    %c0_i32_1 = arith.constant 0 : i32
    return %arg0, %c0_i32, %c0_i32_0 : i32, i32, i32
  }
}

</mosaic_0001>

<llo_original>
// kernel: custom-call.23
$region0: #{custom-call.23}
  %s0 = inlined_call_operand.vmem [shape: f32[4,32,32], index: 0, kind: input, shape index: {}]
  %s1 = inlined_call_operand.vmem [shape: f32[4,32,32], index: 1, kind: output, shape index: {0}]
  %s2 = inlined_call_operand.hbm [shape: s32[4,32], index: 2, kind: output, shape index: {1}]
  %s3 = inlined_call_operand.vmem [shape: s32[4,32], index: 3, kind: output, shape index: {2}]
  %4 = xla_tuple %s1, %s2, %s3
  $region1: #{custom-call.23} parent=0
    #allocation0 [shape = 'u8[32768]{0}', space=vmem, size = 0x8000, scoped, tag = 'operand span for operand 0']
    #allocation1 [shape = 'u8[32768]{0}', space=vmem, size = 0x8000, scoped, tag = 'operand span for operand 1']
    #allocation2 [shape = 'u8[4096]{0}', space=vmem, size = 0x1000, scoped, tag = 'operand span for operand 2']
    #allocation3 [shape = 'u8[4096]{0}', space=vmem, size = 0x1000, scoped, tag = 'packed  for operand 2']
    #allocation4 [shape = 's32[2]{0}', space=sflag, size = 0x8, scoped, tag = 'scoped memory for custom-call.23']
    #allocation5 [shape = 'u8[4096]{0}', space=vmem, size = 0x1000, scoped, tag = 'operand span for operand 3']
    #allocation6 [shape = 'u8[4096]{0}', space=vmem, size = 0x1000, scoped, tag = 'packed  for operand 3']
    %5 = vsyncpa [#allocation4], 0
    %s6 = scalar_lea.sflag [#allocation4], 1
    %7 = vsyncpa %s6, 0
    loop: start=0, step=1, limit=6
    $region2: #{custom-call.23} parent=1 // loop_pre_header
      _
    $region3: #{custom-call.23} parent=1 // loop_header
      %s9 = sphi 0, %s13
      %p10 = scmp.ge.s32.totalorder %s9, 6
      %s21 = sphi 0, %s23
      %s24 = sphi 0, %s21
      %s25 = sphi 0, %s24
      %s41 = sphi 0, %s25
      %s49 = sphi 0, %s51
      %s52 = sphi 0, %s49
      %s53 = sphi 0, %s52
      %s69 = sphi 0, %s53
    $region4: #{custom-call.23} parent=1 // loop_header_branch
      %12 = sbr.rel (%p10) target = $region8
    $region5: #{custom-call.23} parent=1 // loop_body
      %s14 = ssub.s32 %s9, 1
      %s15 = ssub.s32 %s9, 2
      %s16 = sadd.s32 %s9, 1
      %s17 = sshrl.u32 %s9, 3
      %s18 = sshrl.u32 %s16, 3
      %s19 = ssub.s32 %s17, %s18
      %p20 = scmp.eq.s32.totalorder %s19, 0
      %s22 = sadd.s32 %s21, 1
      %s23 = scalar_select %p20, %s21, %s22
      %p26 = pneg %p20
      %p27 = scmp.eq.s32.totalorder %s9, 3
      %p28 = por %p26, %p27
      %p29 = scmp.ne.s32.totalorder %s21, %s24
      %p30 = scmp.eq.s32.totalorder %s9, 0
      %p31 = por %p29, %p30
      %p32 = scmp.ne.s32.totalorder %s21, %s24
      %p33 = scmp.eq.s32.totalorder %s14, 3
      %p34 = por %p32, %p33
      %p35 = scmp.ne.s32.totalorder %s24, %s25
      %p36 = scmp.eq.s32.totalorder %s14, 0
      %p37 = por %p35, %p36
      %p38 = scmp.ne.s32.totalorder %s24, %s25
      %p39 = scmp.eq.s32.totalorder %s15, 3
      %p40 = por %p38, %p39
      %p42 = scmp.ne.s32.totalorder %s25, %s41
      %p43 = scmp.eq.s32.totalorder %s15, 0
      %p44 = por %p42, %p43
      %s45 = sshrl.u32 %s9, 3
      %s46 = sshrl.u32 %s16, 3
      %s47 = ssub.s32 %s45, %s46
      %p48 = scmp.eq.s32.totalorder %s47, 0
      %s50 = sadd.s32 %s49, 1
      %s51 = scalar_select %p48, %s49, %s50
      %p54 = pneg %p48
      %p55 = scmp.eq.s32.totalorder %s9, 3
      %p56 = por %p54, %p55
      %p57 = scmp.ne.s32.totalorder %s49, %s52
      %p58 = scmp.eq.s32.totalorder %s9, 0
      %p59 = por %p57, %p58
      %p60 = scmp.ne.s32.totalorder %s49, %s52
      %p61 = scmp.eq.s32.totalorder %s14, 3
      %p62 = por %p60, %p61
      %p63 = scmp.ne.s32.totalorder %s52, %s53
      %p64 = scmp.eq.s32.totalorder %s14, 0
      %p65 = por %p63, %p64
      %p66 = scmp.ne.s32.totalorder %s52, %s53
      %p67 = scmp.eq.s32.totalorder %s15, 3
      %p68 = por %p66, %p67
      %p70 = scmp.ne.s32.totalorder %s53, %s69
      %p71 = scmp.eq.s32.totalorder %s15, 0
      %p72 = por %p70, %p71
      %p73 = scmp.le.s32.totalorder 1, %s9
      %p74 = scmp.lt.s32.totalorder %s9, 5
      %p75 = pnand %p73, %p74
      %p76 = pneg %p75
      // Predicated region
      $region9: #{custom-call.23} parent=5 // pred_check
        _
      $region10: #{custom-call.23} parent=5 // pred_check_branch
        %78 = sbr.rel (%p75) target = $region12
      $region11: #{custom-call.23} parent=5 // pred_region
        %s79 = ssub.s32 %s9, 1
      $region12: #{custom-call.23} parent=5 // pred_fallthru
        _
      %p80 = scmp.lt.s32.totalorder %s9, 4
      // Predicated region
      $region13: #{custom-call.23} parent=5 // pred_check
        %p81 = pneg %p80
      $region14: #{custom-call.23} parent=5 // pred_check_branch
        %83 = sbr.rel (%p81) target = $region16
      $region15: #{custom-call.23} parent=5 // pred_region
        %s84 = sand.u32 %s9, 1
        %s85 = sand.u32 %s9, 1
        %s86 = smul.addr %s85, 32
        %s87 = scalar_lea.vmem [#allocation0], %s86
        %s88 = smul.addr %s9, 32
        %s89 = scalar_lea.vmem %s0, %s88
        // Predicated region
        $region17: #{custom-call.23} parent=15 // pred_check
          _
        $region18: #{custom-call.23} parent=15 // pred_check_branch
          %91 = sbr.rel (0) target = $region20
        $region19: #{custom-call.23} parent=15 // pred_region
          // Predicated region
          $region21: #{custom-call.23} parent=19 // pred_check
            _
          $region22: #{custom-call.23} parent=19 // pred_check_branch
            %93 = sbr.rel (0) target = $region24
          $region23: #{custom-call.23} parent=19 // pred_region
            loop: start=0, step=1, limit=1
            $region25: #{custom-call.23} parent=23 // loop_pre_header
              _
            $region26: #{custom-call.23} parent=23 // loop_header
              %s95 = sphi 0, %s99
              %p96 = scmp.ge.s32.totalorder %s95, 1
              %s100 = sphi %s89, %s89
              %s101 = sphi %s87, %s87
            $region27: #{custom-call.23} parent=23 // loop_header_branch
              %98 = sbr.rel (%p96) target = $region31
            $region28: #{custom-call.23} parent=23 // loop_body
              %v102 = vld [vmem:[%s100] sm:$0xff]
              %103 = vst [vmem:[%s101] sm:$0xff] %v102
              %v104 = vld [vmem:[%s100 + $0x8] sm:$0xff]
              %105 = vst [vmem:[%s101 + $0x8] sm:$0xff] %v104
              %v106 = vld [vmem:[%s100 + $0x10] sm:$0xff]
              %107 = vst [vmem:[%s101 + $0x10] sm:$0xff] %v106
              %v108 = vld [vmem:[%s100 + $0x18] sm:$0xff]
              %109 = vst [vmem:[%s101 + $0x18] sm:$0xff] %v108
            $region29: #{custom-call.23} parent=23 // loop_footer
              %s99 = sadd.s32 1, %s95
            $region30: #{custom-call.23} parent=23 // loop_footer_branch
              %94 = sbr.rel target = $region26
            $region31: #{custom-call.23} parent=23 // loop_exit
              _
          $region24: #{custom-call.23} parent=19 // pred_fallthru
            _
          // Predicated region
          $region32: #{custom-call.23} parent=19 // pred_check
            _
          $region33: #{custom-call.23} parent=19 // pred_check_branch
            %111 = sbr.rel target = $region35
          $region34: #{custom-call.23} parent=19 // pred_region
            _
          $region35: #{custom-call.23} parent=19 // pred_fallthru
            _
        $region20: #{custom-call.23} parent=15 // pred_fallthru
          _
        %112 = vnop
      $region16: #{custom-call.23} parent=5 // pred_fallthru
        _
      %p113 = scmp.le.s32.totalorder 1, %s9
      %p114 = scmp.lt.s32.totalorder %s9, 5
      %p115 = pnand %p113, %p114
      %p116 = pneg %p115
      // Predicated region
      $region36: #{custom-call.23} parent=5 // pred_check
        _
      $region37: #{custom-call.23} parent=5 // pred_check_branch
        %118 = sbr.rel (%p115) target = $region39
      $region38: #{custom-call.23} parent=5 // pred_region
        #allocation7 [shape = 's32[32,128]{1,0}', space=vmem, size = 0x4000, scoped, tag = 'scratch for permutations']
        %s119 = ssub.s32 %s9, 1
        %s120 = sand.u32 %s14, 1
        %s121 = sand.u32 %s14, 1
        %s122 = smul.addr %s121, 32
        %s123 = scalar_lea.vmem [#allocation0], %s122
        %s124 = sand.u32 %s14, 1
        %s125 = sand.u32 %s14, 1
        %s126 = smul.addr %s125, 32
        %s127 = scalar_lea.vmem [#allocation0], %s126
        %s128 = sand.u32 %s14, 1
        %s129 = sand.u32 %s14, 1
        %s130 = smul.addr %s129, 32
        %s131 = scalar_lea.vmem [#allocation1], %s130
        %p132 = pneg %p37
        %p133 = pneg %p34
        %s134 = sand.u32 %s24, 1
        %s135 = scalar_lea.sflag [#allocation4], %s134
        %s136 = sand.u32 %s24, 1
        %s137 = smul.addr %s136, 4
        %s138 = scalar_lea.vmem [#allocation3], %s137
        %p139 = pneg %p65
        %p140 = pneg %p62
        %s141 = sand.u32 %s52, 1
        %s142 = sand.u32 %s52, 1
        %s143 = smul.addr %s142, 4
        %s144 = scalar_lea.vmem [#allocation6], %s143
        %s145 = sshrl.u32 %s14, 3
        %s146 = sshrl.u32 %s14, 3
        %v147 = vld [vmem:[%s123] sm:$0xff]
        %148 = vst [vmem:[%s131] sm:$0xff] %v147
        %s149 = scalar_lea.vmem %s131, 8 [#allocation1]
        %s150 = scalar_lea.vmem %s123, 8 [#allocation0]
        %v151 = vld [vmem:[%s150] sm:$0xff]
        %152 = vst [vmem:[%s149] sm:$0xff] %v151
        %s153 = scalar_lea.vmem %s131, 16 [#allocation1]
        %s154 = scalar_lea.vmem %s123, 16 [#allocation0]
        %v155 = vld [vmem:[%s154] sm:$0xff]
        %156 = vst [vmem:[%s153] sm:$0xff] %v155
        %s157 = scalar_lea.vmem %s131, 24 [#allocation1]
        %s158 = scalar_lea.vmem %s123, 24 [#allocation0]
        %v159 = vld [vmem:[%s158] sm:$0xff]
        %160 = vst [vmem:[%s157] sm:$0xff] %v159
        %s161 = sand.u32 %s14, 7
        %s162 = scalar_lea.vmem [#allocation2], %s161
        %s163 = sand.u32 %s14, 7
        %s164 = scalar_lea.vmem [#allocation5], %s163
        %165 = vst [vmem:[%s162] sm:$0x1] 0
        %v166 = vlaneseq
        %v167 = vshrl.u32 %v166, 7
        %v168 = vmov %v167
        loop: start=0, step=1, limit=4
        $region40: #{custom-call.23} parent=38 // loop_pre_header
          _
        $region41: #{custom-call.23} parent=38 // loop_header
          %s170 = sphi 0, %s174
          %p171 = scmp.ge.s32.totalorder %s170, 4
        $region42: #{custom-call.23} parent=38 // loop_header_branch
          %173 = sbr.rel (%p171) target = $region46
        $region43: #{custom-call.23} parent=38 // loop_body
          %s175 = smul.addr %s170, 8
          %s176 = scalar_lea.vmem [#allocation7], %s175
          %s177 = smul.u32 %s170, 8
          %v178 = vstv %s177
          %v179 = vadd.s32 %v168, %v178
          %180 = vst [vmem:[%s176] sm:$0xff] %v179
        $region44: #{custom-call.23} parent=38 // loop_footer
          %s174 = sadd.s32 1, %s170
        $region45: #{custom-call.23} parent=38 // loop_footer_branch
          %169 = sbr.rel target = $region41
        $region46: #{custom-call.23} parent=38 // loop_exit
          _
        loop: start=0, step=1, limit=32
        $region47: #{custom-call.23} parent=38 // loop_pre_header
          _
        $region48: #{custom-call.23} parent=38 // loop_header
          %s182 = sphi 0, %s186
          %p183 = scmp.ge.s32.totalorder %s182, 32
        $region49: #{custom-call.23} parent=38 // loop_header_branch
          %185 = sbr.rel (%p183) target = $region53
        $region50: #{custom-call.23} parent=38 // loop_body
          %v187 = vstv %s182
          %v188 = vlaneseq
          %v189 = vshrl.u32 %v188, 7
          %v190 = vmov %v189
          %v191 = vld [vmem:[%s131] sm:$0xff]
          %v192 = vand.u32 2147483647, %v191
          %v194 = vstv %s182
          %vm195 = vcmp.ge.s32.totalorder %v190, %v194
          %vm196 = vcmp.lt.s32.totalorder %v190, 32
          %vm197 = vmand %vm195, %vm196
          %vm198 = vcmp.lt.f32.partialorder -inf, %v192
          %vm199 = vmand %vm197, %vm198
          %v200 = vsel %vm199, %v190, %v187
          %v201 = vsel %vm199, %v192, -inf
          %s202 = scalar_lea.vmem %s131, 8 [#allocation1]
          %v203 = vld [vmem:[%s202] sm:$0xff]
          %v204 = vand.u32 2147483647, %v203
          %v205 = vadd.s32 %v190, 8
          %v206 = vstv %s182
          %vm207 = vcmp.ge.s32.totalorder %v205, %v206
          %vm208 = vcmp.lt.s32.totalorder %v205, 32
          %vm209 = vmand %vm207, %vm208
          %vm210 = vcmp.lt.f32.partialorder %v201, %v204
          %vm211 = vmand %vm209, %vm210
          %v212 = vsel %vm211, %v205, %v200
          %v213 = vsel %vm211, %v204, %v201
          %s214 = scalar_lea.vmem %s131, 16 [#allocation1]
          %v215 = vld [vmem:[%s214] sm:$0xff]
          %v216 = vand.u32 2147483647, %v215
          %v217 = vadd.s32 %v190, 16
          %v218 = vstv %s182
          %vm219 = vcmp.ge.s32.totalorder %v217, %v218
          %vm220 = vcmp.lt.s32.totalorder %v217, 32
          %vm221 = vmand %vm219, %vm220
          %vm222 = vcmp.lt.f32.partialorder %v213, %v216
          %vm223 = vmand %vm221, %vm222
          %v224 = vsel %vm223, %v217, %v212
          %v225 = vsel %vm223, %v216, %v213
          %s226 = scalar_lea.vmem %s131, 24 [#allocation1]
          %v227 = vld [vmem:[%s226] sm:$0xff]
          %v228 = vand.u32 2147483647, %v227
          %v229 = vadd.s32 %v190, 24
          %v230 = vstv %s182
          %vm231 = vcmp.ge.s32.totalorder %v229, %v230
          %vm232 = vcmp.lt.s32.totalorder %v229, 32
          %vm233 = vmand %vm231, %vm232
          %vm234 = vcmp.lt.f32.partialorder %v225, %v228
          %vm235 = vmand %vm233, %vm234
          %v236 = vsel %vm235, %v229, %v224
          %v237 = vsel %vm235, %v228, %v225
          %v238 = vrot.slane %v237, 1
          %v239 = vrot.slane %v236, 1
          %vm240 = vcmp.ge.f32.partialorder %v238, %v237
          %v241 = vsel %vm240, %v238, %v237
          %v242 = vsel %vm240, %v239, %v236
          %v243 = vrot.slane %v238, 1
          %v244 = vrot.slane %v239, 1
          %vm245 = vcmp.ge.f32.partialorder %v243, %v241
          %v246 = vsel %vm245, %v243, %v241
          %v247 = vsel %vm245, %v244, %v242
          %v248 = vrot.slane %v243, 1
          %v249 = vrot.slane %v244, 1
          %vm250 = vcmp.ge.f32.partialorder %v248, %v246
          %v251 = vsel %vm250, %v248, %v246
          %v252 = vsel %vm250, %v249, %v247
          %v253 = vrot.slane %v248, 1
          %v254 = vrot.slane %v249, 1
          %vm255 = vcmp.ge.f32.partialorder %v253, %v251
          %v256 = vsel %vm255, %v253, %v251
          %v257 = vsel %vm255, %v254, %v252
          %v258 = vrot.slane %v253, 1
          %v259 = vrot.slane %v254, 1
          %vm260 = vcmp.ge.f32.partialorder %v258, %v256
          %v261 = vsel %vm260, %v258, %v256
          %v262 = vsel %vm260, %v259, %v257
          %v263 = vrot.slane %v258, 1
          %v264 = vrot.slane %v259, 1
          %vm265 = vcmp.ge.f32.partialorder %v263, %v261
          %v266 = vsel %vm265, %v263, %v261
          %v267 = vsel %vm265, %v264, %v262
          %v268 = vrot.slane %v263, 1
          %v269 = vrot.slane %v264, 1
          %vm270 = vcmp.ge.f32.partialorder %v268, %v266
          %v271 = vsel %vm270, %v268, %v266
          %v272 = vsel %vm270, %v269, %v267
          %s273 = ssub.s32 128, %s182
          %274 = vrot.lane.b32.xlu0 %v272, %s273
          %v275 = vpop.permute.xlu0 %274
          %s276 = vtos %v275
          %v277 = vstv %s182
          %v278 = vlaneseq
          %v279 = vand.u32 %v278, 127
          %vm280 = vcmp.eq.s32.totalorder %v279, %v277
          %v281 = vstv %s276
          %v282 = vld [vmem:[%s162] ss:$0 sm:$0xff]
          %v283 = vsel %vm280, %v281, %v282
          %284 = vst [vmem:[%s162] sm:$0x1] %v283
          %s285 = scalar_lea.vmem %s131, %s182 [#allocation1]
          %s286 = scalar_lea.vmem %s131, %s276 [#allocation1]
          %v287 = vld [vmem:[%s285] ss:$0 sm:$0xff]
          %v288 = vld [vmem:[%s286] ss:$0 sm:$0xff]
          %289 = vst [vmem:[%s286] sm:$0x1] %v287
          %290 = vst [vmem:[%s285] sm:$0x1] %v288
          %s291 = scalar_lea.vmem [#allocation7], %s182
          %s292 = scalar_lea.vmem [#allocation7], %s276
          %v293 = vld [vmem:[%s291] ss:$0 sm:$0xff]
          %v294 = vld [vmem:[%s292] ss:$0 sm:$0xff]
          %295 = vst [vmem:[%s292] sm:$0x1] %v293
          %296 = vst [vmem:[%s291] sm:$0x1] %v294
          %vm297 = vcmp.ne.f32.partialorder %v288, 0.0
          %vm298 = vmand %vm280, %vm297
          %v299 = vsel %vm298, %v288, 1.0
          %v300 = vlaneseq
          %v301 = vand.u32 %v300, 127
          %v302 = vstv %s182
          %vm303 = vcmp.gt.s32.totalorder %v301, %v302
          %v304 = vsel %vm303, %v288, 0.0
          %v305 = vlaneseq
          %v306 = vshrl.u32 %v305, 7
          %v307 = vmov %v306
          %v308 = vld [vmem:[%s131] sm:$0xff]
          %v310 = vstv %s182
          %vm311 = vcmp.gt.s32.totalorder %v307, %v310
          %v312 = vsel %vm311, %v299, 1.0
          %v313 = vrcp.pop %v312
          %v314 = vmul.f32 %v312, %v313
          %v315 = vsub.f32 1.0, %v314
          %v316 = vmul.f32 %v313, %v315
          %v317 = vadd.f32 %v313, %v316
          %vm318 = vweird.f32 %v312
          %vm319 = vweird.f32 %v313
          %vm320 = vmor %vm318, %vm319
          %v321 = vsel %vm320, %v313, %v317
          %v322 = vand.u32 2147483647, %v312
          %vm323 = vcmp.eq.f32.partialorder %v322, 8.507059e+37
          %v324 = vand.u32 %v312, 2147483648
          %v325 = vor.u32 1.1754944e-38, %v324
          %v326 = vsel %vm323, %v325, %v321
          %v327 = vmul.f32 %v308, %v326
          %vm328 = vmand %vm311, %vm280
          %v329 = vsel %vm328, %v327, 0.0
          %330 = vadd.xlane.f32.xlu0 %v329
          %v331 = vpop.xlane.xlu0 %330
          %v332 = vmul.f32 %v331, %v304
          %v333 = vsub.f32 %v327, %v332
          %334 = vst [vmem:[%s131] sm:$0xff] %v333
          %s335 = scalar_lea.vmem %s131, 8 [#allocation1]
          %v336 = vld [vmem:[%s335] sm:$0xff]
          %v337 = vadd.s32 %v307, 8
          %v338 = vstv %s182
          %vm339 = vcmp.gt.s32.totalorder %v337, %v338
          %v340 = vsel %vm339, %v299, 1.0
          %v341 = vrcp.pop %v340
          %v342 = vmul.f32 %v340, %v341
          %v343 = vsub.f32 1.0, %v342
          %v344 = vmul.f32 %v341, %v343
          %v345 = vadd.f32 %v341, %v344
          %vm346 = vweird.f32 %v340
          %vm347 = vweird.f32 %v341
          %vm348 = vmor %vm346, %vm347
          %v349 = vsel %vm348, %v341, %v345
          %v350 = vand.u32 2147483647, %v340
          %vm351 = vcmp.eq.f32.partialorder %v350, 8.507059e+37
          %v352 = vand.u32 %v340, 2147483648
          %v353 = vor.u32 1.1754944e-38, %v352
          %v354 = vsel %vm351, %v353, %v349
          %v355 = vmul.f32 %v336, %v354
          %vm356 = vmand %vm339, %vm280
          %v357 = vsel %vm356, %v355, 0.0
          %358 = vadd.xlane.f32.xlu0 %v357
          %v359 = vpop.xlane.xlu0 %358
          %v360 = vmul.f32 %v359, %v304
          %v361 = vsub.f32 %v355, %v360
          %362 = vst [vmem:[%s335] sm:$0xff] %v361
          %s363 = scalar_lea.vmem %s131, 16 [#allocation1]
          %v364 = vld [vmem:[%s363] sm:$0xff]
          %v365 = vadd.s32 %v307, 16
          %v366 = vstv %s182
          %vm367 = vcmp.gt.s32.totalorder %v365, %v366
          %v368 = vsel %vm367, %v299, 1.0
          %v369 = vrcp.pop %v368
          %v370 = vmul.f32 %v368, %v369
          %v371 = vsub.f32 1.0, %v370
          %v372 = vmul.f32 %v369, %v371
          %v373 = vadd.f32 %v369, %v372
          %vm374 = vweird.f32 %v368
          %vm375 = vweird.f32 %v369
          %vm376 = vmor %vm374, %vm375
          %v377 = vsel %vm376, %v369, %v373
          %v378 = vand.u32 2147483647, %v368
          %vm379 = vcmp.eq.f32.partialorder %v378, 8.507059e+37
          %v380 = vand.u32 %v368, 2147483648
          %v381 = vor.u32 1.1754944e-38, %v380
          %v382 = vsel %vm379, %v381, %v377
          %v383 = vmul.f32 %v364, %v382
          %vm384 = vmand %vm367, %vm280
          %v385 = vsel %vm384, %v383, 0.0
          %386 = vadd.xlane.f32.xlu0 %v385
          %v387 = vpop.xlane.xlu0 %386
          %v388 = vmul.f32 %v387, %v304
          %v389 = vsub.f32 %v383, %v388
          %390 = vst [vmem:[%s363] sm:$0xff] %v389
          %s391 = scalar_lea.vmem %s131, 24 [#allocation1]
          %v392 = vld [vmem:[%s391] sm:$0xff]
          %v393 = vadd.s32 %v307, 24
          %v394 = vstv %s182
          %vm395 = vcmp.gt.s32.totalorder %v393, %v394
          %v396 = vsel %vm395, %v299, 1.0
          %v397 = vrcp.pop %v396
          %v398 = vmul.f32 %v396, %v397
          %v399 = vsub.f32 1.0, %v398
          %v400 = vmul.f32 %v397, %v399
          %v401 = vadd.f32 %v397, %v400
          %vm402 = vweird.f32 %v396
          %vm403 = vweird.f32 %v397
          %vm404 = vmor %vm402, %vm403
          %v405 = vsel %vm404, %v397, %v401
          %v406 = vand.u32 2147483647, %v396
          %vm407 = vcmp.eq.f32.partialorder %v406, 8.507059e+37
          %v408 = vand.u32 %v396, 2147483648
          %v409 = vor.u32 1.1754944e-38, %v408
          %v410 = vsel %vm407, %v409, %v405
          %v411 = vmul.f32 %v392, %v410
          %vm412 = vmand %vm395, %vm280
          %v413 = vsel %vm412, %v411, 0.0
          %414 = vadd.xlane.f32.xlu0 %v413
          %v415 = vpop.xlane.xlu0 %414
          %v416 = vmul.f32 %v415, %v304
          %v417 = vsub.f32 %v411, %v416
          %418 = vst [vmem:[%s391] sm:$0xff] %v417
        $region51: #{custom-call.23} parent=38 // loop_footer
          %s186 = sadd.s32 1, %s182
        $region52: #{custom-call.23} parent=38 // loop_footer_branch
          %181 = sbr.rel target = $region48
        $region53: #{custom-call.23} parent=38 // loop_exit
          _
        %v419 = vld [vmem:[#allocation7] sm:$0xff]
        %s420 = scalar_lea.vmem [#allocation7], 8
        %v421 = vld [vmem:[%s420] sm:$0xff]
        %s422 = scalar_lea.vmem [#allocation7], 16
        %v423 = vld [vmem:[%s422] sm:$0xff]
        %s424 = scalar_lea.vmem [#allocation7], 24
        %v425 = vld [vmem:[%s424] sm:$0xff]
        %s426 = scalar_lea.vmem [#allocation7], 32
        %s427 = scalar_lea.vmem [#allocation7], 40
        %s428 = scalar_lea.vmem [#allocation7], 48
        %s429 = scalar_lea.vmem [#allocation7], 56
        %s430 = scalar_lea.vmem [#allocation7], 64
        %s431 = scalar_lea.vmem [#allocation7], 72
        %s432 = scalar_lea.vmem [#allocation7], 80
        %s433 = scalar_lea.vmem [#allocation7], 88
        %s434 = scalar_lea.vmem [#allocation7], 96
        %s435 = scalar_lea.vmem [#allocation7], 104
        %s436 = scalar_lea.vmem [#allocation7], 112
        %s437 = scalar_lea.vmem [#allocation7], 120
        %438 = vxpose.xlu0.b32.start [1/16] %v419, 128
        %439 = vxpose.xlu0.b32.cont [2/16] %v421, 128
        %440 = vxpose.xlu0.b32.cont [3/16] %v423, 128
        %441 = vxpose.xlu0.b32.cont [4/16] %v425, 128
        %442 = vxpose.xlu0.b32.cont [5/16] 0, 128
        %443 = vxpose.xlu0.b32.cont [6/16] 0, 128
        %444 = vxpose.xlu0.b32.cont [7/16] 0, 128
        %445 = vxpose.xlu0.b32.cont [8/16] 0, 128
        %446 = vxpose.xlu0.b32.cont [9/16] 0, 128
        %447 = vxpose.xlu0.b32.cont [10/16] 0, 128
        %448 = vxpose.xlu0.b32.cont [11/16] 0, 128
        %449 = vxpose.xlu0.b32.cont [12/16] 0, 128
        %450 = vxpose.xlu0.b32.cont [13/16] 0, 128
        %451 = vxpose.xlu0.b32.cont [14/16] 0, 128
        %452 = vxpose.xlu0.b32.cont [15/16] 0, 128
        %453 = vxpose.xlu0.b32.end [16/16] 0, 128
        %v454 = vpop.trf.xlu0
        %v455 = vpop.trf.xlu0
        %v456 = vpop.trf.xlu0
        %v457 = vpop.trf.xlu0
        %v458 = vpop.trf.xlu0
        %v459 = vpop.trf.xlu0
        %v460 = vpop.trf.xlu0
        %v461 = vpop.trf.xlu0
        %v462 = vpop.trf.xlu0
        %v463 = vpop.trf.xlu0
        %v464 = vpop.trf.xlu0
        %v465 = vpop.trf.xlu0
        %v466 = vpop.trf.xlu0
        %v467 = vpop.trf.xlu0
        %v468 = vpop.trf.xlu0
        %v469 = vpop.trf.xlu0
        %470 = vst [vmem:[%s164] sm:$0x1] %v454
        %s472 = ssub.s32 16, 1
        %v473 = vld [vmem:[#allocation2] sm:%s472]
        %s475 = ssub.s32 16, 1
        %476 = vst [vmem:[%s138] sm:%s475] %v473
        %s478 = ssub.s32 16, 1
        %v479 = vld [vmem:[#allocation5] sm:%s478]
        %s481 = ssub.s32 16, 1
        %482 = vst [vmem:[%s144] sm:%s481] %v479
        %s483 = sand.u32 %s14, 1
        %s484 = sand.u32 %s14, 1
        %s485 = smul.addr %s484, 32
        %s486 = scalar_lea.vmem [#allocation1], %s485
        %s487 = sand.u32 %s24, 1
        %s488 = scalar_lea.sflag [#allocation4], %s487
        %s489 = sand.u32 %s24, 1
        %s490 = smul.addr %s489, 4
        %s491 = scalar_lea.vmem [#allocation3], %s490
        %s492 = sand.u32 %s52, 1
        %s493 = sand.u32 %s52, 1
        %s494 = smul.addr %s493, 4
        %s495 = scalar_lea.vmem [#allocation6], %s494
        %s496 = smul.addr %s14, 32
        %s497 = scalar_lea.vmem %s1, %s496
        // Predicated region
        $region54: #{custom-call.23} parent=38 // pred_check
          _
        $region55: #{custom-call.23} parent=38 // pred_check_branch
          %499 = sbr.rel (0) target = $region57
        $region56: #{custom-call.23} parent=38 // pred_region
          // Predicated region
          $region58: #{custom-call.23} parent=56 // pred_check
            _
          $region59: #{custom-call.23} parent=56 // pred_check_branch
            %501 = sbr.rel (0) target = $region61
          $region60: #{custom-call.23} parent=56 // pred_region
            loop: start=0, step=1, limit=1
            $region62: #{custom-call.23} parent=60 // loop_pre_header
              _
            $region63: #{custom-call.23} parent=60 // loop_header
              %s503 = sphi 0, %s507
              %p504 = scmp.ge.s32.totalorder %s503, 1
              %s508 = sphi %s486, %s486
              %s509 = sphi %s497, %s497
            $region64: #{custom-call.23} parent=60 // loop_header_branch
              %506 = sbr.rel (%p504) target = $region68
            $region65: #{custom-call.23} parent=60 // loop_body
              %v510 = vld [vmem:[%s508] sm:$0xff]
              %511 = vst [vmem:[%s509] sm:$0xff] %v510
              %v512 = vld [vmem:[%s508 + $0x8] sm:$0xff]
              %513 = vst [vmem:[%s509 + $0x8] sm:$0xff] %v512
              %v514 = vld [vmem:[%s508 + $0x10] sm:$0xff]
              %515 = vst [vmem:[%s509 + $0x10] sm:$0xff] %v514
              %v516 = vld [vmem:[%s508 + $0x18] sm:$0xff]
              %517 = vst [vmem:[%s509 + $0x18] sm:$0xff] %v516
            $region66: #{custom-call.23} parent=60 // loop_footer
              %s507 = sadd.s32 1, %s503
            $region67: #{custom-call.23} parent=60 // loop_footer_branch
              %502 = sbr.rel target = $region63
            $region68: #{custom-call.23} parent=60 // loop_exit
              _
          $region61: #{custom-call.23} parent=56 // pred_fallthru
            _
          // Predicated region
          $region69: #{custom-call.23} parent=56 // pred_check
            _
          $region70: #{custom-call.23} parent=56 // pred_check_branch
            %519 = sbr.rel target = $region72
          $region71: #{custom-call.23} parent=56 // pred_region
            _
          $region72: #{custom-call.23} parent=56 // pred_fallthru
            _
        $region57: #{custom-call.23} parent=38 // pred_fallthru
          _
        %520 = vnop
        // Predicated region
        $region73: #{custom-call.23} parent=38 // pred_check
          %p521 = pneg %p34
        $region74: #{custom-call.23} parent=38 // pred_check_branch
          %523 = sbr.rel (%p521) target = $region76
        $region75: #{custom-call.23} parent=38 // pred_region
          %s524 = sshrl.u32 %s14, 3
          %526 = vsyncadd %s488, 0
          %s527 = smul.addr %s524, 4
          %s528 = scalar_lea.hbm %s2, %s527
          %s530 = sshll.u32 %s491, 4
          %s531 = int_to_ptr.vmem [resolvable:$true] %s530
          %s532 = sshll.u32 %s528, 4
          %s533 = int_to_ptr.hbm [resolvable:$true] %s532
          %535 = dma.vmem_to_hbm [thread:$0]  %s531, 64, %s533, %s488
        $region76: #{custom-call.23} parent=38 // pred_fallthru
          _
        // Predicated region
        $region77: #{custom-call.23} parent=38 // pred_check
          %p536 = pneg %p62
        $region78: #{custom-call.23} parent=38 // pred_check_branch
          %538 = sbr.rel (%p536) target = $region80
        $region79: #{custom-call.23} parent=38 // pred_region
          %s539 = sshrl.u32 %s14, 3
          %s540 = smul.addr %s539, 4
          %s541 = scalar_lea.vmem %s3, %s540
          // Predicated region
          $region81: #{custom-call.23} parent=79 // pred_check
            _
          $region82: #{custom-call.23} parent=79 // pred_check_branch
            %543 = sbr.rel (0) target = $region84
          $region83: #{custom-call.23} parent=79 // pred_region
            // Predicated region
            $region85: #{custom-call.23} parent=83 // pred_check
              _
            $region86: #{custom-call.23} parent=83 // pred_check_branch
              %545 = sbr.rel target = $region88
            $region87: #{custom-call.23} parent=83 // pred_region
              // Predicated region
              $region100: #{custom-call.23} parent=87 // pred_check
                _
              $region101: #{custom-call.23} parent=87 // pred_check_branch
                %561 = sbr.rel (0) target = $region103
              $region102: #{custom-call.23} parent=87 // pred_region
                %s563 = ssub.s32 16, 1
                loop: start=0, step=1, limit=1
                $region104: #{custom-call.23} parent=102 // loop_pre_header
                  _
                $region105: #{custom-call.23} parent=102 // loop_header
                  %s565 = sphi 0, %s569
                  %p566 = scmp.ge.s32.totalorder %s565, 1
                  %s570 = sphi %s495, %s495
                  %s571 = sphi %s541, %s541
                $region106: #{custom-call.23} parent=102 // loop_header_branch
                  %568 = sbr.rel (%p566) target = $region110
                $region107: #{custom-call.23} parent=102 // loop_body
                  %v572 = vld [vmem:[%s570] sm:%s563]
                  %573 = vst [vmem:[%s571] sm:%s563] %v572
                $region108: #{custom-call.23} parent=102 // loop_footer
                  %s569 = sadd.s32 1, %s565
                $region109: #{custom-call.23} parent=102 // loop_footer_branch
                  %564 = sbr.rel target = $region105
                $region110: #{custom-call.23} parent=102 // loop_exit
                  _
              $region103: #{custom-call.23} parent=87 // pred_fallthru
                _
            $region88: #{custom-call.23} parent=83 // pred_fallthru
              _
            // Predicated region
            $region89: #{custom-call.23} parent=83 // pred_check
              _
            $region90: #{custom-call.23} parent=83 // pred_check_branch
              %547 = sbr.rel (0) target = $region92
            $region91: #{custom-call.23} parent=83 // pred_region
              %s549 = ssub.s32 16, 1
              loop: start=0, step=1, limit=1
              $region93: #{custom-call.23} parent=91 // loop_pre_header
                _
              $region94: #{custom-call.23} parent=91 // loop_header
                %s551 = sphi 0, %s555
                %p552 = scmp.ge.s32.totalorder %s551, 1
                %s556 = sphi %s495, %s495
                %s557 = sphi %s541, %s541
              $region95: #{custom-call.23} parent=91 // loop_header_branch
                %554 = sbr.rel (%p552) target = $region99
              $region96: #{custom-call.23} parent=91 // loop_body
                %v558 = vld [vmem:[%s556] sm:%s549]
                %559 = vst [vmem:[%s557] sm:%s549] %v558
              $region97: #{custom-call.23} parent=91 // loop_footer
                %s555 = sadd.s32 1, %s551
              $region98: #{custom-call.23} parent=91 // loop_footer_branch
                %550 = sbr.rel target = $region94
              $region99: #{custom-call.23} parent=91 // loop_exit
                _
            $region92: #{custom-call.23} parent=83 // pred_fallthru
              _
          $region84: #{custom-call.23} parent=79 // pred_fallthru
            _
          %574 = vnop
        $region80: #{custom-call.23} parent=38 // pred_fallthru
          _
      $region39: #{custom-call.23} parent=5 // pred_fallthru
        _
      %p575 = scmp.le.s32.totalorder 2, %s9
      // Predicated region
      $region111: #{custom-call.23} parent=5 // pred_check
        %p576 = pneg %p575
      $region112: #{custom-call.23} parent=5 // pred_check_branch
        %578 = sbr.rel (%p576) target = $region114
      $region113: #{custom-call.23} parent=5 // pred_region
        %s579 = ssub.s32 %s9, 2
        %s580 = sand.u32 %s15, 1
        %s581 = sand.u32 %s15, 1
        %s582 = smul.addr %s581, 32
        %s583 = scalar_lea.vmem [#allocation1], %s582
        // Predicated region
        $region115: #{custom-call.23} parent=113 // pred_check
          %p584 = pneg %p40
        $region116: #{custom-call.23} parent=113 // pred_check_branch
          %586 = sbr.rel (%p584) target = $region118
        $region117: #{custom-call.23} parent=113 // pred_region
          %s587 = sand.u32 %s25, 1
          %s588 = scalar_lea.sflag [#allocation4], %s587
          %s589 = sand.u32 %s25, 1
          %s590 = smul.addr %s589, 4
          %s591 = scalar_lea.vmem [#allocation3], %s590
          %593 = dma.done %s588, 64
        $region118: #{custom-call.23} parent=113 // pred_fallthru
          _
        // Predicated region
        $region119: #{custom-call.23} parent=113 // pred_check
          %p594 = pneg %p68
        $region120: #{custom-call.23} parent=113 // pred_check_branch
          %596 = sbr.rel (%p594) target = $region122
        $region121: #{custom-call.23} parent=113 // pred_region
          %s597 = sand.u32 %s53, 1
          %s598 = sand.u32 %s53, 1
          %s599 = smul.addr %s598, 4
          %s600 = scalar_lea.vmem [#allocation6], %s599
        $region122: #{custom-call.23} parent=113 // pred_fallthru
          _
      $region114: #{custom-call.23} parent=5 // pred_fallthru
        _
    $region6: #{custom-call.23} parent=1 // loop_footer
      %s13 = sadd.s32 1, %s9
    $region7: #{custom-call.23} parent=1 // loop_footer_branch
      %8 = sbr.rel target = $region3
    $region8: #{custom-call.23} parent=1 // loop_exit
      _
    %601 = vsyncpa [#allocation4], 1
    %s602 = scalar_lea.sflag [#allocation4], 1
    %603 = vsyncpa %s602, 1

// kernel: custom-call.13
$region0: #{custom-call.13}
  %s0 = inlined_call_operand.vmem [shape: f32[4,1,32,32], index: 0, kind: input, shape index: {}]
  %s1 = inlined_call_operand.vmem [shape: f32[4,1,32,32], index: 1, kind: output, shape index: {}]
  $region1: #{custom-call.13} parent=0
    #allocation0 [shape = 'u8[32768]{0}', space=vmem, size = 0x8000, scoped, tag = 'operand span for operand 0']
    #allocation1 [shape = 'u8[32768]{0}', space=vmem, size = 0x8000, scoped, tag = 'operand span for operand 1']
    loop: start=0, step=1, limit=6
    $region2: #{custom-call.13} parent=1 // loop_pre_header
      _
    $region3: #{custom-call.13} parent=1 // loop_header
      %s3 = sphi 0, %s7
      %p4 = scmp.ge.s32.totalorder %s3, 6
      %s10 = sphi 0, %s36
      %s11 = sphi 0, %s32
      %s12 = sphi 0, %s28
      %s13 = sphi 0, %s24
      %s14 = sphi 0, %s10
      %s15 = sphi 0, %s11
      %s16 = sphi 0, %s12
      %s17 = sphi 0, %s13
      %s18 = sphi 0, %s14
      %s19 = sphi 0, %s15
      %s20 = sphi 0, %s16
      %s21 = sphi 0, %s17
    $region4: #{custom-call.13} parent=1 // loop_header_branch
      %6 = sbr.rel (%p4) target = $region8
    $region5: #{custom-call.13} parent=1 // loop_body
      %s8 = ssub.s32 %s3, 1
      %s9 = ssub.s32 %s3, 2
      %s22 = sadd.s32 1, %s13
      %p23 = scmp.ge.s32.totalorder %s22, 1
      %s24 = scalar_select %p23, 0, %s22
      %s25 = sadd.s32 1, %s12
      %s26 = scalar_select %p23, %s25, %s12
      %p27 = scmp.ge.s32.totalorder %s26, 1
      %s28 = scalar_select %p27, 0, %s26
      %s29 = sadd.s32 1, %s11
      %s30 = scalar_select %p27, %s29, %s11
      %p31 = scmp.ge.s32.totalorder %s30, 1
      %s32 = scalar_select %p31, 0, %s30
      %s33 = sadd.s32 1, %s10
      %s34 = scalar_select %p31, %s33, %s10
      %p35 = scmp.ge.s32.totalorder %s34, 4
      %s36 = scalar_select %p35, 0, %s34
      %p37 = scmp.le.s32.totalorder 1, %s3
      %p38 = scmp.lt.s32.totalorder %s3, 5
      %p39 = pnand %p37, %p38
      %p40 = pneg %p39
      // Predicated region
      $region9: #{custom-call.13} parent=5 // pred_check
        _
      $region10: #{custom-call.13} parent=5 // pred_check_branch
        %42 = sbr.rel (%p39) target = $region12
      $region11: #{custom-call.13} parent=5 // pred_region
        %s43 = ssub.s32 %s3, 1
      $region12: #{custom-call.13} parent=5 // pred_fallthru
        _
      %p44 = scmp.lt.s32.totalorder %s3, 4
      // Predicated region
      $region13: #{custom-call.13} parent=5 // pred_check
        %p45 = pneg %p44
      $region14: #{custom-call.13} parent=5 // pred_check_branch
        %47 = sbr.rel (%p45) target = $region16
      $region15: #{custom-call.13} parent=5 // pred_region
        %s48 = sand.u32 %s3, 1
        %s49 = sand.u32 %s3, 1
        %s50 = smul.addr %s49, 32
        %s51 = scalar_lea.vmem [#allocation0], %s50
        %s52 = sadd.s32 %s13, %s12
        %s53 = smul.addr %s11, 4
        %s54 = sadd.s32 %s52, %s53
        %s55 = smul.addr %s10, 4
        %s56 = sadd.s32 %s54, %s55
        %s57 = smul.addr %s56, 8
        %s58 = scalar_lea.vmem %s0, %s57
        // Predicated region
        $region17: #{custom-call.13} parent=15 // pred_check
          _
        $region18: #{custom-call.13} parent=15 // pred_check_branch
          %60 = sbr.rel (0) target = $region20
        $region19: #{custom-call.13} parent=15 // pred_region
          // Predicated region
          $region21: #{custom-call.13} parent=19 // pred_check
            _
          $region22: #{custom-call.13} parent=19 // pred_check_branch
            %62 = sbr.rel (0) target = $region24
          $region23: #{custom-call.13} parent=19 // pred_region
            // Predicated region
            $region36: #{custom-call.13} parent=23 // pred_check
              _
            $region37: #{custom-call.13} parent=23 // pred_check_branch
              %84 = sbr.rel (0) target = $region39
            $region38: #{custom-call.13} parent=23 // pred_region
              loop: start=0, step=1, limit=1
              $region40: #{custom-call.13} parent=38 // loop_pre_header
                _
              $region41: #{custom-call.13} parent=38 // loop_header
                %s86 = sphi 0, %s90
                %p87 = scmp.ge.s32.totalorder %s86, 1
                %s91 = sphi %s58, %s58
                %s92 = sphi %s51, %s51
              $region42: #{custom-call.13} parent=38 // loop_header_branch
                %89 = sbr.rel (%p87) target = $region46
              $region43: #{custom-call.13} parent=38 // loop_body
                %v93 = vld [vmem:[%s91] sm:$0xff]
                %94 = vst [vmem:[%s92] sm:$0xff] %v93
                %v95 = vld [vmem:[%s91 + $0x8] sm:$0xff]
                %96 = vst [vmem:[%s92 + $0x8] sm:$0xff] %v95
                %v97 = vld [vmem:[%s91 + $0x10] sm:$0xff]
                %98 = vst [vmem:[%s92 + $0x10] sm:$0xff] %v97
                %v99 = vld [vmem:[%s91 + $0x18] sm:$0xff]
                %100 = vst [vmem:[%s92 + $0x18] sm:$0xff] %v99
              $region44: #{custom-call.13} parent=38 // loop_footer
                %s90 = sadd.s32 1, %s86
              $region45: #{custom-call.13} parent=38 // loop_footer_branch
                %85 = sbr.rel target = $region41
              $region46: #{custom-call.13} parent=38 // loop_exit
                _
            $region39: #{custom-call.13} parent=23 // pred_fallthru
              _
            // Predicated region
            $region47: #{custom-call.13} parent=23 // pred_check
              _
            $region48: #{custom-call.13} parent=23 // pred_check_branch
              %102 = sbr.rel target = $region50
            $region49: #{custom-call.13} parent=23 // pred_region
              _
            $region50: #{custom-call.13} parent=23 // pred_fallthru
              _
          $region24: #{custom-call.13} parent=19 // pred_fallthru
            _
          // Predicated region
          $region25: #{custom-call.13} parent=19 // pred_check
            _
          $region26: #{custom-call.13} parent=19 // pred_check_branch
            %64 = sbr.rel target = $region28
          $region27: #{custom-call.13} parent=19 // pred_region
            %s66 = ssub.s32 256, 1
            loop: start=0, step=1, limit=1
            $region29: #{custom-call.13} parent=27 // loop_pre_header
              _
            $region30: #{custom-call.13} parent=27 // loop_header
              %s68 = sphi 0, %s72
              %p69 = scmp.ge.s32.totalorder %s68, 1
              %s73 = sphi %s58, %s58
              %s74 = sphi %s51, %s51
            $region31: #{custom-call.13} parent=27 // loop_header_branch
              %71 = sbr.rel (%p69) target = $region35
            $region32: #{custom-call.13} parent=27 // loop_body
              %v75 = vld [vmem:[%s73] sm:%s66]
              %76 = vst [vmem:[%s74] sm:%s66] %v75
              %v77 = vld [vmem:[%s73 + $0x8] sm:%s66]
              %78 = vst [vmem:[%s74 + $0x8] sm:%s66] %v77
              %v79 = vld [vmem:[%s73 + $0x10] sm:%s66]
              %80 = vst [vmem:[%s74 + $0x10] sm:%s66] %v79
              %v81 = vld [vmem:[%s73 + $0x18] sm:%s66]
              %82 = vst [vmem:[%s74 + $0x18] sm:%s66] %v81
            $region33: #{custom-call.13} parent=27 // loop_footer
              %s72 = sadd.s32 1, %s68
            $region34: #{custom-call.13} parent=27 // loop_footer_branch
              %67 = sbr.rel target = $region30
            $region35: #{custom-call.13} parent=27 // loop_exit
              _
          $region28: #{custom-call.13} parent=19 // pred_fallthru
            _
        $region20: #{custom-call.13} parent=15 // pred_fallthru
          _
        %103 = vnop
      $region16: #{custom-call.13} parent=5 // pred_fallthru
        _
      %p104 = scmp.le.s32.totalorder 1, %s3
      %p105 = scmp.lt.s32.totalorder %s3, 5
      %p106 = pnand %p104, %p105
      %p107 = pneg %p106
      // Predicated region
      $region51: #{custom-call.13} parent=5 // pred_check
        _
      $region52: #{custom-call.13} parent=5 // pred_check_branch
        %109 = sbr.rel (%p106) target = $region54
      $region53: #{custom-call.13} parent=5 // pred_region
        #allocation2 [shape = 'f32[32,32]{1,0}', space=vmem, size = 0x4000, scoped, tag = 'rescaled input a']
        %s110 = ssub.s32 %s3, 1
        %s111 = sand.u32 %s8, 1
        %s112 = sand.u32 %s8, 1
        %s113 = smul.addr %s112, 32
        %s114 = scalar_lea.vmem [#allocation0], %s113
        %s115 = sand.u32 %s8, 1
        %s116 = sand.u32 %s8, 1
        %s117 = smul.addr %s116, 32
        %s118 = scalar_lea.vmem [#allocation0], %s117
        %s119 = sand.u32 %s8, 1
        %s120 = sand.u32 %s8, 1
        %s121 = smul.addr %s120, 32
        %s122 = scalar_lea.vmem [#allocation1], %s121
        %v123 = vlaneseq
        %v124 = vand.u32 %v123, 127
        %vm125 = vcmp.lt.s32.totalorder %v124, 32
        %v126 = vlaneseq
        %v127 = vshrl.u32 %v126, 7
        %vm129 = vcmp.eq.s32.totalorder %v127, %v124
        %v130 = vld [vmem:[%s114] sm:$0xff]
        %v131 = vsel %vm129, %v130, 0.0
        %132 = vadd.xlane.f32.xlu0 %v131
        %v133 = vpop.xlane.xlu0 %132
        %vm134 = vcmp.le.s32.totalorder %v127, %v124
        %vm135 = vmand %vm134, %vm125
        %v136 = vsel %vm135, %v130, 0.0
        %v137 = vrcp.pop %v133
        %v138 = vmul.f32 %v133, %v137
        %v139 = vsub.f32 1.0, %v138
        %v140 = vmul.f32 %v137, %v139
        %v141 = vadd.f32 %v137, %v140
        %vm142 = vweird.f32 %v133
        %vm143 = vweird.f32 %v137
        %vm144 = vmor %vm142, %vm143
        %v145 = vsel %vm144, %v137, %v141
        %v146 = vand.u32 2147483647, %v133
        %vm147 = vcmp.eq.f32.partialorder %v146, 8.507059e+37
        %v148 = vand.u32 %v133, 2147483648
        %v149 = vor.u32 1.1754944e-38, %v148
        %v150 = vsel %vm147, %v149, %v145
        %v151 = vmul.f32 %v136, %v150
        %152 = vst [vmem:[#allocation2] sm:$0xff] %v151
        %s153 = scalar_lea.vmem %s114, 8 [#allocation0]
        %s154 = scalar_lea.vmem [#allocation2], 8
        %v155 = vlaneseq
        %v156 = vshrl.u32 %v155, 7
        %v157 = vadd.s32 %v156, 8
        %vm158 = vcmp.eq.s32.totalorder %v157, %v124
        %v159 = vld [vmem:[%s153] sm:$0xff]
        %v160 = vsel %vm158, %v159, 0.0
        %161 = vadd.xlane.f32.xlu0 %v160
        %v162 = vpop.xlane.xlu0 %161
        %vm163 = vcmp.le.s32.totalorder %v157, %v124
        %vm164 = vmand %vm163, %vm125
        %v165 = vsel %vm164, %v159, 0.0
        %v166 = vrcp.pop %v162
        %v167 = vmul.f32 %v162, %v166
        %v168 = vsub.f32 1.0, %v167
        %v169 = vmul.f32 %v166, %v168
        %v170 = vadd.f32 %v166, %v169
        %vm171 = vweird.f32 %v162
        %vm172 = vweird.f32 %v166
        %vm173 = vmor %vm171, %vm172
        %v174 = vsel %vm173, %v166, %v170
        %v175 = vand.u32 2147483647, %v162
        %vm176 = vcmp.eq.f32.partialorder %v175, 8.507059e+37
        %v177 = vand.u32 %v162, 2147483648
        %v178 = vor.u32 1.1754944e-38, %v177
        %v179 = vsel %vm176, %v178, %v174
        %v180 = vmul.f32 %v165, %v179
        %181 = vst [vmem:[%s154] sm:$0xff] %v180
        %s182 = scalar_lea.vmem %s114, 16 [#allocation0]
        %s183 = scalar_lea.vmem [#allocation2], 16
        %v184 = vlaneseq
        %v185 = vshrl.u32 %v184, 7
        %v186 = vadd.s32 %v185, 16
        %vm187 = vcmp.eq.s32.totalorder %v186, %v124
        %v188 = vld [vmem:[%s182] sm:$0xff]
        %v189 = vsel %vm187, %v188, 0.0
        %190 = vadd.xlane.f32.xlu0 %v189
        %v191 = vpop.xlane.xlu0 %190
        %vm192 = vcmp.le.s32.totalorder %v186, %v124
        %vm193 = vmand %vm192, %vm125
        %v194 = vsel %vm193, %v188, 0.0
        %v195 = vrcp.pop %v191
        %v196 = vmul.f32 %v191, %v195
        %v197 = vsub.f32 1.0, %v196
        %v198 = vmul.f32 %v195, %v197
        %v199 = vadd.f32 %v195, %v198
        %vm200 = vweird.f32 %v191
        %vm201 = vweird.f32 %v195
        %vm202 = vmor %vm200, %vm201
        %v203 = vsel %vm202, %v195, %v199
        %v204 = vand.u32 2147483647, %v191
        %vm205 = vcmp.eq.f32.partialorder %v204, 8.507059e+37
        %v206 = vand.u32 %v191, 2147483648
        %v207 = vor.u32 1.1754944e-38, %v206
        %v208 = vsel %vm205, %v207, %v203
        %v209 = vmul.f32 %v194, %v208
        %210 = vst [vmem:[%s183] sm:$0xff] %v209
        %s211 = scalar_lea.vmem %s114, 24 [#allocation0]
        %s212 = scalar_lea.vmem [#allocation2], 24
        %v213 = vlaneseq
        %v214 = vshrl.u32 %v213, 7
        %v215 = vadd.s32 %v214, 24
        %vm216 = vcmp.eq.s32.totalorder %v215, %v124
        %v217 = vld [vmem:[%s211] sm:$0xff]
        %v218 = vsel %vm216, %v217, 0.0
        %219 = vadd.xlane.f32.xlu0 %v218
        %v220 = vpop.xlane.xlu0 %219
        %vm221 = vcmp.le.s32.totalorder %v215, %v124
        %vm222 = vmand %vm221, %vm125
        %v223 = vsel %vm222, %v217, 0.0
        %v224 = vrcp.pop %v220
        %v225 = vmul.f32 %v220, %v224
        %v226 = vsub.f32 1.0, %v225
        %v227 = vmul.f32 %v224, %v226
        %v228 = vadd.f32 %v224, %v227
        %vm229 = vweird.f32 %v220
        %vm230 = vweird.f32 %v224
        %vm231 = vmor %vm229, %vm230
        %v232 = vsel %vm231, %v224, %v228
        %v233 = vand.u32 2147483647, %v220
        %vm234 = vcmp.eq.f32.partialorder %v233, 8.507059e+37
        %v235 = vand.u32 %v220, 2147483648
        %v236 = vor.u32 1.1754944e-38, %v235
        %v237 = vsel %vm234, %v236, %v232
        %v238 = vmul.f32 %v223, %v237
        %239 = vst [vmem:[%s212] sm:$0xff] %v238
        %v240 = vlaneseq
        %v241 = vand.u32 %v240, 127
        %v242 = vlaneseq
        %v243 = vshrl.u32 %v242, 7
        %vm245 = vcmp.eq.s32.totalorder %v241, %v243
        %v246 = vsel %vm245, -1.0, 0.0
        %v247 = vlaneseq
        %v248 = vand.u32 %v247, 127
        %v249 = vlaneseq
        %v250 = vshrl.u32 %v249, 7
        %v251 = vadd.s32 %v250, 8
        %vm252 = vcmp.eq.s32.totalorder %v248, %v251
        %v253 = vsel %vm252, -1.0, 0.0
        %v254 = vlaneseq
        %v255 = vand.u32 %v254, 127
        %v256 = vlaneseq
        %v257 = vshrl.u32 %v256, 7
        %v258 = vadd.s32 %v257, 16
        %vm259 = vcmp.eq.s32.totalorder %v255, %v258
        %v260 = vsel %vm259, -1.0, 0.0
        %v261 = vlaneseq
        %v262 = vand.u32 %v261, 127
        %v263 = vlaneseq
        %v264 = vshrl.u32 %v263, 7
        %v265 = vadd.s32 %v264, 24
        %vm266 = vcmp.eq.s32.totalorder %v262, %v265
        %v267 = vlaneseq
        %v268 = vand.u32 %v267, 127
        %vm269 = vcmp.eq.s32.totalorder %v268, 31
        %v270 = vsel %vm269, 1.0, -1.0
        %v271 = vsel %vm266, %v270, 0.0
        %s272 = scalar_lea.vmem [#allocation2], 30
        %v273 = vld [vmem:[%s272] ss:$0 sm:$0xff]
        %v274 = vxor.u32 %v273, 2147483648
        %v275 = vlaneseq
        %v276 = vand.u32 %v275, 127
        %vm277 = vcmp.eq.s32.totalorder %v276, 30
        %v278 = vmul.f32 %v274, %v271
        %279 = vadd.xlane.f32.xlu0 %v278
        %v280 = vpop.xlane.xlu0 %279
        %v281 = vsel %vm277, %v280, %v271
        %s282 = scalar_lea.vmem [#allocation2], 29
        %v283 = vld [vmem:[%s282] ss:$0 sm:$0xff]
        %v284 = vxor.u32 %v283, 2147483648
        %v285 = vlaneseq
        %v286 = vand.u32 %v285, 127
        %vm287 = vcmp.eq.s32.totalorder %v286, 29
        %v288 = vmul.f32 %v284, %v281
        %289 = vadd.xlane.f32.xlu0 %v288
        %v290 = vpop.xlane.xlu0 %289
        %v291 = vsel %vm287, %v290, %v281
        %s292 = scalar_lea.vmem [#allocation2], 28
        %v293 = vld [vmem:[%s292] ss:$0 sm:$0xff]
        %v294 = vxor.u32 %v293, 2147483648
        %v295 = vlaneseq
        %v296 = vand.u32 %v295, 127
        %vm297 = vcmp.eq.s32.totalorder %v296, 28
        %v298 = vmul.f32 %v294, %v291
        %299 = vadd.xlane.f32.xlu0 %v298
        %v300 = vpop.xlane.xlu0 %299
        %v301 = vsel %vm297, %v300, %v291
        %s302 = scalar_lea.vmem [#allocation2], 27
        %v303 = vld [vmem:[%s302] ss:$0 sm:$0xff]
        %v304 = vxor.u32 %v303, 2147483648
        %v305 = vlaneseq
        %v306 = vand.u32 %v305, 127
        %vm307 = vcmp.eq.s32.totalorder %v306, 27
        %v308 = vmul.f32 %v304, %v301
        %309 = vadd.xlane.f32.xlu0 %v308
        %v310 = vpop.xlane.xlu0 %309
        %v311 = vsel %vm307, %v310, %v301
        %s312 = scalar_lea.vmem [#allocation2], 26
        %v313 = vld [vmem:[%s312] ss:$0 sm:$0xff]
        %v314 = vxor.u32 %v313, 2147483648
        %v315 = vlaneseq
        %v316 = vand.u32 %v315, 127
        %vm317 = vcmp.eq.s32.totalorder %v316, 26
        %v318 = vmul.f32 %v314, %v311
        %319 = vadd.xlane.f32.xlu0 %v318
        %v320 = vpop.xlane.xlu0 %319
        %v321 = vsel %vm317, %v320, %v311
        %s322 = scalar_lea.vmem [#allocation2], 25
        %v323 = vld [vmem:[%s322] ss:$0 sm:$0xff]
        %v324 = vxor.u32 %v323, 2147483648
        %v325 = vlaneseq
        %v326 = vand.u32 %v325, 127
        %vm327 = vcmp.eq.s32.totalorder %v326, 25
        %v328 = vmul.f32 %v324, %v321
        %329 = vadd.xlane.f32.xlu0 %v328
        %v330 = vpop.xlane.xlu0 %329
        %v331 = vsel %vm327, %v330, %v321
        %s332 = scalar_lea.vmem [#allocation2], 24
        %v333 = vld [vmem:[%s332] ss:$0 sm:$0xff]
        %v334 = vxor.u32 %v333, 2147483648
        %v335 = vlaneseq
        %v336 = vand.u32 %v335, 127
        %vm337 = vcmp.eq.s32.totalorder %v336, 24
        %v338 = vmul.f32 %v334, %v331
        %339 = vadd.xlane.f32.xlu0 %v338
        %v340 = vpop.xlane.xlu0 %339
        %v341 = vsel %vm337, %v340, %v331
        %s342 = scalar_lea.vmem [#allocation2], 23
        %v343 = vld [vmem:[%s342] ss:$0 sm:$0xff]
        %v344 = vxor.u32 %v343, 2147483648
        %v345 = vlaneseq
        %v346 = vand.u32 %v345, 127
        %vm347 = vcmp.eq.s32.totalorder %v346, 23
        %v348 = vmul.f32 %v344, %v260
        %349 = vadd.xlane.f32.xlu0 %v348
        %v350 = vpop.xlane.xlu0 %349
        %v351 = vsel %vm347, %v350, %v260
        %v352 = vmul.f32 %v344, %v341
        %353 = vadd.xlane.f32.xlu0 %v352
        %v354 = vpop.xlane.xlu0 %353
        %v355 = vsel %vm347, %v354, %v341
        %s356 = scalar_lea.vmem [#allocation2], 22
        %v357 = vld [vmem:[%s356] ss:$0 sm:$0xff]
        %v358 = vxor.u32 %v357, 2147483648
        %v359 = vlaneseq
        %v360 = vand.u32 %v359, 127
        %vm361 = vcmp.eq.s32.totalorder %v360, 22
        %v362 = vmul.f32 %v358, %v351
        %363 = vadd.xlane.f32.xlu0 %v362
        %v364 = vpop.xlane.xlu0 %363
        %v365 = vsel %vm361, %v364, %v351
        %v366 = vmul.f32 %v358, %v355
        %367 = vadd.xlane.f32.xlu0 %v366
        %v368 = vpop.xlane.xlu0 %367
        %v369 = vsel %vm361, %v368, %v355
        %s370 = scalar_lea.vmem [#allocation2], 21
        %v371 = vld [vmem:[%s370] ss:$0 sm:$0xff]
        %v372 = vxor.u32 %v371, 2147483648
        %v373 = vlaneseq
        %v374 = vand.u32 %v373, 127
        %vm375 = vcmp.eq.s32.totalorder %v374, 21
        %v376 = vmul.f32 %v372, %v365
        %377 = vadd.xlane.f32.xlu0 %v376
        %v378 = vpop.xlane.xlu0 %377
        %v379 = vsel %vm375, %v378, %v365
        %v380 = vmul.f32 %v372, %v369
        %381 = vadd.xlane.f32.xlu0 %v380
        %v382 = vpop.xlane.xlu0 %381
        %v383 = vsel %vm375, %v382, %v369
        %s384 = scalar_lea.vmem [#allocation2], 20
        %v385 = vld [vmem:[%s384] ss:$0 sm:$0xff]
        %v386 = vxor.u32 %v385, 2147483648
        %v387 = vlaneseq
        %v388 = vand.u32 %v387, 127
        %vm389 = vcmp.eq.s32.totalorder %v388, 20
        %v390 = vmul.f32 %v386, %v379
        %391 = vadd.xlane.f32.xlu0 %v390
        %v392 = vpop.xlane.xlu0 %391
        %v393 = vsel %vm389, %v392, %v379
        %v394 = vmul.f32 %v386, %v383
        %395 = vadd.xlane.f32.xlu0 %v394
        %v396 = vpop.xlane.xlu0 %395
        %v397 = vsel %vm389, %v396, %v383
        %s398 = scalar_lea.vmem [#allocation2], 19
        %v399 = vld [vmem:[%s398] ss:$0 sm:$0xff]
        %v400 = vxor.u32 %v399, 2147483648
        %v401 = vlaneseq
        %v402 = vand.u32 %v401, 127
        %vm403 = vcmp.eq.s32.totalorder %v402, 19
        %v404 = vmul.f32 %v400, %v393
        %405 = vadd.xlane.f32.xlu0 %v404
        %v406 = vpop.xlane.xlu0 %405
        %v407 = vsel %vm403, %v406, %v393
        %v408 = vmul.f32 %v400, %v397
        %409 = vadd.xlane.f32.xlu0 %v408
        %v410 = vpop.xlane.xlu0 %409
        %v411 = vsel %vm403, %v410, %v397
        %s412 = scalar_lea.vmem [#allocation2], 18
        %v413 = vld [vmem:[%s412] ss:$0 sm:$0xff]
        %v414 = vxor.u32 %v413, 2147483648
        %v415 = vlaneseq
        %v416 = vand.u32 %v415, 127
        %vm417 = vcmp.eq.s32.totalorder %v416, 18
        %v418 = vmul.f32 %v414, %v407
        %419 = vadd.xlane.f32.xlu0 %v418
        %v420 = vpop.xlane.xlu0 %419
        %v421 = vsel %vm417, %v420, %v407
        %v422 = vmul.f32 %v414, %v411
        %423 = vadd.xlane.f32.xlu0 %v422
        %v424 = vpop.xlane.xlu0 %423
        %v425 = vsel %vm417, %v424, %v411
        %s426 = scalar_lea.vmem [#allocation2], 17
        %v427 = vld [vmem:[%s426] ss:$0 sm:$0xff]
        %v428 = vxor.u32 %v427, 2147483648
        %v429 = vlaneseq
        %v430 = vand.u32 %v429, 127
        %vm431 = vcmp.eq.s32.totalorder %v430, 17
        %v432 = vmul.f32 %v428, %v421
        %433 = vadd.xlane.f32.xlu0 %v432
        %v434 = vpop.xlane.xlu0 %433
        %v435 = vsel %vm431, %v434, %v421
        %v436 = vmul.f32 %v428, %v425
        %437 = vadd.xlane.f32.xlu0 %v436
        %v438 = vpop.xlane.xlu0 %437
        %v439 = vsel %vm431, %v438, %v425
        %s440 = scalar_lea.vmem [#allocation2], 16
        %v441 = vld [vmem:[%s440] ss:$0 sm:$0xff]
        %v442 = vxor.u32 %v441, 2147483648
        %v443 = vlaneseq
        %v444 = vand.u32 %v443, 127
        %vm445 = vcmp.eq.s32.totalorder %v444, 16
        %v446 = vmul.f32 %v442, %v435
        %447 = vadd.xlane.f32.xlu0 %v446
        %v448 = vpop.xlane.xlu0 %447
        %v449 = vsel %vm445, %v448, %v435
        %v450 = vmul.f32 %v442, %v439
        %451 = vadd.xlane.f32.xlu0 %v450
        %v452 = vpop.xlane.xlu0 %451
        %v453 = vsel %vm445, %v452, %v439
        %s454 = scalar_lea.vmem [#allocation2], 15
        %v455 = vld [vmem:[%s454] ss:$0 sm:$0xff]
        %v456 = vxor.u32 %v455, 2147483648
        %v457 = vlaneseq
        %v458 = vand.u32 %v457, 127
        %vm459 = vcmp.eq.s32.totalorder %v458, 15
        %v460 = vmul.f32 %v456, %v253
        %461 = vadd.xlane.f32.xlu0 %v460
        %v462 = vpop.xlane.xlu0 %461
        %v463 = vsel %vm459, %v462, %v253
        %v464 = vmul.f32 %v456, %v449
        %465 = vadd.xlane.f32.xlu0 %v464
        %v466 = vpop.xlane.xlu0 %465
        %v467 = vsel %vm459, %v466, %v449
        %v468 = vmul.f32 %v456, %v453
        %469 = vadd.xlane.f32.xlu0 %v468
        %v470 = vpop.xlane.xlu0 %469
        %v471 = vsel %vm459, %v470, %v453
        %s472 = scalar_lea.vmem [#allocation2], 14
        %v473 = vld [vmem:[%s472] ss:$0 sm:$0xff]
        %v474 = vxor.u32 %v473, 2147483648
        %v475 = vlaneseq
        %v476 = vand.u32 %v475, 127
        %vm477 = vcmp.eq.s32.totalorder %v476, 14
        %v478 = vmul.f32 %v474, %v463
        %479 = vadd.xlane.f32.xlu0 %v478
        %v480 = vpop.xlane.xlu0 %479
        %v481 = vsel %vm477, %v480, %v463
        %v482 = vmul.f32 %v474, %v467
        %483 = vadd.xlane.f32.xlu0 %v482
        %v484 = vpop.xlane.xlu0 %483
        %v485 = vsel %vm477, %v484, %v467
        %v486 = vmul.f32 %v474, %v471
        %487 = vadd.xlane.f32.xlu0 %v486
        %v488 = vpop.xlane.xlu0 %487
        %v489 = vsel %vm477, %v488, %v471
        %s490 = scalar_lea.vmem [#allocation2], 13
        %v491 = vld [vmem:[%s490] ss:$0 sm:$0xff]
        %v492 = vxor.u32 %v491, 2147483648
        %v493 = vlaneseq
        %v494 = vand.u32 %v493, 127
        %vm495 = vcmp.eq.s32.totalorder %v494, 13
        %v496 = vmul.f32 %v492, %v481
        %497 = vadd.xlane.f32.xlu0 %v496
        %v498 = vpop.xlane.xlu0 %497
        %v499 = vsel %vm495, %v498, %v481
        %v500 = vmul.f32 %v492, %v485
        %501 = vadd.xlane.f32.xlu0 %v500
        %v502 = vpop.xlane.xlu0 %501
        %v503 = vsel %vm495, %v502, %v485
        %v504 = vmul.f32 %v492, %v489
        %505 = vadd.xlane.f32.xlu0 %v504
        %v506 = vpop.xlane.xlu0 %505
        %v507 = vsel %vm495, %v506, %v489
        %s508 = scalar_lea.vmem [#allocation2], 12
        %v509 = vld [vmem:[%s508] ss:$0 sm:$0xff]
        %v510 = vxor.u32 %v509, 2147483648
        %v511 = vlaneseq
        %v512 = vand.u32 %v511, 127
        %vm513 = vcmp.eq.s32.totalorder %v512, 12
        %v514 = vmul.f32 %v510, %v499
        %515 = vadd.xlane.f32.xlu0 %v514
        %v516 = vpop.xlane.xlu0 %515
        %v517 = vsel %vm513, %v516, %v499
        %v518 = vmul.f32 %v510, %v503
        %519 = vadd.xlane.f32.xlu0 %v518
        %v520 = vpop.xlane.xlu0 %519
        %v521 = vsel %vm513, %v520, %v503
        %v522 = vmul.f32 %v510, %v507
        %523 = vadd.xlane.f32.xlu0 %v522
        %v524 = vpop.xlane.xlu0 %523
        %v525 = vsel %vm513, %v524, %v507
        %s526 = scalar_lea.vmem [#allocation2], 11
        %v527 = vld [vmem:[%s526] ss:$0 sm:$0xff]
        %v528 = vxor.u32 %v527, 2147483648
        %v529 = vlaneseq
        %v530 = vand.u32 %v529, 127
        %vm531 = vcmp.eq.s32.totalorder %v530, 11
        %v532 = vmul.f32 %v528, %v517
        %533 = vadd.xlane.f32.xlu0 %v532
        %v534 = vpop.xlane.xlu0 %533
        %v535 = vsel %vm531, %v534, %v517
        %v536 = vmul.f32 %v528, %v521
        %537 = vadd.xlane.f32.xlu0 %v536
        %v538 = vpop.xlane.xlu0 %537
        %v539 = vsel %vm531, %v538, %v521
        %v540 = vmul.f32 %v528, %v525
        %541 = vadd.xlane.f32.xlu0 %v540
        %v542 = vpop.xlane.xlu0 %541
        %v543 = vsel %vm531, %v542, %v525
        %s544 = scalar_lea.vmem [#allocation2], 10
        %v545 = vld [vmem:[%s544] ss:$0 sm:$0xff]
        %v546 = vxor.u32 %v545, 2147483648
        %v547 = vlaneseq
        %v548 = vand.u32 %v547, 127
        %vm549 = vcmp.eq.s32.totalorder %v548, 10
        %v550 = vmul.f32 %v546, %v535
        %551 = vadd.xlane.f32.xlu0 %v550
        %v552 = vpop.xlane.xlu0 %551
        %v553 = vsel %vm549, %v552, %v535
        %v554 = vmul.f32 %v546, %v539
        %555 = vadd.xlane.f32.xlu0 %v554
        %v556 = vpop.xlane.xlu0 %555
        %v557 = vsel %vm549, %v556, %v539
        %v558 = vmul.f32 %v546, %v543
        %559 = vadd.xlane.f32.xlu0 %v558
        %v560 = vpop.xlane.xlu0 %559
        %v561 = vsel %vm549, %v560, %v543
        %s562 = scalar_lea.vmem [#allocation2], 9
        %v563 = vld [vmem:[%s562] ss:$0 sm:$0xff]
        %v564 = vxor.u32 %v563, 2147483648
        %v565 = vlaneseq
        %v566 = vand.u32 %v565, 127
        %vm567 = vcmp.eq.s32.totalorder %v566, 9
        %v568 = vmul.f32 %v564, %v553
        %569 = vadd.xlane.f32.xlu0 %v568
        %v570 = vpop.xlane.xlu0 %569
        %v571 = vsel %vm567, %v570, %v553
        %v572 = vmul.f32 %v564, %v557
        %573 = vadd.xlane.f32.xlu0 %v572
        %v574 = vpop.xlane.xlu0 %573
        %v575 = vsel %vm567, %v574, %v557
        %v576 = vmul.f32 %v564, %v561
        %577 = vadd.xlane.f32.xlu0 %v576
        %v578 = vpop.xlane.xlu0 %577
        %v579 = vsel %vm567, %v578, %v561
        %s580 = scalar_lea.vmem [#allocation2], 8
        %v581 = vld [vmem:[%s580] ss:$0 sm:$0xff]
        %v582 = vxor.u32 %v581, 2147483648
        %v583 = vlaneseq
        %v584 = vand.u32 %v583, 127
        %vm585 = vcmp.eq.s32.totalorder %v584, 8
        %v586 = vmul.f32 %v582, %v571
        %587 = vadd.xlane.f32.xlu0 %v586
        %v588 = vpop.xlane.xlu0 %587
        %v589 = vsel %vm585, %v588, %v571
        %v590 = vmul.f32 %v582, %v575
        %591 = vadd.xlane.f32.xlu0 %v590
        %v592 = vpop.xlane.xlu0 %591
        %v593 = vsel %vm585, %v592, %v575
        %v594 = vmul.f32 %v582, %v579
        %595 = vadd.xlane.f32.xlu0 %v594
        %v596 = vpop.xlane.xlu0 %595
        %v597 = vsel %vm585, %v596, %v579
        %s598 = scalar_lea.vmem [#allocation2], 7
        %v599 = vld [vmem:[%s598] ss:$0 sm:$0xff]
        %v600 = vxor.u32 %v599, 2147483648
        %v601 = vlaneseq
        %v602 = vand.u32 %v601, 127
        %vm603 = vcmp.eq.s32.totalorder %v602, 7
        %v604 = vmul.f32 %v600, %v246
        %605 = vadd.xlane.f32.xlu0 %v604
        %v606 = vpop.xlane.xlu0 %605
        %v607 = vsel %vm603, %v606, %v246
        %v608 = vmul.f32 %v600, %v589
        %609 = vadd.xlane.f32.xlu0 %v608
        %v610 = vpop.xlane.xlu0 %609
        %v611 = vsel %vm603, %v610, %v589
        %v612 = vmul.f32 %v600, %v593
        %613 = vadd.xlane.f32.xlu0 %v612
        %v614 = vpop.xlane.xlu0 %613
        %v615 = vsel %vm603, %v614, %v593
        %v616 = vmul.f32 %v600, %v597
        %617 = vadd.xlane.f32.xlu0 %v616
        %v618 = vpop.xlane.xlu0 %617
        %v619 = vsel %vm603, %v618, %v597
        %s620 = scalar_lea.vmem [#allocation2], 6
        %v621 = vld [vmem:[%s620] ss:$0 sm:$0xff]
        %v622 = vxor.u32 %v621, 2147483648
        %v623 = vlaneseq
        %v624 = vand.u32 %v623, 127
        %vm625 = vcmp.eq.s32.totalorder %v624, 6
        %v626 = vmul.f32 %v622, %v607
        %627 = vadd.xlane.f32.xlu0 %v626
        %v628 = vpop.xlane.xlu0 %627
        %v629 = vsel %vm625, %v628, %v607
        %v630 = vmul.f32 %v622, %v611
        %631 = vadd.xlane.f32.xlu0 %v630
        %v632 = vpop.xlane.xlu0 %631
        %v633 = vsel %vm625, %v632, %v611
        %v634 = vmul.f32 %v622, %v615
        %635 = vadd.xlane.f32.xlu0 %v634
        %v636 = vpop.xlane.xlu0 %635
        %v637 = vsel %vm625, %v636, %v615
        %v638 = vmul.f32 %v622, %v619
        %639 = vadd.xlane.f32.xlu0 %v638
        %v640 = vpop.xlane.xlu0 %639
        %v641 = vsel %vm625, %v640, %v619
        %s642 = scalar_lea.vmem [#allocation2], 5
        %v643 = vld [vmem:[%s642] ss:$0 sm:$0xff]
        %v644 = vxor.u32 %v643, 2147483648
        %v645 = vlaneseq
        %v646 = vand.u32 %v645, 127
        %vm647 = vcmp.eq.s32.totalorder %v646, 5
        %v648 = vmul.f32 %v644, %v629
        %649 = vadd.xlane.f32.xlu0 %v648
        %v650 = vpop.xlane.xlu0 %649
        %v651 = vsel %vm647, %v650, %v629
        %v652 = vmul.f32 %v644, %v633
        %653 = vadd.xlane.f32.xlu0 %v652
        %v654 = vpop.xlane.xlu0 %653
        %v655 = vsel %vm647, %v654, %v633
        %v656 = vmul.f32 %v644, %v637
        %657 = vadd.xlane.f32.xlu0 %v656
        %v658 = vpop.xlane.xlu0 %657
        %v659 = vsel %vm647, %v658, %v637
        %v660 = vmul.f32 %v644, %v641
        %661 = vadd.xlane.f32.xlu0 %v660
        %v662 = vpop.xlane.xlu0 %661
        %v663 = vsel %vm647, %v662, %v641
        %s664 = scalar_lea.vmem [#allocation2], 4
        %v665 = vld [vmem:[%s664] ss:$0 sm:$0xff]
        %v666 = vxor.u32 %v665, 2147483648
        %v667 = vlaneseq
        %v668 = vand.u32 %v667, 127
        %vm669 = vcmp.eq.s32.totalorder %v668, 4
        %v670 = vmul.f32 %v666, %v651
        %671 = vadd.xlane.f32.xlu0 %v670
        %v672 = vpop.xlane.xlu0 %671
        %v673 = vsel %vm669, %v672, %v651
        %v674 = vmul.f32 %v666, %v655
        %675 = vadd.xlane.f32.xlu0 %v674
        %v676 = vpop.xlane.xlu0 %675
        %v677 = vsel %vm669, %v676, %v655
        %v678 = vmul.f32 %v666, %v659
        %679 = vadd.xlane.f32.xlu0 %v678
        %v680 = vpop.xlane.xlu0 %679
        %v681 = vsel %vm669, %v680, %v659
        %v682 = vmul.f32 %v666, %v663
        %683 = vadd.xlane.f32.xlu0 %v682
        %v684 = vpop.xlane.xlu0 %683
        %v685 = vsel %vm669, %v684, %v663
        %s686 = scalar_lea.vmem [#allocation2], 3
        %v687 = vld [vmem:[%s686] ss:$0 sm:$0xff]
        %v688 = vxor.u32 %v687, 2147483648
        %v689 = vlaneseq
        %v690 = vand.u32 %v689, 127
        %vm691 = vcmp.eq.s32.totalorder %v690, 3
        %v692 = vmul.f32 %v688, %v673
        %693 = vadd.xlane.f32.xlu0 %v692
        %v694 = vpop.xlane.xlu0 %693
        %v695 = vsel %vm691, %v694, %v673
        %v696 = vmul.f32 %v688, %v677
        %697 = vadd.xlane.f32.xlu0 %v696
        %v698 = vpop.xlane.xlu0 %697
        %v699 = vsel %vm691, %v698, %v677
        %v700 = vmul.f32 %v688, %v681
        %701 = vadd.xlane.f32.xlu0 %v700
        %v702 = vpop.xlane.xlu0 %701
        %v703 = vsel %vm691, %v702, %v681
        %v704 = vmul.f32 %v688, %v685
        %705 = vadd.xlane.f32.xlu0 %v704
        %v706 = vpop.xlane.xlu0 %705
        %v707 = vsel %vm691, %v706, %v685
        %s708 = scalar_lea.vmem [#allocation2], 2
        %v709 = vld [vmem:[%s708] ss:$0 sm:$0xff]
        %v710 = vxor.u32 %v709, 2147483648
        %v711 = vlaneseq
        %v712 = vand.u32 %v711, 127
        %vm713 = vcmp.eq.s32.totalorder %v712, 2
        %v714 = vmul.f32 %v710, %v695
        %715 = vadd.xlane.f32.xlu0 %v714
        %v716 = vpop.xlane.xlu0 %715
        %v717 = vsel %vm713, %v716, %v695
        %v718 = vmul.f32 %v710, %v699
        %719 = vadd.xlane.f32.xlu0 %v718
        %v720 = vpop.xlane.xlu0 %719
        %v721 = vsel %vm713, %v720, %v699
        %v722 = vmul.f32 %v710, %v703
        %723 = vadd.xlane.f32.xlu0 %v722
        %v724 = vpop.xlane.xlu0 %723
        %v725 = vsel %vm713, %v724, %v703
        %v726 = vmul.f32 %v710, %v707
        %727 = vadd.xlane.f32.xlu0 %v726
        %v728 = vpop.xlane.xlu0 %727
        %v729 = vsel %vm713, %v728, %v707
        %s730 = scalar_lea.vmem [#allocation2], 1
        %v731 = vld [vmem:[%s730] ss:$0 sm:$0xff]
        %v732 = vxor.u32 %v731, 2147483648
        %v733 = vlaneseq
        %v734 = vand.u32 %v733, 127
        %vm735 = vcmp.eq.s32.totalorder %v734, 1
        %v736 = vmul.f32 %v732, %v717
        %737 = vadd.xlane.f32.xlu0 %v736
        %v738 = vpop.xlane.xlu0 %737
        %v739 = vsel %vm735, %v738, %v717
        %v740 = vmul.f32 %v732, %v721
        %741 = vadd.xlane.f32.xlu0 %v740
        %v742 = vpop.xlane.xlu0 %741
        %v743 = vsel %vm735, %v742, %v721
        %v744 = vmul.f32 %v732, %v725
        %745 = vadd.xlane.f32.xlu0 %v744
        %v746 = vpop.xlane.xlu0 %745
        %v747 = vsel %vm735, %v746, %v725
        %v748 = vmul.f32 %v732, %v729
        %749 = vadd.xlane.f32.xlu0 %v748
        %v750 = vpop.xlane.xlu0 %749
        %v751 = vsel %vm735, %v750, %v729
        %v752 = vld [vmem:[#allocation2] ss:$0 sm:$0xff]
        %v753 = vxor.u32 %v752, 2147483648
        %v754 = vlaneseq
        %v755 = vand.u32 %v754, 127
        %vm756 = vcmp.eq.s32.totalorder %v755, 0
        %v757 = vmul.f32 %v753, %v739
        %758 = vadd.xlane.f32.xlu0 %v757
        %v759 = vpop.xlane.xlu0 %758
        %v760 = vsel %vm756, %v759, %v739
        %v761 = vmul.f32 %v753, %v743
        %762 = vadd.xlane.f32.xlu0 %v761
        %v763 = vpop.xlane.xlu0 %762
        %v764 = vsel %vm756, %v763, %v743
        %v765 = vmul.f32 %v753, %v747
        %766 = vadd.xlane.f32.xlu0 %v765
        %v767 = vpop.xlane.xlu0 %766
        %v768 = vsel %vm756, %v767, %v747
        %v769 = vmul.f32 %v753, %v751
        %770 = vadd.xlane.f32.xlu0 %v769
        %v771 = vpop.xlane.xlu0 %770
        %v772 = vsel %vm756, %v771, %v751
        %v773 = vrcp.pop %v133
        %v774 = vmul.f32 %v133, %v773
        %v775 = vsub.f32 1.0, %v774
        %v776 = vmul.f32 %v773, %v775
        %v777 = vadd.f32 %v773, %v776
        %vm778 = vweird.f32 %v133
        %vm779 = vweird.f32 %v773
        %vm780 = vmor %vm778, %vm779
        %v781 = vsel %vm780, %v773, %v777
        %v782 = vand.u32 2147483647, %v133
        %vm783 = vcmp.eq.f32.partialorder %v782, 8.507059e+37
        %v784 = vand.u32 %v133, 2147483648
        %v785 = vor.u32 1.1754944e-38, %v784
        %v786 = vsel %vm783, %v785, %v781
        %v787 = vmul.f32 %v760, %v786
        %vm788 = vweird.f32 %v133
        %v789 = vsel %vm788, %v760, %v787
        %790 = vst [vmem:[%s122] sm:$0xff] %v789
        %v791 = vrcp.pop %v162
        %v792 = vmul.f32 %v162, %v791
        %v793 = vsub.f32 1.0, %v792
        %v794 = vmul.f32 %v791, %v793
        %v795 = vadd.f32 %v791, %v794
        %vm796 = vweird.f32 %v162
        %vm797 = vweird.f32 %v791
        %vm798 = vmor %vm796, %vm797
        %v799 = vsel %vm798, %v791, %v795
        %v800 = vand.u32 2147483647, %v162
        %vm801 = vcmp.eq.f32.partialorder %v800, 8.507059e+37
        %v802 = vand.u32 %v162, 2147483648
        %v803 = vor.u32 1.1754944e-38, %v802
        %v804 = vsel %vm801, %v803, %v799
        %v805 = vmul.f32 %v764, %v804
        %vm806 = vweird.f32 %v162
        %v807 = vsel %vm806, %v764, %v805
        %s808 = scalar_lea.vmem %s122, 8 [#allocation1]
        %809 = vst [vmem:[%s808] sm:$0xff] %v807
        %v810 = vrcp.pop %v191
        %v811 = vmul.f32 %v191, %v810
        %v812 = vsub.f32 1.0, %v811
        %v813 = vmul.f32 %v810, %v812
        %v814 = vadd.f32 %v810, %v813
        %vm815 = vweird.f32 %v191
        %vm816 = vweird.f32 %v810
        %vm817 = vmor %vm815, %vm816
        %v818 = vsel %vm817, %v810, %v814
        %v819 = vand.u32 2147483647, %v191
        %vm820 = vcmp.eq.f32.partialorder %v819, 8.507059e+37
        %v821 = vand.u32 %v191, 2147483648
        %v822 = vor.u32 1.1754944e-38, %v821
        %v823 = vsel %vm820, %v822, %v818
        %v824 = vmul.f32 %v768, %v823
        %vm825 = vweird.f32 %v191
        %v826 = vsel %vm825, %v768, %v824
        %s827 = scalar_lea.vmem %s122, 16 [#allocation1]
        %828 = vst [vmem:[%s827] sm:$0xff] %v826
        %v829 = vrcp.pop %v220
        %v830 = vmul.f32 %v220, %v829
        %v831 = vsub.f32 1.0, %v830
        %v832 = vmul.f32 %v829, %v831
        %v833 = vadd.f32 %v829, %v832
        %vm834 = vweird.f32 %v220
        %vm835 = vweird.f32 %v829
        %vm836 = vmor %vm834, %vm835
        %v837 = vsel %vm836, %v829, %v833
        %v838 = vand.u32 2147483647, %v220
        %vm839 = vcmp.eq.f32.partialorder %v838, 8.507059e+37
        %v840 = vand.u32 %v220, 2147483648
        %v841 = vor.u32 1.1754944e-38, %v840
        %v842 = vsel %vm839, %v841, %v837
        %v843 = vmul.f32 %v772, %v842
        %vm844 = vweird.f32 %v220
        %v845 = vsel %vm844, %v772, %v843
        %s846 = scalar_lea.vmem %s122, 24 [#allocation1]
        %847 = vst [vmem:[%s846] sm:$0xff] %v845
        %s848 = sand.u32 %s8, 1
        %s849 = sand.u32 %s8, 1
        %s850 = smul.addr %s849, 32
        %s851 = scalar_lea.vmem [#allocation1], %s850
        %s852 = sadd.s32 %s17, %s16
        %s853 = smul.addr %s15, 4
        %s854 = sadd.s32 %s852, %s853
        %s855 = smul.addr %s14, 4
        %s856 = sadd.s32 %s854, %s855
        %s857 = smul.addr %s856, 8
        %s858 = scalar_lea.vmem %s1, %s857
        // Predicated region
        $region55: #{custom-call.13} parent=53 // pred_check
          _
        $region56: #{custom-call.13} parent=53 // pred_check_branch
          %860 = sbr.rel (0) target = $region58
        $region57: #{custom-call.13} parent=53 // pred_region
          // Predicated region
          $region59: #{custom-call.13} parent=57 // pred_check
            _
          $region60: #{custom-call.13} parent=57 // pred_check_branch
            %862 = sbr.rel (0) target = $region62
          $region61: #{custom-call.13} parent=57 // pred_region
            // Predicated region
            $region74: #{custom-call.13} parent=61 // pred_check
              _
            $region75: #{custom-call.13} parent=61 // pred_check_branch
              %884 = sbr.rel (0) target = $region77
            $region76: #{custom-call.13} parent=61 // pred_region
              loop: start=0, step=1, limit=1
              $region78: #{custom-call.13} parent=76 // loop_pre_header
                _
              $region79: #{custom-call.13} parent=76 // loop_header
                %s886 = sphi 0, %s890
                %p887 = scmp.ge.s32.totalorder %s886, 1
                %s891 = sphi %s851, %s851
                %s892 = sphi %s858, %s858
              $region80: #{custom-call.13} parent=76 // loop_header_branch
                %889 = sbr.rel (%p887) target = $region84
              $region81: #{custom-call.13} parent=76 // loop_body
                %v893 = vld [vmem:[%s891] sm:$0xff]
                %894 = vst [vmem:[%s892] sm:$0xff] %v893
                %v895 = vld [vmem:[%s891 + $0x8] sm:$0xff]
                %896 = vst [vmem:[%s892 + $0x8] sm:$0xff] %v895
                %v897 = vld [vmem:[%s891 + $0x10] sm:$0xff]
                %898 = vst [vmem:[%s892 + $0x10] sm:$0xff] %v897
                %v899 = vld [vmem:[%s891 + $0x18] sm:$0xff]
                %900 = vst [vmem:[%s892 + $0x18] sm:$0xff] %v899
              $region82: #{custom-call.13} parent=76 // loop_footer
                %s890 = sadd.s32 1, %s886
              $region83: #{custom-call.13} parent=76 // loop_footer_branch
                %885 = sbr.rel target = $region79
              $region84: #{custom-call.13} parent=76 // loop_exit
                _
            $region77: #{custom-call.13} parent=61 // pred_fallthru
              _
            // Predicated region
            $region85: #{custom-call.13} parent=61 // pred_check
              _
            $region86: #{custom-call.13} parent=61 // pred_check_branch
              %902 = sbr.rel target = $region88
            $region87: #{custom-call.13} parent=61 // pred_region
              _
            $region88: #{custom-call.13} parent=61 // pred_fallthru
              _
          $region62: #{custom-call.13} parent=57 // pred_fallthru
            _
          // Predicated region
          $region63: #{custom-call.13} parent=57 // pred_check
            _
          $region64: #{custom-call.13} parent=57 // pred_check_branch
            %864 = sbr.rel target = $region66
          $region65: #{custom-call.13} parent=57 // pred_region
            %s866 = ssub.s32 256, 1
            loop: start=0, step=1, limit=1
            $region67: #{custom-call.13} parent=65 // loop_pre_header
              _
            $region68: #{custom-call.13} parent=65 // loop_header
              %s868 = sphi 0, %s872
              %p869 = scmp.ge.s32.totalorder %s868, 1
              %s873 = sphi %s851, %s851
              %s874 = sphi %s858, %s858
            $region69: #{custom-call.13} parent=65 // loop_header_branch
              %871 = sbr.rel (%p869) target = $region73
            $region70: #{custom-call.13} parent=65 // loop_body
              %v875 = vld [vmem:[%s873] sm:%s866]
              %876 = vst [vmem:[%s874] sm:%s866] %v875
              %v877 = vld [vmem:[%s873 + $0x8] sm:%s866]
              %878 = vst [vmem:[%s874 + $0x8] sm:%s866] %v877
              %v879 = vld [vmem:[%s873 + $0x10] sm:%s866]
              %880 = vst [vmem:[%s874 + $0x10] sm:%s866] %v879
              %v881 = vld [vmem:[%s873 + $0x18] sm:%s866]
              %882 = vst [vmem:[%s874 + $0x18] sm:%s866] %v881
            $region71: #{custom-call.13} parent=65 // loop_footer
              %s872 = sadd.s32 1, %s868
            $region72: #{custom-call.13} parent=65 // loop_footer_branch
              %867 = sbr.rel target = $region68
            $region73: #{custom-call.13} parent=65 // loop_exit
              _
          $region66: #{custom-call.13} parent=57 // pred_fallthru
            _
        $region58: #{custom-call.13} parent=53 // pred_fallthru
          _
        %903 = vnop
      $region54: #{custom-call.13} parent=5 // pred_fallthru
        _
      %p904 = scmp.le.s32.totalorder 2, %s3
      // Predicated region
      $region89: #{custom-call.13} parent=5 // pred_check
        %p905 = pneg %p904
      $region90: #{custom-call.13} parent=5 // pred_check_branch
        %907 = sbr.rel (%p905) target = $region92
      $region91: #{custom-call.13} parent=5 // pred_region
        %s908 = ssub.s32 %s3, 2
        %s909 = sand.u32 %s9, 1
        %s910 = sand.u32 %s9, 1
        %s911 = smul.addr %s910, 32
        %s912 = scalar_lea.vmem [#allocation1], %s911
      $region92: #{custom-call.13} parent=5 // pred_fallthru
        _
    $region6: #{custom-call.13} parent=1 // loop_footer
      %s7 = sadd.s32 1, %s3
    $region7: #{custom-call.13} parent=1 // loop_footer_branch
      %2 = sbr.rel target = $region3
    $region8: #{custom-call.13} parent=1 // loop_exit
      _

// kernel: custom-call.14
$region0: #{custom-call.14}
  %s0 = inlined_call_operand.vmem [shape: f32[4,1,32,32], index: 0, kind: input, shape index: {}]
  %s1 = inlined_call_operand.vmem [shape: f32[4,1,32,32], index: 1, kind: output, shape index: {}]
  $region1: #{custom-call.14} parent=0
    #allocation0 [shape = 'u8[32768]{0}', space=vmem, size = 0x8000, scoped, tag = 'operand span for operand 0']
    #allocation1 [shape = 'u8[32768]{0}', space=vmem, size = 0x8000, scoped, tag = 'operand span for operand 1']
    loop: start=0, step=1, limit=6
    $region2: #{custom-call.14} parent=1 // loop_pre_header
      _
    $region3: #{custom-call.14} parent=1 // loop_header
      %s3 = sphi 0, %s7
      %p4 = scmp.ge.s32.totalorder %s3, 6
      %s10 = sphi 0, %s36
      %s11 = sphi 0, %s32
      %s12 = sphi 0, %s28
      %s13 = sphi 0, %s24
      %s14 = sphi 0, %s10
      %s15 = sphi 0, %s11
      %s16 = sphi 0, %s12
      %s17 = sphi 0, %s13
      %s18 = sphi 0, %s14
      %s19 = sphi 0, %s15
      %s20 = sphi 0, %s16
      %s21 = sphi 0, %s17
    $region4: #{custom-call.14} parent=1 // loop_header_branch
      %6 = sbr.rel (%p4) target = $region8
    $region5: #{custom-call.14} parent=1 // loop_body
      %s8 = ssub.s32 %s3, 1
      %s9 = ssub.s32 %s3, 2
      %s22 = sadd.s32 1, %s13
      %p23 = scmp.ge.s32.totalorder %s22, 1
      %s24 = scalar_select %p23, 0, %s22
      %s25 = sadd.s32 1, %s12
      %s26 = scalar_select %p23, %s25, %s12
      %p27 = scmp.ge.s32.totalorder %s26, 1
      %s28 = scalar_select %p27, 0, %s26
      %s29 = sadd.s32 1, %s11
      %s30 = scalar_select %p27, %s29, %s11
      %p31 = scmp.ge.s32.totalorder %s30, 1
      %s32 = scalar_select %p31, 0, %s30
      %s33 = sadd.s32 1, %s10
      %s34 = scalar_select %p31, %s33, %s10
      %p35 = scmp.ge.s32.totalorder %s34, 4
      %s36 = scalar_select %p35, 0, %s34
      %p37 = scmp.le.s32.totalorder 1, %s3
      %p38 = scmp.lt.s32.totalorder %s3, 5
      %p39 = pnand %p37, %p38
      %p40 = pneg %p39
      // Predicated region
      $region9: #{custom-call.14} parent=5 // pred_check
        _
      $region10: #{custom-call.14} parent=5 // pred_check_branch
        %42 = sbr.rel (%p39) target = $region12
      $region11: #{custom-call.14} parent=5 // pred_region
        %s43 = ssub.s32 %s3, 1
      $region12: #{custom-call.14} parent=5 // pred_fallthru
        _
      %p44 = scmp.lt.s32.totalorder %s3, 4
      // Predicated region
      $region13: #{custom-call.14} parent=5 // pred_check
        %p45 = pneg %p44
      $region14: #{custom-call.14} parent=5 // pred_check_branch
        %47 = sbr.rel (%p45) target = $region16
      $region15: #{custom-call.14} parent=5 // pred_region
        %s48 = sand.u32 %s3, 1
        %s49 = sand.u32 %s3, 1
        %s50 = smul.addr %s49, 32
        %s51 = scalar_lea.vmem [#allocation0], %s50
        %s52 = sadd.s32 %s13, %s12
        %s53 = smul.addr %s11, 4
        %s54 = sadd.s32 %s52, %s53
        %s55 = smul.addr %s10, 4
        %s56 = sadd.s32 %s54, %s55
        %s57 = smul.addr %s56, 8
        %s58 = scalar_lea.vmem %s0, %s57
        // Predicated region
        $region17: #{custom-call.14} parent=15 // pred_check
          _
        $region18: #{custom-call.14} parent=15 // pred_check_branch
          %60 = sbr.rel (0) target = $region20
        $region19: #{custom-call.14} parent=15 // pred_region
          // Predicated region
          $region21: #{custom-call.14} parent=19 // pred_check
            _
          $region22: #{custom-call.14} parent=19 // pred_check_branch
            %62 = sbr.rel (0) target = $region24
          $region23: #{custom-call.14} parent=19 // pred_region
            // Predicated region
            $region36: #{custom-call.14} parent=23 // pred_check
              _
            $region37: #{custom-call.14} parent=23 // pred_check_branch
              %84 = sbr.rel (0) target = $region39
            $region38: #{custom-call.14} parent=23 // pred_region
              loop: start=0, step=1, limit=1
              $region40: #{custom-call.14} parent=38 // loop_pre_header
                _
              $region41: #{custom-call.14} parent=38 // loop_header
                %s86 = sphi 0, %s90
                %p87 = scmp.ge.s32.totalorder %s86, 1
                %s91 = sphi %s58, %s58
                %s92 = sphi %s51, %s51
              $region42: #{custom-call.14} parent=38 // loop_header_branch
                %89 = sbr.rel (%p87) target = $region46
              $region43: #{custom-call.14} parent=38 // loop_body
                %v93 = vld [vmem:[%s91] sm:$0xff]
                %94 = vst [vmem:[%s92] sm:$0xff] %v93
                %v95 = vld [vmem:[%s91 + $0x8] sm:$0xff]
                %96 = vst [vmem:[%s92 + $0x8] sm:$0xff] %v95
                %v97 = vld [vmem:[%s91 + $0x10] sm:$0xff]
                %98 = vst [vmem:[%s92 + $0x10] sm:$0xff] %v97
                %v99 = vld [vmem:[%s91 + $0x18] sm:$0xff]
                %100 = vst [vmem:[%s92 + $0x18] sm:$0xff] %v99
              $region44: #{custom-call.14} parent=38 // loop_footer
                %s90 = sadd.s32 1, %s86
              $region45: #{custom-call.14} parent=38 // loop_footer_branch
                %85 = sbr.rel target = $region41
              $region46: #{custom-call.14} parent=38 // loop_exit
                _
            $region39: #{custom-call.14} parent=23 // pred_fallthru
              _
            // Predicated region
            $region47: #{custom-call.14} parent=23 // pred_check
              _
            $region48: #{custom-call.14} parent=23 // pred_check_branch
              %102 = sbr.rel target = $region50
            $region49: #{custom-call.14} parent=23 // pred_region
              _
            $region50: #{custom-call.14} parent=23 // pred_fallthru
              _
          $region24: #{custom-call.14} parent=19 // pred_fallthru
            _
          // Predicated region
          $region25: #{custom-call.14} parent=19 // pred_check
            _
          $region26: #{custom-call.14} parent=19 // pred_check_branch
            %64 = sbr.rel target = $region28
          $region27: #{custom-call.14} parent=19 // pred_region
            %s66 = ssub.s32 256, 1
            loop: start=0, step=1, limit=1
            $region29: #{custom-call.14} parent=27 // loop_pre_header
              _
            $region30: #{custom-call.14} parent=27 // loop_header
              %s68 = sphi 0, %s72
              %p69 = scmp.ge.s32.totalorder %s68, 1
              %s73 = sphi %s58, %s58
              %s74 = sphi %s51, %s51
            $region31: #{custom-call.14} parent=27 // loop_header_branch
              %71 = sbr.rel (%p69) target = $region35
            $region32: #{custom-call.14} parent=27 // loop_body
              %v75 = vld [vmem:[%s73] sm:%s66]
              %76 = vst [vmem:[%s74] sm:%s66] %v75
              %v77 = vld [vmem:[%s73 + $0x8] sm:%s66]
              %78 = vst [vmem:[%s74 + $0x8] sm:%s66] %v77
              %v79 = vld [vmem:[%s73 + $0x10] sm:%s66]
              %80 = vst [vmem:[%s74 + $0x10] sm:%s66] %v79
              %v81 = vld [vmem:[%s73 + $0x18] sm:%s66]
              %82 = vst [vmem:[%s74 + $0x18] sm:%s66] %v81
            $region33: #{custom-call.14} parent=27 // loop_footer
              %s72 = sadd.s32 1, %s68
            $region34: #{custom-call.14} parent=27 // loop_footer_branch
              %67 = sbr.rel target = $region30
            $region35: #{custom-call.14} parent=27 // loop_exit
              _
          $region28: #{custom-call.14} parent=19 // pred_fallthru
            _
        $region20: #{custom-call.14} parent=15 // pred_fallthru
          _
        %103 = vnop
      $region16: #{custom-call.14} parent=5 // pred_fallthru
        _
      %p104 = scmp.le.s32.totalorder 1, %s3
      %p105 = scmp.lt.s32.totalorder %s3, 5
      %p106 = pnand %p104, %p105
      %p107 = pneg %p106
      // Predicated region
      $region51: #{custom-call.14} parent=5 // pred_check
        _
      $region52: #{custom-call.14} parent=5 // pred_check_branch
        %109 = sbr.rel (%p106) target = $region54
      $region53: #{custom-call.14} parent=5 // pred_region
        #allocation2 [shape = 'f32[32,32]{1,0}', space=vmem, size = 0x4000, scoped, tag = 'rescaled input a']
        %s110 = ssub.s32 %s3, 1
        %s111 = sand.u32 %s8, 1
        %s112 = sand.u32 %s8, 1
        %s113 = smul.addr %s112, 32
        %s114 = scalar_lea.vmem [#allocation0], %s113
        %s115 = sand.u32 %s8, 1
        %s116 = sand.u32 %s8, 1
        %s117 = smul.addr %s116, 32
        %s118 = scalar_lea.vmem [#allocation0], %s117
        %s119 = sand.u32 %s8, 1
        %s120 = sand.u32 %s8, 1
        %s121 = smul.addr %s120, 32
        %s122 = scalar_lea.vmem [#allocation1], %s121
        %v123 = vlaneseq
        %v124 = vand.u32 %v123, 127
        %vm125 = vcmp.lt.s32.totalorder %v124, 32
        %v126 = vlaneseq
        %v127 = vshrl.u32 %v126, 7
        %vm129 = vcmp.eq.s32.totalorder %v127, %v124
        %v130 = vld [vmem:[%s114] sm:$0xff]
        %v131 = vsel %vm129, %v130, 0.0
        %132 = vadd.xlane.f32.xlu0 %v131
        %v133 = vpop.xlane.xlu0 %132
        %vm134 = vcmp.ge.s32.totalorder %v127, %v124
        %vm135 = vmand %vm134, %vm125
        %v136 = vsel %vm135, %v130, 0.0
        %v137 = vrcp.pop %v133
        %v138 = vmul.f32 %v133, %v137
        %v139 = vsub.f32 1.0, %v138
        %v140 = vmul.f32 %v137, %v139
        %v141 = vadd.f32 %v137, %v140
        %vm142 = vweird.f32 %v133
        %vm143 = vweird.f32 %v137
        %vm144 = vmor %vm142, %vm143
        %v145 = vsel %vm144, %v137, %v141
        %v146 = vand.u32 2147483647, %v133
        %vm147 = vcmp.eq.f32.partialorder %v146, 8.507059e+37
        %v148 = vand.u32 %v133, 2147483648
        %v149 = vor.u32 1.1754944e-38, %v148
        %v150 = vsel %vm147, %v149, %v145
        %v151 = vmul.f32 %v136, %v150
        %152 = vst [vmem:[#allocation2] sm:$0xff] %v151
        %s153 = scalar_lea.vmem %s114, 8 [#allocation0]
        %s154 = scalar_lea.vmem [#allocation2], 8
        %v155 = vlaneseq
        %v156 = vshrl.u32 %v155, 7
        %v157 = vadd.s32 %v156, 8
        %vm158 = vcmp.eq.s32.totalorder %v157, %v124
        %v159 = vld [vmem:[%s153] sm:$0xff]
        %v160 = vsel %vm158, %v159, 0.0
        %161 = vadd.xlane.f32.xlu0 %v160
        %v162 = vpop.xlane.xlu0 %161
        %vm163 = vcmp.ge.s32.totalorder %v157, %v124
        %vm164 = vmand %vm163, %vm125
        %v165 = vsel %vm164, %v159, 0.0
        %v166 = vrcp.pop %v162
        %v167 = vmul.f32 %v162, %v166
        %v168 = vsub.f32 1.0, %v167
        %v169 = vmul.f32 %v166, %v168
        %v170 = vadd.f32 %v166, %v169
        %vm171 = vweird.f32 %v162
        %vm172 = vweird.f32 %v166
        %vm173 = vmor %vm171, %vm172
        %v174 = vsel %vm173, %v166, %v170
        %v175 = vand.u32 2147483647, %v162
        %vm176 = vcmp.eq.f32.partialorder %v175, 8.507059e+37
        %v177 = vand.u32 %v162, 2147483648
        %v178 = vor.u32 1.1754944e-38, %v177
        %v179 = vsel %vm176, %v178, %v174
        %v180 = vmul.f32 %v165, %v179
        %181 = vst [vmem:[%s154] sm:$0xff] %v180
        %s182 = scalar_lea.vmem %s114, 16 [#allocation0]
        %s183 = scalar_lea.vmem [#allocation2], 16
        %v184 = vlaneseq
        %v185 = vshrl.u32 %v184, 7
        %v186 = vadd.s32 %v185, 16
        %vm187 = vcmp.eq.s32.totalorder %v186, %v124
        %v188 = vld [vmem:[%s182] sm:$0xff]
        %v189 = vsel %vm187, %v188, 0.0
        %190 = vadd.xlane.f32.xlu0 %v189
        %v191 = vpop.xlane.xlu0 %190
        %vm192 = vcmp.ge.s32.totalorder %v186, %v124
        %vm193 = vmand %vm192, %vm125
        %v194 = vsel %vm193, %v188, 0.0
        %v195 = vrcp.pop %v191
        %v196 = vmul.f32 %v191, %v195
        %v197 = vsub.f32 1.0, %v196
        %v198 = vmul.f32 %v195, %v197
        %v199 = vadd.f32 %v195, %v198
        %vm200 = vweird.f32 %v191
        %vm201 = vweird.f32 %v195
        %vm202 = vmor %vm200, %vm201
        %v203 = vsel %vm202, %v195, %v199
        %v204 = vand.u32 2147483647, %v191
        %vm205 = vcmp.eq.f32.partialorder %v204, 8.507059e+37
        %v206 = vand.u32 %v191, 2147483648
        %v207 = vor.u32 1.1754944e-38, %v206
        %v208 = vsel %vm205, %v207, %v203
        %v209 = vmul.f32 %v194, %v208
        %210 = vst [vmem:[%s183] sm:$0xff] %v209
        %s211 = scalar_lea.vmem %s114, 24 [#allocation0]
        %s212 = scalar_lea.vmem [#allocation2], 24
        %v213 = vlaneseq
        %v214 = vshrl.u32 %v213, 7
        %v215 = vadd.s32 %v214, 24
        %vm216 = vcmp.eq.s32.totalorder %v215, %v124
        %v217 = vld [vmem:[%s211] sm:$0xff]
        %v218 = vsel %vm216, %v217, 0.0
        %219 = vadd.xlane.f32.xlu0 %v218
        %v220 = vpop.xlane.xlu0 %219
        %vm221 = vcmp.ge.s32.totalorder %v215, %v124
        %vm222 = vmand %vm221, %vm125
        %v223 = vsel %vm222, %v217, 0.0
        %v224 = vrcp.pop %v220
        %v225 = vmul.f32 %v220, %v224
        %v226 = vsub.f32 1.0, %v225
        %v227 = vmul.f32 %v224, %v226
        %v228 = vadd.f32 %v224, %v227
        %vm229 = vweird.f32 %v220
        %vm230 = vweird.f32 %v224
        %vm231 = vmor %vm229, %vm230
        %v232 = vsel %vm231, %v224, %v228
        %v233 = vand.u32 2147483647, %v220
        %vm234 = vcmp.eq.f32.partialorder %v233, 8.507059e+37
        %v235 = vand.u32 %v220, 2147483648
        %v236 = vor.u32 1.1754944e-38, %v235
        %v237 = vsel %vm234, %v236, %v232
        %v238 = vmul.f32 %v223, %v237
        %239 = vst [vmem:[%s212] sm:$0xff] %v238
        %v240 = vlaneseq
        %v241 = vand.u32 %v240, 127
        %v242 = vlaneseq
        %v243 = vshrl.u32 %v242, 7
        %vm245 = vcmp.eq.s32.totalorder %v241, %v243
        %v246 = vlaneseq
        %v247 = vand.u32 %v246, 127
        %vm248 = vcmp.eq.s32.totalorder %v247, 0
        %v249 = vsel %vm248, 1.0, -1.0
        %v250 = vsel %vm245, %v249, 0.0
        %v251 = vlaneseq
        %v252 = vand.u32 %v251, 127
        %v253 = vlaneseq
        %v254 = vshrl.u32 %v253, 7
        %v255 = vadd.s32 %v254, 8
        %vm256 = vcmp.eq.s32.totalorder %v252, %v255
        %v257 = vsel %vm256, -1.0, 0.0
        %v258 = vlaneseq
        %v259 = vand.u32 %v258, 127
        %v260 = vlaneseq
        %v261 = vshrl.u32 %v260, 7
        %v262 = vadd.s32 %v261, 16
        %vm263 = vcmp.eq.s32.totalorder %v259, %v262
        %v264 = vsel %vm263, -1.0, 0.0
        %v265 = vlaneseq
        %v266 = vand.u32 %v265, 127
        %v267 = vlaneseq
        %v268 = vshrl.u32 %v267, 7
        %v269 = vadd.s32 %v268, 24
        %vm270 = vcmp.eq.s32.totalorder %v266, %v269
        %v271 = vsel %vm270, -1.0, 0.0
        %s272 = scalar_lea.vmem [#allocation2], 1
        %v273 = vld [vmem:[%s272] ss:$0 sm:$0xff]
        %v274 = vxor.u32 %v273, 2147483648
        %v275 = vlaneseq
        %v276 = vand.u32 %v275, 127
        %vm277 = vcmp.eq.s32.totalorder %v276, 1
        %v278 = vmul.f32 %v274, %v250
        %279 = vadd.xlane.f32.xlu0 %v278
        %v280 = vpop.xlane.xlu0 %279
        %v281 = vsel %vm277, %v280, %v250
        %s282 = scalar_lea.vmem [#allocation2], 2
        %v283 = vld [vmem:[%s282] ss:$0 sm:$0xff]
        %v284 = vxor.u32 %v283, 2147483648
        %v285 = vlaneseq
        %v286 = vand.u32 %v285, 127
        %vm287 = vcmp.eq.s32.totalorder %v286, 2
        %v288 = vmul.f32 %v284, %v281
        %289 = vadd.xlane.f32.xlu0 %v288
        %v290 = vpop.xlane.xlu0 %289
        %v291 = vsel %vm287, %v290, %v281
        %s292 = scalar_lea.vmem [#allocation2], 3
        %v293 = vld [vmem:[%s292] ss:$0 sm:$0xff]
        %v294 = vxor.u32 %v293, 2147483648
        %v295 = vlaneseq
        %v296 = vand.u32 %v295, 127
        %vm297 = vcmp.eq.s32.totalorder %v296, 3
        %v298 = vmul.f32 %v294, %v291
        %299 = vadd.xlane.f32.xlu0 %v298
        %v300 = vpop.xlane.xlu0 %299
        %v301 = vsel %vm297, %v300, %v291
        %s302 = scalar_lea.vmem [#allocation2], 4
        %v303 = vld [vmem:[%s302] ss:$0 sm:$0xff]
        %v304 = vxor.u32 %v303, 2147483648
        %v305 = vlaneseq
        %v306 = vand.u32 %v305, 127
        %vm307 = vcmp.eq.s32.totalorder %v306, 4
        %v308 = vmul.f32 %v304, %v301
        %309 = vadd.xlane.f32.xlu0 %v308
        %v310 = vpop.xlane.xlu0 %309
        %v311 = vsel %vm307, %v310, %v301
        %s312 = scalar_lea.vmem [#allocation2], 5
        %v313 = vld [vmem:[%s312] ss:$0 sm:$0xff]
        %v314 = vxor.u32 %v313, 2147483648
        %v315 = vlaneseq
        %v316 = vand.u32 %v315, 127
        %vm317 = vcmp.eq.s32.totalorder %v316, 5
        %v318 = vmul.f32 %v314, %v311
        %319 = vadd.xlane.f32.xlu0 %v318
        %v320 = vpop.xlane.xlu0 %319
        %v321 = vsel %vm317, %v320, %v311
        %s322 = scalar_lea.vmem [#allocation2], 6
        %v323 = vld [vmem:[%s322] ss:$0 sm:$0xff]
        %v324 = vxor.u32 %v323, 2147483648
        %v325 = vlaneseq
        %v326 = vand.u32 %v325, 127
        %vm327 = vcmp.eq.s32.totalorder %v326, 6
        %v328 = vmul.f32 %v324, %v321
        %329 = vadd.xlane.f32.xlu0 %v328
        %v330 = vpop.xlane.xlu0 %329
        %v331 = vsel %vm327, %v330, %v321
        %s332 = scalar_lea.vmem [#allocation2], 7
        %v333 = vld [vmem:[%s332] ss:$0 sm:$0xff]
        %v334 = vxor.u32 %v333, 2147483648
        %v335 = vlaneseq
        %v336 = vand.u32 %v335, 127
        %vm337 = vcmp.eq.s32.totalorder %v336, 7
        %v338 = vmul.f32 %v334, %v331
        %339 = vadd.xlane.f32.xlu0 %v338
        %v340 = vpop.xlane.xlu0 %339
        %v341 = vsel %vm337, %v340, %v331
        %s342 = scalar_lea.vmem [#allocation2], 8
        %v343 = vld [vmem:[%s342] ss:$0 sm:$0xff]
        %v344 = vxor.u32 %v343, 2147483648
        %v345 = vlaneseq
        %v346 = vand.u32 %v345, 127
        %vm347 = vcmp.eq.s32.totalorder %v346, 8
        %v348 = vmul.f32 %v344, %v341
        %349 = vadd.xlane.f32.xlu0 %v348
        %v350 = vpop.xlane.xlu0 %349
        %v351 = vsel %vm347, %v350, %v341
        %v352 = vmul.f32 %v344, %v257
        %353 = vadd.xlane.f32.xlu0 %v352
        %v354 = vpop.xlane.xlu0 %353
        %v355 = vsel %vm347, %v354, %v257
        %s356 = scalar_lea.vmem [#allocation2], 9
        %v357 = vld [vmem:[%s356] ss:$0 sm:$0xff]
        %v358 = vxor.u32 %v357, 2147483648
        %v359 = vlaneseq
        %v360 = vand.u32 %v359, 127
        %vm361 = vcmp.eq.s32.totalorder %v360, 9
        %v362 = vmul.f32 %v358, %v351
        %363 = vadd.xlane.f32.xlu0 %v362
        %v364 = vpop.xlane.xlu0 %363
        %v365 = vsel %vm361, %v364, %v351
        %v366 = vmul.f32 %v358, %v355
        %367 = vadd.xlane.f32.xlu0 %v366
        %v368 = vpop.xlane.xlu0 %367
        %v369 = vsel %vm361, %v368, %v355
        %s370 = scalar_lea.vmem [#allocation2], 10
        %v371 = vld [vmem:[%s370] ss:$0 sm:$0xff]
        %v372 = vxor.u32 %v371, 2147483648
        %v373 = vlaneseq
        %v374 = vand.u32 %v373, 127
        %vm375 = vcmp.eq.s32.totalorder %v374, 10
        %v376 = vmul.f32 %v372, %v365
        %377 = vadd.xlane.f32.xlu0 %v376
        %v378 = vpop.xlane.xlu0 %377
        %v379 = vsel %vm375, %v378, %v365
        %v380 = vmul.f32 %v372, %v369
        %381 = vadd.xlane.f32.xlu0 %v380
        %v382 = vpop.xlane.xlu0 %381
        %v383 = vsel %vm375, %v382, %v369
        %s384 = scalar_lea.vmem [#allocation2], 11
        %v385 = vld [vmem:[%s384] ss:$0 sm:$0xff]
        %v386 = vxor.u32 %v385, 2147483648
        %v387 = vlaneseq
        %v388 = vand.u32 %v387, 127
        %vm389 = vcmp.eq.s32.totalorder %v388, 11
        %v390 = vmul.f32 %v386, %v379
        %391 = vadd.xlane.f32.xlu0 %v390
        %v392 = vpop.xlane.xlu0 %391
        %v393 = vsel %vm389, %v392, %v379
        %v394 = vmul.f32 %v386, %v383
        %395 = vadd.xlane.f32.xlu0 %v394
        %v396 = vpop.xlane.xlu0 %395
        %v397 = vsel %vm389, %v396, %v383
        %s398 = scalar_lea.vmem [#allocation2], 12
        %v399 = vld [vmem:[%s398] ss:$0 sm:$0xff]
        %v400 = vxor.u32 %v399, 2147483648
        %v401 = vlaneseq
        %v402 = vand.u32 %v401, 127
        %vm403 = vcmp.eq.s32.totalorder %v402, 12
        %v404 = vmul.f32 %v400, %v393
        %405 = vadd.xlane.f32.xlu0 %v404
        %v406 = vpop.xlane.xlu0 %405
        %v407 = vsel %vm403, %v406, %v393
        %v408 = vmul.f32 %v400, %v397
        %409 = vadd.xlane.f32.xlu0 %v408
        %v410 = vpop.xlane.xlu0 %409
        %v411 = vsel %vm403, %v410, %v397
        %s412 = scalar_lea.vmem [#allocation2], 13
        %v413 = vld [vmem:[%s412] ss:$0 sm:$0xff]
        %v414 = vxor.u32 %v413, 2147483648
        %v415 = vlaneseq
        %v416 = vand.u32 %v415, 127
        %vm417 = vcmp.eq.s32.totalorder %v416, 13
        %v418 = vmul.f32 %v414, %v407
        %419 = vadd.xlane.f32.xlu0 %v418
        %v420 = vpop.xlane.xlu0 %419
        %v421 = vsel %vm417, %v420, %v407
        %v422 = vmul.f32 %v414, %v411
        %423 = vadd.xlane.f32.xlu0 %v422
        %v424 = vpop.xlane.xlu0 %423
        %v425 = vsel %vm417, %v424, %v411
        %s426 = scalar_lea.vmem [#allocation2], 14
        %v427 = vld [vmem:[%s426] ss:$0 sm:$0xff]
        %v428 = vxor.u32 %v427, 2147483648
        %v429 = vlaneseq
        %v430 = vand.u32 %v429, 127
        %vm431 = vcmp.eq.s32.totalorder %v430, 14
        %v432 = vmul.f32 %v428, %v421
        %433 = vadd.xlane.f32.xlu0 %v432
        %v434 = vpop.xlane.xlu0 %433
        %v435 = vsel %vm431, %v434, %v421
        %v436 = vmul.f32 %v428, %v425
        %437 = vadd.xlane.f32.xlu0 %v436
        %v438 = vpop.xlane.xlu0 %437
        %v439 = vsel %vm431, %v438, %v425
        %s440 = scalar_lea.vmem [#allocation2], 15
        %v441 = vld [vmem:[%s440] ss:$0 sm:$0xff]
        %v442 = vxor.u32 %v441, 2147483648
        %v443 = vlaneseq
        %v444 = vand.u32 %v443, 127
        %vm445 = vcmp.eq.s32.totalorder %v444, 15
        %v446 = vmul.f32 %v442, %v435
        %447 = vadd.xlane.f32.xlu0 %v446
        %v448 = vpop.xlane.xlu0 %447
        %v449 = vsel %vm445, %v448, %v435
        %v450 = vmul.f32 %v442, %v439
        %451 = vadd.xlane.f32.xlu0 %v450
        %v452 = vpop.xlane.xlu0 %451
        %v453 = vsel %vm445, %v452, %v439
        %s454 = scalar_lea.vmem [#allocation2], 16
        %v455 = vld [vmem:[%s454] ss:$0 sm:$0xff]
        %v456 = vxor.u32 %v455, 2147483648
        %v457 = vlaneseq
        %v458 = vand.u32 %v457, 127
        %vm459 = vcmp.eq.s32.totalorder %v458, 16
        %v460 = vmul.f32 %v456, %v449
        %461 = vadd.xlane.f32.xlu0 %v460
        %v462 = vpop.xlane.xlu0 %461
        %v463 = vsel %vm459, %v462, %v449
        %v464 = vmul.f32 %v456, %v453
        %465 = vadd.xlane.f32.xlu0 %v464
        %v466 = vpop.xlane.xlu0 %465
        %v467 = vsel %vm459, %v466, %v453
        %v468 = vmul.f32 %v456, %v264
        %469 = vadd.xlane.f32.xlu0 %v468
        %v470 = vpop.xlane.xlu0 %469
        %v471 = vsel %vm459, %v470, %v264
        %s472 = scalar_lea.vmem [#allocation2], 17
        %v473 = vld [vmem:[%s472] ss:$0 sm:$0xff]
        %v474 = vxor.u32 %v473, 2147483648
        %v475 = vlaneseq
        %v476 = vand.u32 %v475, 127
        %vm477 = vcmp.eq.s32.totalorder %v476, 17
        %v478 = vmul.f32 %v474, %v463
        %479 = vadd.xlane.f32.xlu0 %v478
        %v480 = vpop.xlane.xlu0 %479
        %v481 = vsel %vm477, %v480, %v463
        %v482 = vmul.f32 %v474, %v467
        %483 = vadd.xlane.f32.xlu0 %v482
        %v484 = vpop.xlane.xlu0 %483
        %v485 = vsel %vm477, %v484, %v467
        %v486 = vmul.f32 %v474, %v471
        %487 = vadd.xlane.f32.xlu0 %v486
        %v488 = vpop.xlane.xlu0 %487
        %v489 = vsel %vm477, %v488, %v471
        %s490 = scalar_lea.vmem [#allocation2], 18
        %v491 = vld [vmem:[%s490] ss:$0 sm:$0xff]
        %v492 = vxor.u32 %v491, 2147483648
        %v493 = vlaneseq
        %v494 = vand.u32 %v493, 127
        %vm495 = vcmp.eq.s32.totalorder %v494, 18
        %v496 = vmul.f32 %v492, %v481
        %497 = vadd.xlane.f32.xlu0 %v496
        %v498 = vpop.xlane.xlu0 %497
        %v499 = vsel %vm495, %v498, %v481
        %v500 = vmul.f32 %v492, %v485
        %501 = vadd.xlane.f32.xlu0 %v500
        %v502 = vpop.xlane.xlu0 %501
        %v503 = vsel %vm495, %v502, %v485
        %v504 = vmul.f32 %v492, %v489
        %505 = vadd.xlane.f32.xlu0 %v504
        %v506 = vpop.xlane.xlu0 %505
        %v507 = vsel %vm495, %v506, %v489
        %s508 = scalar_lea.vmem [#allocation2], 19
        %v509 = vld [vmem:[%s508] ss:$0 sm:$0xff]
        %v510 = vxor.u32 %v509, 2147483648
        %v511 = vlaneseq
        %v512 = vand.u32 %v511, 127
        %vm513 = vcmp.eq.s32.totalorder %v512, 19
        %v514 = vmul.f32 %v510, %v499
        %515 = vadd.xlane.f32.xlu0 %v514
        %v516 = vpop.xlane.xlu0 %515
        %v517 = vsel %vm513, %v516, %v499
        %v518 = vmul.f32 %v510, %v503
        %519 = vadd.xlane.f32.xlu0 %v518
        %v520 = vpop.xlane.xlu0 %519
        %v521 = vsel %vm513, %v520, %v503
        %v522 = vmul.f32 %v510, %v507
        %523 = vadd.xlane.f32.xlu0 %v522
        %v524 = vpop.xlane.xlu0 %523
        %v525 = vsel %vm513, %v524, %v507
        %s526 = scalar_lea.vmem [#allocation2], 20
        %v527 = vld [vmem:[%s526] ss:$0 sm:$0xff]
        %v528 = vxor.u32 %v527, 2147483648
        %v529 = vlaneseq
        %v530 = vand.u32 %v529, 127
        %vm531 = vcmp.eq.s32.totalorder %v530, 20
        %v532 = vmul.f32 %v528, %v517
        %533 = vadd.xlane.f32.xlu0 %v532
        %v534 = vpop.xlane.xlu0 %533
        %v535 = vsel %vm531, %v534, %v517
        %v536 = vmul.f32 %v528, %v521
        %537 = vadd.xlane.f32.xlu0 %v536
        %v538 = vpop.xlane.xlu0 %537
        %v539 = vsel %vm531, %v538, %v521
        %v540 = vmul.f32 %v528, %v525
        %541 = vadd.xlane.f32.xlu0 %v540
        %v542 = vpop.xlane.xlu0 %541
        %v543 = vsel %vm531, %v542, %v525
        %s544 = scalar_lea.vmem [#allocation2], 21
        %v545 = vld [vmem:[%s544] ss:$0 sm:$0xff]
        %v546 = vxor.u32 %v545, 2147483648
        %v547 = vlaneseq
        %v548 = vand.u32 %v547, 127
        %vm549 = vcmp.eq.s32.totalorder %v548, 21
        %v550 = vmul.f32 %v546, %v535
        %551 = vadd.xlane.f32.xlu0 %v550
        %v552 = vpop.xlane.xlu0 %551
        %v553 = vsel %vm549, %v552, %v535
        %v554 = vmul.f32 %v546, %v539
        %555 = vadd.xlane.f32.xlu0 %v554
        %v556 = vpop.xlane.xlu0 %555
        %v557 = vsel %vm549, %v556, %v539
        %v558 = vmul.f32 %v546, %v543
        %559 = vadd.xlane.f32.xlu0 %v558
        %v560 = vpop.xlane.xlu0 %559
        %v561 = vsel %vm549, %v560, %v543
        %s562 = scalar_lea.vmem [#allocation2], 22
        %v563 = vld [vmem:[%s562] ss:$0 sm:$0xff]
        %v564 = vxor.u32 %v563, 2147483648
        %v565 = vlaneseq
        %v566 = vand.u32 %v565, 127
        %vm567 = vcmp.eq.s32.totalorder %v566, 22
        %v568 = vmul.f32 %v564, %v553
        %569 = vadd.xlane.f32.xlu0 %v568
        %v570 = vpop.xlane.xlu0 %569
        %v571 = vsel %vm567, %v570, %v553
        %v572 = vmul.f32 %v564, %v557
        %573 = vadd.xlane.f32.xlu0 %v572
        %v574 = vpop.xlane.xlu0 %573
        %v575 = vsel %vm567, %v574, %v557
        %v576 = vmul.f32 %v564, %v561
        %577 = vadd.xlane.f32.xlu0 %v576
        %v578 = vpop.xlane.xlu0 %577
        %v579 = vsel %vm567, %v578, %v561
        %s580 = scalar_lea.vmem [#allocation2], 23
        %v581 = vld [vmem:[%s580] ss:$0 sm:$0xff]
        %v582 = vxor.u32 %v581, 2147483648
        %v583 = vlaneseq
        %v584 = vand.u32 %v583, 127
        %vm585 = vcmp.eq.s32.totalorder %v584, 23
        %v586 = vmul.f32 %v582, %v571
        %587 = vadd.xlane.f32.xlu0 %v586
        %v588 = vpop.xlane.xlu0 %587
        %v589 = vsel %vm585, %v588, %v571
        %v590 = vmul.f32 %v582, %v575
        %591 = vadd.xlane.f32.xlu0 %v590
        %v592 = vpop.xlane.xlu0 %591
        %v593 = vsel %vm585, %v592, %v575
        %v594 = vmul.f32 %v582, %v579
        %595 = vadd.xlane.f32.xlu0 %v594
        %v596 = vpop.xlane.xlu0 %595
        %v597 = vsel %vm585, %v596, %v579
        %s598 = scalar_lea.vmem [#allocation2], 24
        %v599 = vld [vmem:[%s598] ss:$0 sm:$0xff]
        %v600 = vxor.u32 %v599, 2147483648
        %v601 = vlaneseq
        %v602 = vand.u32 %v601, 127
        %vm603 = vcmp.eq.s32.totalorder %v602, 24
        %v604 = vmul.f32 %v600, %v589
        %605 = vadd.xlane.f32.xlu0 %v604
        %v606 = vpop.xlane.xlu0 %605
        %v607 = vsel %vm603, %v606, %v589
        %v608 = vmul.f32 %v600, %v593
        %609 = vadd.xlane.f32.xlu0 %v608
        %v610 = vpop.xlane.xlu0 %609
        %v611 = vsel %vm603, %v610, %v593
        %v612 = vmul.f32 %v600, %v597
        %613 = vadd.xlane.f32.xlu0 %v612
        %v614 = vpop.xlane.xlu0 %613
        %v615 = vsel %vm603, %v614, %v597
        %v616 = vmul.f32 %v600, %v271
        %617 = vadd.xlane.f32.xlu0 %v616
        %v618 = vpop.xlane.xlu0 %617
        %v619 = vsel %vm603, %v618, %v271
        %s620 = scalar_lea.vmem [#allocation2], 25
        %v621 = vld [vmem:[%s620] ss:$0 sm:$0xff]
        %v622 = vxor.u32 %v621, 2147483648
        %v623 = vlaneseq
        %v624 = vand.u32 %v623, 127
        %vm625 = vcmp.eq.s32.totalorder %v624, 25
        %v626 = vmul.f32 %v622, %v607
        %627 = vadd.xlane.f32.xlu0 %v626
        %v628 = vpop.xlane.xlu0 %627
        %v629 = vsel %vm625, %v628, %v607
        %v630 = vmul.f32 %v622, %v611
        %631 = vadd.xlane.f32.xlu0 %v630
        %v632 = vpop.xlane.xlu0 %631
        %v633 = vsel %vm625, %v632, %v611
        %v634 = vmul.f32 %v622, %v615
        %635 = vadd.xlane.f32.xlu0 %v634
        %v636 = vpop.xlane.xlu0 %635
        %v637 = vsel %vm625, %v636, %v615
        %v638 = vmul.f32 %v622, %v619
        %639 = vadd.xlane.f32.xlu0 %v638
        %v640 = vpop.xlane.xlu0 %639
        %v641 = vsel %vm625, %v640, %v619
        %s642 = scalar_lea.vmem [#allocation2], 26
        %v643 = vld [vmem:[%s642] ss:$0 sm:$0xff]
        %v644 = vxor.u32 %v643, 2147483648
        %v645 = vlaneseq
        %v646 = vand.u32 %v645, 127
        %vm647 = vcmp.eq.s32.totalorder %v646, 26
        %v648 = vmul.f32 %v644, %v629
        %649 = vadd.xlane.f32.xlu0 %v648
        %v650 = vpop.xlane.xlu0 %649
        %v651 = vsel %vm647, %v650, %v629
        %v652 = vmul.f32 %v644, %v633
        %653 = vadd.xlane.f32.xlu0 %v652
        %v654 = vpop.xlane.xlu0 %653
        %v655 = vsel %vm647, %v654, %v633
        %v656 = vmul.f32 %v644, %v637
        %657 = vadd.xlane.f32.xlu0 %v656
        %v658 = vpop.xlane.xlu0 %657
        %v659 = vsel %vm647, %v658, %v637
        %v660 = vmul.f32 %v644, %v641
        %661 = vadd.xlane.f32.xlu0 %v660
        %v662 = vpop.xlane.xlu0 %661
        %v663 = vsel %vm647, %v662, %v641
        %s664 = scalar_lea.vmem [#allocation2], 27
        %v665 = vld [vmem:[%s664] ss:$0 sm:$0xff]
        %v666 = vxor.u32 %v665, 2147483648
        %v667 = vlaneseq
        %v668 = vand.u32 %v667, 127
        %vm669 = vcmp.eq.s32.totalorder %v668, 27
        %v670 = vmul.f32 %v666, %v651
        %671 = vadd.xlane.f32.xlu0 %v670
        %v672 = vpop.xlane.xlu0 %671
        %v673 = vsel %vm669, %v672, %v651
        %v674 = vmul.f32 %v666, %v655
        %675 = vadd.xlane.f32.xlu0 %v674
        %v676 = vpop.xlane.xlu0 %675
        %v677 = vsel %vm669, %v676, %v655
        %v678 = vmul.f32 %v666, %v659
        %679 = vadd.xlane.f32.xlu0 %v678
        %v680 = vpop.xlane.xlu0 %679
        %v681 = vsel %vm669, %v680, %v659
        %v682 = vmul.f32 %v666, %v663
        %683 = vadd.xlane.f32.xlu0 %v682
        %v684 = vpop.xlane.xlu0 %683
        %v685 = vsel %vm669, %v684, %v663
        %s686 = scalar_lea.vmem [#allocation2], 28
        %v687 = vld [vmem:[%s686] ss:$0 sm:$0xff]
        %v688 = vxor.u32 %v687, 2147483648
        %v689 = vlaneseq
        %v690 = vand.u32 %v689, 127
        %vm691 = vcmp.eq.s32.totalorder %v690, 28
        %v692 = vmul.f32 %v688, %v673
        %693 = vadd.xlane.f32.xlu0 %v692
        %v694 = vpop.xlane.xlu0 %693
        %v695 = vsel %vm691, %v694, %v673
        %v696 = vmul.f32 %v688, %v677
        %697 = vadd.xlane.f32.xlu0 %v696
        %v698 = vpop.xlane.xlu0 %697
        %v699 = vsel %vm691, %v698, %v677
        %v700 = vmul.f32 %v688, %v681
        %701 = vadd.xlane.f32.xlu0 %v700
        %v702 = vpop.xlane.xlu0 %701
        %v703 = vsel %vm691, %v702, %v681
        %v704 = vmul.f32 %v688, %v685
        %705 = vadd.xlane.f32.xlu0 %v704
        %v706 = vpop.xlane.xlu0 %705
        %v707 = vsel %vm691, %v706, %v685
        %s708 = scalar_lea.vmem [#allocation2], 29
        %v709 = vld [vmem:[%s708] ss:$0 sm:$0xff]
        %v710 = vxor.u32 %v709, 2147483648
        %v711 = vlaneseq
        %v712 = vand.u32 %v711, 127
        %vm713 = vcmp.eq.s32.totalorder %v712, 29
        %v714 = vmul.f32 %v710, %v695
        %715 = vadd.xlane.f32.xlu0 %v714
        %v716 = vpop.xlane.xlu0 %715
        %v717 = vsel %vm713, %v716, %v695
        %v718 = vmul.f32 %v710, %v699
        %719 = vadd.xlane.f32.xlu0 %v718
        %v720 = vpop.xlane.xlu0 %719
        %v721 = vsel %vm713, %v720, %v699
        %v722 = vmul.f32 %v710, %v703
        %723 = vadd.xlane.f32.xlu0 %v722
        %v724 = vpop.xlane.xlu0 %723
        %v725 = vsel %vm713, %v724, %v703
        %v726 = vmul.f32 %v710, %v707
        %727 = vadd.xlane.f32.xlu0 %v726
        %v728 = vpop.xlane.xlu0 %727
        %v729 = vsel %vm713, %v728, %v707
        %s730 = scalar_lea.vmem [#allocation2], 30
        %v731 = vld [vmem:[%s730] ss:$0 sm:$0xff]
        %v732 = vxor.u32 %v731, 2147483648
        %v733 = vlaneseq
        %v734 = vand.u32 %v733, 127
        %vm735 = vcmp.eq.s32.totalorder %v734, 30
        %v736 = vmul.f32 %v732, %v717
        %737 = vadd.xlane.f32.xlu0 %v736
        %v738 = vpop.xlane.xlu0 %737
        %v739 = vsel %vm735, %v738, %v717
        %v740 = vmul.f32 %v732, %v721
        %741 = vadd.xlane.f32.xlu0 %v740
        %v742 = vpop.xlane.xlu0 %741
        %v743 = vsel %vm735, %v742, %v721
        %v744 = vmul.f32 %v732, %v725
        %745 = vadd.xlane.f32.xlu0 %v744
        %v746 = vpop.xlane.xlu0 %745
        %v747 = vsel %vm735, %v746, %v725
        %v748 = vmul.f32 %v732, %v729
        %749 = vadd.xlane.f32.xlu0 %v748
        %v750 = vpop.xlane.xlu0 %749
        %v751 = vsel %vm735, %v750, %v729
        %s752 = scalar_lea.vmem [#allocation2], 31
        %v753 = vld [vmem:[%s752] ss:$0 sm:$0xff]
        %v754 = vxor.u32 %v753, 2147483648
        %v755 = vlaneseq
        %v756 = vand.u32 %v755, 127
        %vm757 = vcmp.eq.s32.totalorder %v756, 31
        %v758 = vmul.f32 %v754, %v739
        %759 = vadd.xlane.f32.xlu0 %v758
        %v760 = vpop.xlane.xlu0 %759
        %v761 = vsel %vm757, %v760, %v739
        %v762 = vmul.f32 %v754, %v743
        %763 = vadd.xlane.f32.xlu0 %v762
        %v764 = vpop.xlane.xlu0 %763
        %v765 = vsel %vm757, %v764, %v743
        %v766 = vmul.f32 %v754, %v747
        %767 = vadd.xlane.f32.xlu0 %v766
        %v768 = vpop.xlane.xlu0 %767
        %v769 = vsel %vm757, %v768, %v747
        %v770 = vmul.f32 %v754, %v751
        %771 = vadd.xlane.f32.xlu0 %v770
        %v772 = vpop.xlane.xlu0 %771
        %v773 = vsel %vm757, %v772, %v751
        %v774 = vrcp.pop %v133
        %v775 = vmul.f32 %v133, %v774
        %v776 = vsub.f32 1.0, %v775
        %v777 = vmul.f32 %v774, %v776
        %v778 = vadd.f32 %v774, %v777
        %vm779 = vweird.f32 %v133
        %vm780 = vweird.f32 %v774
        %vm781 = vmor %vm779, %vm780
        %v782 = vsel %vm781, %v774, %v778
        %v783 = vand.u32 2147483647, %v133
        %vm784 = vcmp.eq.f32.partialorder %v783, 8.507059e+37
        %v785 = vand.u32 %v133, 2147483648
        %v786 = vor.u32 1.1754944e-38, %v785
        %v787 = vsel %vm784, %v786, %v782
        %v788 = vmul.f32 %v761, %v787
        %vm789 = vweird.f32 %v133
        %v790 = vsel %vm789, %v761, %v788
        %791 = vst [vmem:[%s122] sm:$0xff] %v790
        %v792 = vrcp.pop %v162
        %v793 = vmul.f32 %v162, %v792
        %v794 = vsub.f32 1.0, %v793
        %v795 = vmul.f32 %v792, %v794
        %v796 = vadd.f32 %v792, %v795
        %vm797 = vweird.f32 %v162
        %vm798 = vweird.f32 %v792
        %vm799 = vmor %vm797, %vm798
        %v800 = vsel %vm799, %v792, %v796
        %v801 = vand.u32 2147483647, %v162
        %vm802 = vcmp.eq.f32.partialorder %v801, 8.507059e+37
        %v803 = vand.u32 %v162, 2147483648
        %v804 = vor.u32 1.1754944e-38, %v803
        %v805 = vsel %vm802, %v804, %v800
        %v806 = vmul.f32 %v765, %v805
        %vm807 = vweird.f32 %v162
        %v808 = vsel %vm807, %v765, %v806
        %s809 = scalar_lea.vmem %s122, 8 [#allocation1]
        %810 = vst [vmem:[%s809] sm:$0xff] %v808
        %v811 = vrcp.pop %v191
        %v812 = vmul.f32 %v191, %v811
        %v813 = vsub.f32 1.0, %v812
        %v814 = vmul.f32 %v811, %v813
        %v815 = vadd.f32 %v811, %v814
        %vm816 = vweird.f32 %v191
        %vm817 = vweird.f32 %v811
        %vm818 = vmor %vm816, %vm817
        %v819 = vsel %vm818, %v811, %v815
        %v820 = vand.u32 2147483647, %v191
        %vm821 = vcmp.eq.f32.partialorder %v820, 8.507059e+37
        %v822 = vand.u32 %v191, 2147483648
        %v823 = vor.u32 1.1754944e-38, %v822
        %v824 = vsel %vm821, %v823, %v819
        %v825 = vmul.f32 %v769, %v824
        %vm826 = vweird.f32 %v191
        %v827 = vsel %vm826, %v769, %v825
        %s828 = scalar_lea.vmem %s122, 16 [#allocation1]
        %829 = vst [vmem:[%s828] sm:$0xff] %v827
        %v830 = vrcp.pop %v220
        %v831 = vmul.f32 %v220, %v830
        %v832 = vsub.f32 1.0, %v831
        %v833 = vmul.f32 %v830, %v832
        %v834 = vadd.f32 %v830, %v833
        %vm835 = vweird.f32 %v220
        %vm836 = vweird.f32 %v830
        %vm837 = vmor %vm835, %vm836
        %v838 = vsel %vm837, %v830, %v834
        %v839 = vand.u32 2147483647, %v220
        %vm840 = vcmp.eq.f32.partialorder %v839, 8.507059e+37
        %v841 = vand.u32 %v220, 2147483648
        %v842 = vor.u32 1.1754944e-38, %v841
        %v843 = vsel %vm840, %v842, %v838
        %v844 = vmul.f32 %v773, %v843
        %vm845 = vweird.f32 %v220
        %v846 = vsel %vm845, %v773, %v844
        %s847 = scalar_lea.vmem %s122, 24 [#allocation1]
        %848 = vst [vmem:[%s847] sm:$0xff] %v846
        %s849 = sand.u32 %s8, 1
        %s850 = sand.u32 %s8, 1
        %s851 = smul.addr %s850, 32
        %s852 = scalar_lea.vmem [#allocation1], %s851
        %s853 = sadd.s32 %s17, %s16
        %s854 = smul.addr %s15, 4
        %s855 = sadd.s32 %s853, %s854
        %s856 = smul.addr %s14, 4
        %s857 = sadd.s32 %s855, %s856
        %s858 = smul.addr %s857, 8
        %s859 = scalar_lea.vmem %s1, %s858
        // Predicated region
        $region55: #{custom-call.14} parent=53 // pred_check
          _
        $region56: #{custom-call.14} parent=53 // pred_check_branch
          %861 = sbr.rel (0) target = $region58
        $region57: #{custom-call.14} parent=53 // pred_region
          // Predicated region
          $region59: #{custom-call.14} parent=57 // pred_check
            _
          $region60: #{custom-call.14} parent=57 // pred_check_branch
            %863 = sbr.rel (0) target = $region62
          $region61: #{custom-call.14} parent=57 // pred_region
            // Predicated region
            $region74: #{custom-call.14} parent=61 // pred_check
              _
            $region75: #{custom-call.14} parent=61 // pred_check_branch
              %885 = sbr.rel (0) target = $region77
            $region76: #{custom-call.14} parent=61 // pred_region
              loop: start=0, step=1, limit=1
              $region78: #{custom-call.14} parent=76 // loop_pre_header
                _
              $region79: #{custom-call.14} parent=76 // loop_header
                %s887 = sphi 0, %s891
                %p888 = scmp.ge.s32.totalorder %s887, 1
                %s892 = sphi %s852, %s852
                %s893 = sphi %s859, %s859
              $region80: #{custom-call.14} parent=76 // loop_header_branch
                %890 = sbr.rel (%p888) target = $region84
              $region81: #{custom-call.14} parent=76 // loop_body
                %v894 = vld [vmem:[%s892] sm:$0xff]
                %895 = vst [vmem:[%s893] sm:$0xff] %v894
                %v896 = vld [vmem:[%s892 + $0x8] sm:$0xff]
                %897 = vst [vmem:[%s893 + $0x8] sm:$0xff] %v896
                %v898 = vld [vmem:[%s892 + $0x10] sm:$0xff]
                %899 = vst [vmem:[%s893 + $0x10] sm:$0xff] %v898
                %v900 = vld [vmem:[%s892 + $0x18] sm:$0xff]
                %901 = vst [vmem:[%s893 + $0x18] sm:$0xff] %v900
              $region82: #{custom-call.14} parent=76 // loop_footer
                %s891 = sadd.s32 1, %s887
              $region83: #{custom-call.14} parent=76 // loop_footer_branch
                %886 = sbr.rel target = $region79
              $region84: #{custom-call.14} parent=76 // loop_exit
                _
            $region77: #{custom-call.14} parent=61 // pred_fallthru
              _
            // Predicated region
            $region85: #{custom-call.14} parent=61 // pred_check
              _
            $region86: #{custom-call.14} parent=61 // pred_check_branch
              %903 = sbr.rel target = $region88
            $region87: #{custom-call.14} parent=61 // pred_region
              _
            $region88: #{custom-call.14} parent=61 // pred_fallthru
              _
          $region62: #{custom-call.14} parent=57 // pred_fallthru
            _
          // Predicated region
          $region63: #{custom-call.14} parent=57 // pred_check
            _
          $region64: #{custom-call.14} parent=57 // pred_check_branch
            %865 = sbr.rel target = $region66
          $region65: #{custom-call.14} parent=57 // pred_region
            %s867 = ssub.s32 256, 1
            loop: start=0, step=1, limit=1
            $region67: #{custom-call.14} parent=65 // loop_pre_header
              _
            $region68: #{custom-call.14} parent=65 // loop_header
              %s869 = sphi 0, %s873
              %p870 = scmp.ge.s32.totalorder %s869, 1
              %s874 = sphi %s852, %s852
              %s875 = sphi %s859, %s859
            $region69: #{custom-call.14} parent=65 // loop_header_branch
              %872 = sbr.rel (%p870) target = $region73
            $region70: #{custom-call.14} parent=65 // loop_body
              %v876 = vld [vmem:[%s874] sm:%s867]
              %877 = vst [vmem:[%s875] sm:%s867] %v876
              %v878 = vld [vmem:[%s874 + $0x8] sm:%s867]
              %879 = vst [vmem:[%s875 + $0x8] sm:%s867] %v878
              %v880 = vld [vmem:[%s874 + $0x10] sm:%s867]
              %881 = vst [vmem:[%s875 + $0x10] sm:%s867] %v880
              %v882 = vld [vmem:[%s874 + $0x18] sm:%s867]
              %883 = vst [vmem:[%s875 + $0x18] sm:%s867] %v882
            $region71: #{custom-call.14} parent=65 // loop_footer
              %s873 = sadd.s32 1, %s869
            $region72: #{custom-call.14} parent=65 // loop_footer_branch
              %868 = sbr.rel target = $region68
            $region73: #{custom-call.14} parent=65 // loop_exit
              _
          $region66: #{custom-call.14} parent=57 // pred_fallthru
            _
        $region58: #{custom-call.14} parent=53 // pred_fallthru
          _
        %904 = vnop
      $region54: #{custom-call.14} parent=5 // pred_fallthru
        _
      %p905 = scmp.le.s32.totalorder 2, %s3
      // Predicated region
      $region89: #{custom-call.14} parent=5 // pred_check
        %p906 = pneg %p905
      $region90: #{custom-call.14} parent=5 // pred_check_branch
        %908 = sbr.rel (%p906) target = $region92
      $region91: #{custom-call.14} parent=5 // pred_region
        %s909 = ssub.s32 %s3, 2
        %s910 = sand.u32 %s9, 1
        %s911 = sand.u32 %s9, 1
        %s912 = smul.addr %s911, 32
        %s913 = scalar_lea.vmem [#allocation1], %s912
      $region92: #{custom-call.14} parent=5 // pred_fallthru
        _
    $region6: #{custom-call.14} parent=1 // loop_footer
      %s7 = sadd.s32 1, %s3
    $region7: #{custom-call.14} parent=1 // loop_footer_branch
      %2 = sbr.rel target = $region3
    $region8: #{custom-call.14} parent=1 // loop_exit
      _

// kernel: sskernel_forward.1
$region0: #{sskernel_forward.1}
  #allocation0 [shape = 'u32[]', space=smem, size = 0x4, offset = 0x4, fixed_abs, tag = 'smem constant byte address 0x4 - core index']
  #allocation1 [shape = 'u32[72,128]{1,0:T(1,128)}', space=vmem, size = 0x9000, scoped, tag = 'internal scratch']
  #allocation2 [shape = 'f32[128,128]{1,0:T(8,128)}', space=vmem, size = 0x10000, scoped, tag = 'scratch operand']
  #allocation3 [shape = 'f32[128,128]{1,0:T(8,128)}', space=vmem, size = 0x10000, scoped, tag = 'scratch operand']
  %s0 = inlined_call_operand.vmem [shape: f32[1,128,128], index: 0, kind: input, shape index: {}]
  %s1 = inlined_call_operand.vmem [shape: f32[1,128,32], index: 1, kind: input, shape index: {}]
  %s2 = inlined_call_operand.vmem [shape: f32[1,128,1], index: 2, kind: input, shape index: {}]
  %s3 = inlined_call_operand.vmem [shape: f32[1,8,128], index: 3, kind: input, shape index: {}]
  %s4 = inlined_call_operand.hbm [shape: f32[1,8,128], index: 4, kind: output, shape index: {}]
  %s5 = sld [smem:[#allocation0]]
  $region26: #{sskernel_forward.1} parent=0
    _
  %s7 = ssub.s32 1, %s5
  %s8 = scalar_select 0, %s7, %s5
  $region1: #{sskernel_forward.1} parent=0
    #allocation4 [shape = 'u8[4096]{0}', space=vmem, size = 0x1000, scoped, tag = 'output window, operand 0, single buffered']
    #allocation5 [shape = 's32[1]{0}', space=sflag, size = 0x4, scoped, tag = 'scoped memory for sskernel_forward.1']
    %9 = vsyncpa [#allocation5], 0
    // Predicated region
    $region2: #{sskernel_forward.1} parent=1 // pred_check
      _
    $region3: #{sskernel_forward.1} parent=1 // pred_check_branch
      %11 = sbr.rel (0) target = $region5
    $region4: #{sskernel_forward.1} parent=1 // pred_region
      _
    $region5: #{sskernel_forward.1} parent=1 // pred_fallthru
      _
    // Predicated region
    $region6: #{sskernel_forward.1} parent=1 // pred_check
      _
    $region7: #{sskernel_forward.1} parent=1 // pred_check_branch
      %13 = sbr.rel (0) target = $region9
    $region8: #{sskernel_forward.1} parent=1 // pred_region
      _
    $region9: #{sskernel_forward.1} parent=1 // pred_fallthru
      _
    // Predicated region
    $region10: #{sskernel_forward.1} parent=1 // pred_check
      _
    $region11: #{sskernel_forward.1} parent=1 // pred_check_branch
      %15 = sbr.rel (0) target = $region13
    $region12: #{sskernel_forward.1} parent=1 // pred_region
      _
    $region13: #{sskernel_forward.1} parent=1 // pred_fallthru
      _
    // Predicated region
    $region14: #{sskernel_forward.1} parent=1 // pred_check
      _
    $region15: #{sskernel_forward.1} parent=1 // pred_check_branch
      %17 = sbr.rel (0) target = $region17
    $region16: #{sskernel_forward.1} parent=1 // pred_region
      _
    $region17: #{sskernel_forward.1} parent=1 // pred_fallthru
      _
    %v18 = vld [vmem:[%s0] sm:$0xff]
    %v19 = vld [vmem:[%s0 + $0x8] sm:$0xff]
    %v20 = vld [vmem:[%s0 + $0x10] sm:$0xff]
    %v21 = vld [vmem:[%s0 + $0x18] sm:$0xff]
    %v22 = vld [vmem:[%s0 + $0x20] sm:$0xff]
    %v23 = vld [vmem:[%s0 + $0x28] sm:$0xff]
    %v24 = vld [vmem:[%s0 + $0x30] sm:$0xff]
    %v25 = vld [vmem:[%s0 + $0x38] sm:$0xff]
    %v26 = vld [vmem:[%s0 + $0x40] sm:$0xff]
    %v27 = vld [vmem:[%s0 + $0x48] sm:$0xff]
    %v28 = vld [vmem:[%s0 + $0x50] sm:$0xff]
    %v29 = vld [vmem:[%s0 + $0x58] sm:$0xff]
    %v30 = vld [vmem:[%s0 + $0x60] sm:$0xff]
    %v31 = vld [vmem:[%s0 + $0x68] sm:$0xff]
    %v32 = vld [vmem:[%s0 + $0x70] sm:$0xff]
    %v33 = vld [vmem:[%s0 + $0x78] sm:$0xff]
    %34 = vst [vmem:[#allocation2] sm:$0xff] %v18
    %35 = vst [vmem:[#allocation2 + $0x8] sm:$0xff] %v19
    %36 = vst [vmem:[#allocation2 + $0x10] sm:$0xff] %v20
    %37 = vst [vmem:[#allocation2 + $0x18] sm:$0xff] %v21
    %38 = vst [vmem:[#allocation2 + $0x20] sm:$0xff] %v22
    %39 = vst [vmem:[#allocation2 + $0x28] sm:$0xff] %v23
    %40 = vst [vmem:[#allocation2 + $0x30] sm:$0xff] %v24
    %41 = vst [vmem:[#allocation2 + $0x38] sm:$0xff] %v25
    %42 = vst [vmem:[#allocation2 + $0x40] sm:$0xff] %v26
    %43 = vst [vmem:[#allocation2 + $0x48] sm:$0xff] %v27
    %44 = vst [vmem:[#allocation2 + $0x50] sm:$0xff] %v28
    %45 = vst [vmem:[#allocation2 + $0x58] sm:$0xff] %v29
    %46 = vst [vmem:[#allocation2 + $0x60] sm:$0xff] %v30
    %47 = vst [vmem:[#allocation2 + $0x68] sm:$0xff] %v31
    %48 = vst [vmem:[#allocation2 + $0x70] sm:$0xff] %v32
    %49 = vst [vmem:[#allocation2 + $0x78] sm:$0xff] %v33
    %v50 = vld [vmem:[%s1] sm:$0xff]
    %v51 = vld [vmem:[%s1 + $0x8] sm:$0xff]
    %v52 = vld [vmem:[%s1 + $0x10] sm:$0xff]
    %v53 = vld [vmem:[%s1 + $0x18] sm:$0xff]
    %v54 = vld [vmem:[%s1 + $0x20] sm:$0xff]
    %v55 = vld [vmem:[%s1 + $0x28] sm:$0xff]
    %v56 = vld [vmem:[%s1 + $0x30] sm:$0xff]
    %v57 = vld [vmem:[%s1 + $0x38] sm:$0xff]
    %v58 = vld [vmem:[%s1 + $0x40] sm:$0xff]
    %v59 = vld [vmem:[%s1 + $0x48] sm:$0xff]
    %v60 = vld [vmem:[%s1 + $0x50] sm:$0xff]
    %v61 = vld [vmem:[%s1 + $0x58] sm:$0xff]
    %v62 = vld [vmem:[%s1 + $0x60] sm:$0xff]
    %v63 = vld [vmem:[%s1 + $0x68] sm:$0xff]
    %v64 = vld [vmem:[%s1 + $0x70] sm:$0xff]
    %v65 = vld [vmem:[%s1 + $0x78] sm:$0xff]
    %v66 = vld [vmem:[%s2] sm:$0xff]
    %v67 = vld [vmem:[%s2 + $0x8] sm:$0xff]
    %v68 = vld [vmem:[%s2 + $0x10] sm:$0xff]
    %v69 = vld [vmem:[%s2 + $0x18] sm:$0xff]
    %v70 = vld [vmem:[%s2 + $0x20] sm:$0xff]
    %v71 = vld [vmem:[%s2 + $0x28] sm:$0xff]
    %v72 = vld [vmem:[%s2 + $0x30] sm:$0xff]
    %v73 = vld [vmem:[%s2 + $0x38] sm:$0xff]
    %v74 = vld [vmem:[%s2 + $0x40] sm:$0xff]
    %v75 = vld [vmem:[%s2 + $0x48] sm:$0xff]
    %v76 = vld [vmem:[%s2 + $0x50] sm:$0xff]
    %v77 = vld [vmem:[%s2 + $0x58] sm:$0xff]
    %v78 = vld [vmem:[%s2 + $0x60] sm:$0xff]
    %v79 = vld [vmem:[%s2 + $0x68] sm:$0xff]
    %v80 = vld [vmem:[%s2 + $0x70] sm:$0xff]
    %v81 = vld [vmem:[%s2 + $0x78] sm:$0xff]
    %vm82 = vcmask 7168
    %83 = vst.msk [vmem:[#allocation3] sm:$0xff] %vm82, %v66
    %84 = vst.msk [vmem:[#allocation3 + $0x8] sm:$0xff] %vm82, %v67
    %85 = vst.msk [vmem:[#allocation3 + $0x10] sm:$0xff] %vm82, %v68
    %86 = vst.msk [vmem:[#allocation3 + $0x18] sm:$0xff] %vm82, %v69
    %87 = vst.msk [vmem:[#allocation3 + $0x20] sm:$0xff] %vm82, %v70
    %88 = vst.msk [vmem:[#allocation3 + $0x28] sm:$0xff] %vm82, %v71
    %89 = vst.msk [vmem:[#allocation3 + $0x30] sm:$0xff] %vm82, %v72
    %90 = vst.msk [vmem:[#allocation3 + $0x38] sm:$0xff] %vm82, %v73
    %91 = vst.msk [vmem:[#allocation3 + $0x40] sm:$0xff] %vm82, %v74
    %92 = vst.msk [vmem:[#allocation3 + $0x48] sm:$0xff] %vm82, %v75
    %93 = vst.msk [vmem:[#allocation3 + $0x50] sm:$0xff] %vm82, %v76
    %94 = vst.msk [vmem:[#allocation3 + $0x58] sm:$0xff] %vm82, %v77
    %95 = vst.msk [vmem:[#allocation3 + $0x60] sm:$0xff] %vm82, %v78
    %96 = vst.msk [vmem:[#allocation3 + $0x68] sm:$0xff] %vm82, %v79
    %97 = vst.msk [vmem:[#allocation3 + $0x70] sm:$0xff] %vm82, %v80
    %98 = vst.msk [vmem:[#allocation3 + $0x78] sm:$0xff] %vm82, %v81
    %v99 = vld [vmem:[#allocation3] sm:$0xff]
    %v100 = vld [vmem:[#allocation3 + $0x8] sm:$0xff]
    %v101 = vld [vmem:[#allocation3 + $0x10] sm:$0xff]
    %v102 = vld [vmem:[#allocation3 + $0x18] sm:$0xff]
    %v103 = vld [vmem:[#allocation3 + $0x20] sm:$0xff]
    %v104 = vld [vmem:[#allocation3 + $0x28] sm:$0xff]
    %v105 = vld [vmem:[#allocation3 + $0x30] sm:$0xff]
    %v106 = vld [vmem:[#allocation3 + $0x38] sm:$0xff]
    %v107 = vld [vmem:[#allocation3 + $0x40] sm:$0xff]
    %v108 = vld [vmem:[#allocation3 + $0x48] sm:$0xff]
    %v109 = vld [vmem:[#allocation3 + $0x50] sm:$0xff]
    %v110 = vld [vmem:[#allocation3 + $0x58] sm:$0xff]
    %v111 = vld [vmem:[#allocation3 + $0x60] sm:$0xff]
    %v112 = vld [vmem:[#allocation3 + $0x68] sm:$0xff]
    %v113 = vld [vmem:[#allocation3 + $0x70] sm:$0xff]
    %v114 = vld [vmem:[#allocation3 + $0x78] sm:$0xff]
    %131 = vrot.lane.b32.xlu0 %v50, 1
    %v132 = vpop.permute.xlu0 %131
    %133 = vrot.lane.b32.xlu0 %v51, 1
    %v134 = vpop.permute.xlu0 %133
    %135 = vrot.lane.b32.xlu0 %v52, 1
    %v136 = vpop.permute.xlu0 %135
    %137 = vrot.lane.b32.xlu0 %v53, 1
    %v138 = vpop.permute.xlu0 %137
    %139 = vrot.lane.b32.xlu0 %v54, 1
    %v140 = vpop.permute.xlu0 %139
    %141 = vrot.lane.b32.xlu0 %v55, 1
    %v142 = vpop.permute.xlu0 %141
    %143 = vrot.lane.b32.xlu0 %v56, 1
    %v144 = vpop.permute.xlu0 %143
    %145 = vrot.lane.b32.xlu0 %v57, 1
    %v146 = vpop.permute.xlu0 %145
    %147 = vrot.lane.b32.xlu0 %v58, 1
    %v148 = vpop.permute.xlu0 %147
    %149 = vrot.lane.b32.xlu0 %v59, 1
    %v150 = vpop.permute.xlu0 %149
    %151 = vrot.lane.b32.xlu0 %v60, 1
    %v152 = vpop.permute.xlu0 %151
    %153 = vrot.lane.b32.xlu0 %v61, 1
    %v154 = vpop.permute.xlu0 %153
    %155 = vrot.lane.b32.xlu0 %v62, 1
    %v156 = vpop.permute.xlu0 %155
    %157 = vrot.lane.b32.xlu0 %v63, 1
    %v158 = vpop.permute.xlu0 %157
    %159 = vrot.lane.b32.xlu0 %v64, 1
    %v160 = vpop.permute.xlu0 %159
    %161 = vrot.lane.b32.xlu0 %v65, 1
    %v162 = vpop.permute.xlu0 %161
    %v179 = vsel %vm82, %v99, %v132
    %v180 = vsel %vm82, %v100, %v134
    %v181 = vsel %vm82, %v101, %v136
    %v182 = vsel %vm82, %v102, %v138
    %v183 = vsel %vm82, %v103, %v140
    %v184 = vsel %vm82, %v104, %v142
    %v185 = vsel %vm82, %v105, %v144
    %v186 = vsel %vm82, %v106, %v146
    %v187 = vsel %vm82, %v107, %v148
    %v188 = vsel %vm82, %v108, %v150
    %v189 = vsel %vm82, %v109, %v152
    %v190 = vsel %vm82, %v110, %v154
    %v191 = vsel %vm82, %v111, %v156
    %v192 = vsel %vm82, %v112, %v158
    %v193 = vsel %vm82, %v113, %v160
    %v194 = vsel %vm82, %v114, %v162
    %v195 = vld [vmem:[#allocation2] sm:$0xff]
    %v196 = vld [vmem:[#allocation2 + $0x8] sm:$0xff]
    %v197 = vld [vmem:[#allocation2 + $0x10] sm:$0xff]
    %v198 = vld [vmem:[#allocation2 + $0x18] sm:$0xff]
    %v199 = vld [vmem:[#allocation2 + $0x20] sm:$0xff]
    %v200 = vld [vmem:[#allocation2 + $0x28] sm:$0xff]
    %v201 = vld [vmem:[#allocation2 + $0x30] sm:$0xff]
    %v202 = vld [vmem:[#allocation2 + $0x38] sm:$0xff]
    %v203 = vld [vmem:[#allocation2 + $0x40] sm:$0xff]
    %v204 = vld [vmem:[#allocation2 + $0x48] sm:$0xff]
    %v205 = vld [vmem:[#allocation2 + $0x50] sm:$0xff]
    %v206 = vld [vmem:[#allocation2 + $0x58] sm:$0xff]
    %v207 = vld [vmem:[#allocation2 + $0x60] sm:$0xff]
    %v208 = vld [vmem:[#allocation2 + $0x68] sm:$0xff]
    %v209 = vld [vmem:[#allocation2 + $0x70] sm:$0xff]
    %v210 = vld [vmem:[#allocation2 + $0x78] sm:$0xff]
    %211 = vmatpush.msra.mxu0 %v194
    %212 = vmatpush.msra.mxu0 %v193
    %213 = vmatpush.msra.mxu0 %v192
    %214 = vmatpush.msra.mxu0 %v191
    %215 = vmatpush.msra.mxu0 %v190
    %216 = vmatpush.msra.mxu0 %v189
    %217 = vmatpush.msra.mxu0 %v188
    %218 = vmatpush.msra.mxu0 %v187
    %219 = vmatpush.msra.mxu0 %v186
    %220 = vmatpush.msra.mxu0 %v185
    %221 = vmatpush.msra.mxu0 %v184
    %222 = vmatpush.msra.mxu0 %v183
    %223 = vmatpush.msra.mxu0 %v182
    %224 = vmatpush.msra.mxu0 %v181
    %225 = vmatpush.msra.mxu0 %v180
    %226 = vmatpush.msra.mxu0 %v179
    %227 = vmatmul.f32.gmra.mxu0 %v195
    %v228 = vpop.f32.mrf.mxu0
    %v229 = vadd.f32 0.0, %v228
    %230 = vmatmul.f32.gmra.mxu0 %v196
    %v231 = vpop.f32.mrf.mxu0
    %v232 = vadd.f32 0.0, %v231
    %233 = vmatmul.f32.gmra.mxu0 %v197
    %v234 = vpop.f32.mrf.mxu0
    %v235 = vadd.f32 0.0, %v234
    %236 = vmatmul.f32.gmra.mxu0 %v198
    %v237 = vpop.f32.mrf.mxu0
    %v238 = vadd.f32 0.0, %v237
    %239 = vmatmul.f32.gmra.mxu0 %v199
    %v240 = vpop.f32.mrf.mxu0
    %v241 = vadd.f32 0.0, %v240
    %242 = vmatmul.f32.gmra.mxu0 %v200
    %v243 = vpop.f32.mrf.mxu0
    %v244 = vadd.f32 0.0, %v243
    %245 = vmatmul.f32.gmra.mxu0 %v201
    %v246 = vpop.f32.mrf.mxu0
    %v247 = vadd.f32 0.0, %v246
    %248 = vmatmul.f32.gmra.mxu0 %v202
    %v249 = vpop.f32.mrf.mxu0
    %v250 = vadd.f32 0.0, %v249
    %251 = vmatmul.f32.gmra.mxu0 %v203
    %v252 = vpop.f32.mrf.mxu0
    %v253 = vadd.f32 0.0, %v252
    %254 = vmatmul.f32.gmra.mxu0 %v204
    %v255 = vpop.f32.mrf.mxu0
    %v256 = vadd.f32 0.0, %v255
    %257 = vmatmul.f32.gmra.mxu0 %v205
    %v258 = vpop.f32.mrf.mxu0
    %v259 = vadd.f32 0.0, %v258
    %260 = vmatmul.f32.gmra.mxu0 %v206
    %v261 = vpop.f32.mrf.mxu0
    %v262 = vadd.f32 0.0, %v261
    %263 = vmatmul.f32.gmra.mxu0 %v207
    %v264 = vpop.f32.mrf.mxu0
    %v265 = vadd.f32 0.0, %v264
    %266 = vmatmul.f32.gmra.mxu0 %v208
    %v267 = vpop.f32.mrf.mxu0
    %v268 = vadd.f32 0.0, %v267
    %269 = vmatmul.f32.gmra.mxu0 %v209
    %v270 = vpop.f32.mrf.mxu0
    %v271 = vadd.f32 0.0, %v270
    %272 = vmatmul.f32.gmra.mxu0 %v210
    %v273 = vpop.f32.mrf.mxu0
    %v274 = vadd.f32 0.0, %v273
    %275 = vdwg.mxu0
    %292 = vrot.lane.b32.xlu0 %v229, 1
    %v293 = vpop.permute.xlu0 %292
    %294 = vrot.lane.b32.xlu0 %v232, 1
    %v295 = vpop.permute.xlu0 %294
    %296 = vrot.lane.b32.xlu0 %v235, 1
    %v297 = vpop.permute.xlu0 %296
    %298 = vrot.lane.b32.xlu0 %v238, 1
    %v299 = vpop.permute.xlu0 %298
    %300 = vrot.lane.b32.xlu0 %v241, 1
    %v301 = vpop.permute.xlu0 %300
    %302 = vrot.lane.b32.xlu0 %v244, 1
    %v303 = vpop.permute.xlu0 %302
    %304 = vrot.lane.b32.xlu0 %v247, 1
    %v305 = vpop.permute.xlu0 %304
    %306 = vrot.lane.b32.xlu0 %v250, 1
    %v307 = vpop.permute.xlu0 %306
    %308 = vrot.lane.b32.xlu0 %v253, 1
    %v309 = vpop.permute.xlu0 %308
    %310 = vrot.lane.b32.xlu0 %v256, 1
    %v311 = vpop.permute.xlu0 %310
    %312 = vrot.lane.b32.xlu0 %v259, 1
    %v313 = vpop.permute.xlu0 %312
    %314 = vrot.lane.b32.xlu0 %v262, 1
    %v315 = vpop.permute.xlu0 %314
    %316 = vrot.lane.b32.xlu0 %v265, 1
    %v317 = vpop.permute.xlu0 %316
    %318 = vrot.lane.b32.xlu0 %v268, 1
    %v319 = vpop.permute.xlu0 %318
    %320 = vrot.lane.b32.xlu0 %v271, 1
    %v321 = vpop.permute.xlu0 %320
    %322 = vrot.lane.b32.xlu0 %v274, 1
    %v323 = vpop.permute.xlu0 %322
    %vm340 = vcmask 15368
    %341 = vst.msk [vmem:[#allocation3] sm:$0xff] %vm340, %v293
    %342 = vst.msk [vmem:[#allocation3 + $0x8] sm:$0xff] %vm340, %v295
    %343 = vst.msk [vmem:[#allocation3 + $0x10] sm:$0xff] %vm340, %v297
    %344 = vst.msk [vmem:[#allocation3 + $0x18] sm:$0xff] %vm340, %v299
    %345 = vst.msk [vmem:[#allocation3 + $0x20] sm:$0xff] %vm340, %v301
    %346 = vst.msk [vmem:[#allocation3 + $0x28] sm:$0xff] %vm340, %v303
    %347 = vst.msk [vmem:[#allocation3 + $0x30] sm:$0xff] %vm340, %v305
    %348 = vst.msk [vmem:[#allocation3 + $0x38] sm:$0xff] %vm340, %v307
    %349 = vst.msk [vmem:[#allocation3 + $0x40] sm:$0xff] %vm340, %v309
    %350 = vst.msk [vmem:[#allocation3 + $0x48] sm:$0xff] %vm340, %v311
    %351 = vst.msk [vmem:[#allocation3 + $0x50] sm:$0xff] %vm340, %v313
    %352 = vst.msk [vmem:[#allocation3 + $0x58] sm:$0xff] %vm340, %v315
    %353 = vst.msk [vmem:[#allocation3 + $0x60] sm:$0xff] %vm340, %v317
    %354 = vst.msk [vmem:[#allocation3 + $0x68] sm:$0xff] %vm340, %v319
    %355 = vst.msk [vmem:[#allocation3 + $0x70] sm:$0xff] %vm340, %v321
    %356 = vst.msk [vmem:[#allocation3 + $0x78] sm:$0xff] %vm340, %v323
    %357 = vrot.lane.b32.xlu0 %v229, 127
    %v358 = vpop.permute.xlu0 %357
    %359 = vrot.lane.b32.xlu0 %v232, 127
    %v360 = vpop.permute.xlu0 %359
    %361 = vrot.lane.b32.xlu0 %v235, 127
    %v362 = vpop.permute.xlu0 %361
    %363 = vrot.lane.b32.xlu0 %v238, 127
    %v364 = vpop.permute.xlu0 %363
    %vm369 = vcmask 261120
    %370 = vst.msk [vmem:[#allocation2] sm:$0xff] %vm369, %v358
    %371 = vst.msk [vmem:[#allocation2 + $0x8] sm:$0xff] %vm369, %v360
    %372 = vst.msk [vmem:[#allocation2 + $0x10] sm:$0xff] %vm369, %v362
    %373 = vst.msk [vmem:[#allocation2 + $0x18] sm:$0xff] %vm369, %v364
    %374 = vrot.lane.b32.xlu0 %v241, 31
    %v375 = vpop.permute.xlu0 %374
    %376 = vrot.lane.b32.xlu0 %v244, 31
    %v377 = vpop.permute.xlu0 %376
    %378 = vrot.lane.b32.xlu0 %v247, 31
    %v379 = vpop.permute.xlu0 %378
    %380 = vrot.lane.b32.xlu0 %v250, 31
    %v381 = vpop.permute.xlu0 %380
    %vm386 = vcmask 523520
    %387 = vst.msk [vmem:[#allocation2 + $0x20] sm:$0xff] %vm386, %v375
    %388 = vst.msk [vmem:[#allocation2 + $0x28] sm:$0xff] %vm386, %v377
    %389 = vst.msk [vmem:[#allocation2 + $0x30] sm:$0xff] %vm386, %v379
    %390 = vst.msk [vmem:[#allocation2 + $0x38] sm:$0xff] %vm386, %v381
    %391 = vrot.lane.b32.xlu0 %v253, 63
    %v392 = vpop.permute.xlu0 %391
    %393 = vrot.lane.b32.xlu0 %v256, 63
    %v394 = vpop.permute.xlu0 %393
    %395 = vrot.lane.b32.xlu0 %v259, 63
    %v396 = vpop.permute.xlu0 %395
    %397 = vrot.lane.b32.xlu0 %v262, 63
    %v398 = vpop.permute.xlu0 %397
    %vm403 = vcmask 785920
    %404 = vst.msk [vmem:[#allocation2 + $0x40] sm:$0xff] %vm403, %v392
    %405 = vst.msk [vmem:[#allocation2 + $0x48] sm:$0xff] %vm403, %v394
    %406 = vst.msk [vmem:[#allocation2 + $0x50] sm:$0xff] %vm403, %v396
    %407 = vst.msk [vmem:[#allocation2 + $0x58] sm:$0xff] %vm403, %v398
    %408 = vrot.lane.b32.xlu0 %v265, 95
    %v409 = vpop.permute.xlu0 %408
    %410 = vrot.lane.b32.xlu0 %v268, 95
    %v411 = vpop.permute.xlu0 %410
    %412 = vrot.lane.b32.xlu0 %v271, 95
    %v413 = vpop.permute.xlu0 %412
    %414 = vrot.lane.b32.xlu0 %v274, 95
    %v415 = vpop.permute.xlu0 %414
    %vm420 = vcmask 1048320
    %421 = vst.msk [vmem:[#allocation2 + $0x60] sm:$0xff] %vm420, %v409
    %422 = vst.msk [vmem:[#allocation2 + $0x68] sm:$0xff] %vm420, %v411
    %423 = vst.msk [vmem:[#allocation2 + $0x70] sm:$0xff] %vm420, %v413
    %424 = vst.msk [vmem:[#allocation2 + $0x78] sm:$0xff] %vm420, %v415
    %v425 = vld [vmem:[#allocation3] sm:$0xff]
    %v426 = vld [vmem:[#allocation3 + $0x8] sm:$0xff]
    %v427 = vld [vmem:[#allocation3 + $0x10] sm:$0xff]
    %v428 = vld [vmem:[#allocation3 + $0x18] sm:$0xff]
    %v429 = vld [vmem:[#allocation3 + $0x20] sm:$0xff]
    %v430 = vld [vmem:[#allocation3 + $0x28] sm:$0xff]
    %v431 = vld [vmem:[#allocation3 + $0x30] sm:$0xff]
    %v432 = vld [vmem:[#allocation3 + $0x38] sm:$0xff]
    %v433 = vld [vmem:[#allocation3 + $0x40] sm:$0xff]
    %v434 = vld [vmem:[#allocation3 + $0x48] sm:$0xff]
    %v435 = vld [vmem:[#allocation3 + $0x50] sm:$0xff]
    %v436 = vld [vmem:[#allocation3 + $0x58] sm:$0xff]
    %v437 = vld [vmem:[#allocation3 + $0x60] sm:$0xff]
    %v438 = vld [vmem:[#allocation3 + $0x68] sm:$0xff]
    %v439 = vld [vmem:[#allocation3 + $0x70] sm:$0xff]
    %v440 = vld [vmem:[#allocation3 + $0x78] sm:$0xff]
    %vm441 = vcmask 15360
    %v442 = vsel %vm441, %v425, %v293
    %v443 = vsel %vm441, %v426, %v295
    %v444 = vsel %vm441, %v427, %v297
    %v445 = vsel %vm441, %v428, %v299
    %v446 = vsel %vm441, %v429, %v301
    %v447 = vsel %vm441, %v430, %v303
    %v448 = vsel %vm441, %v431, %v305
    %v449 = vsel %vm441, %v432, %v307
    %v450 = vsel %vm441, %v433, %v309
    %v451 = vsel %vm441, %v434, %v311
    %v452 = vsel %vm441, %v435, %v313
    %v453 = vsel %vm441, %v436, %v315
    %v454 = vsel %vm441, %v437, %v317
    %v455 = vsel %vm441, %v438, %v319
    %v456 = vsel %vm441, %v439, %v321
    %v457 = vsel %vm441, %v440, %v323
    %v458 = vld [vmem:[#allocation2] sm:$0xff]
    %v459 = vld [vmem:[#allocation2 + $0x8] sm:$0xff]
    %v460 = vld [vmem:[#allocation2 + $0x10] sm:$0xff]
    %v461 = vld [vmem:[#allocation2 + $0x18] sm:$0xff]
    %v462 = vld [vmem:[#allocation2 + $0x20] sm:$0xff]
    %v463 = vld [vmem:[#allocation2 + $0x28] sm:$0xff]
    %v464 = vld [vmem:[#allocation2 + $0x30] sm:$0xff]
    %v465 = vld [vmem:[#allocation2 + $0x38] sm:$0xff]
    %v466 = vld [vmem:[#allocation2 + $0x40] sm:$0xff]
    %v467 = vld [vmem:[#allocation2 + $0x48] sm:$0xff]
    %v468 = vld [vmem:[#allocation2 + $0x50] sm:$0xff]
    %v469 = vld [vmem:[#allocation2 + $0x58] sm:$0xff]
    %v470 = vld [vmem:[#allocation2 + $0x60] sm:$0xff]
    %v471 = vld [vmem:[#allocation2 + $0x68] sm:$0xff]
    %v472 = vld [vmem:[#allocation2 + $0x70] sm:$0xff]
    %v473 = vld [vmem:[#allocation2 + $0x78] sm:$0xff]
    %474 = vmatpush.msra.mxu0 %v457
    %475 = vmatpush.msra.mxu0 %v456
    %476 = vmatpush.msra.mxu0 %v455
    %477 = vmatpush.msra.mxu0 %v454
    %478 = vmatpush.msra.mxu0 %v453
    %479 = vmatpush.msra.mxu0 %v452
    %480 = vmatpush.msra.mxu0 %v451
    %481 = vmatpush.msra.mxu0 %v450
    %482 = vmatpush.msra.mxu0 %v449
    %483 = vmatpush.msra.mxu0 %v448
    %484 = vmatpush.msra.mxu0 %v447
    %485 = vmatpush.msra.mxu0 %v446
    %486 = vmatpush.msra.mxu0 %v445
    %487 = vmatpush.msra.mxu0 %v444
    %488 = vmatpush.msra.mxu0 %v443
    %489 = vmatpush.msra.mxu0 %v442
    %490 = vmatmul.f32.gmra.mxu0 %v458
    %v491 = vpop.f32.mrf.mxu0
    %v492 = vadd.f32 0.0, %v491
    %493 = vmatmul.f32.gmra.mxu0 %v459
    %v494 = vpop.f32.mrf.mxu0
    %v495 = vadd.f32 0.0, %v494
    %496 = vmatmul.f32.gmra.mxu0 %v460
    %v497 = vpop.f32.mrf.mxu0
    %v498 = vadd.f32 0.0, %v497
    %499 = vmatmul.f32.gmra.mxu0 %v461
    %v500 = vpop.f32.mrf.mxu0
    %v501 = vadd.f32 0.0, %v500
    %502 = vmatmul.f32.gmra.mxu0 %v462
    %v503 = vpop.f32.mrf.mxu0
    %v504 = vadd.f32 0.0, %v503
    %505 = vmatmul.f32.gmra.mxu0 %v463
    %v506 = vpop.f32.mrf.mxu0
    %v507 = vadd.f32 0.0, %v506
    %508 = vmatmul.f32.gmra.mxu0 %v464
    %v509 = vpop.f32.mrf.mxu0
    %v510 = vadd.f32 0.0, %v509
    %511 = vmatmul.f32.gmra.mxu0 %v465
    %v512 = vpop.f32.mrf.mxu0
    %v513 = vadd.f32 0.0, %v512
    %514 = vmatmul.f32.gmra.mxu0 %v466
    %v515 = vpop.f32.mrf.mxu0
    %v516 = vadd.f32 0.0, %v515
    %517 = vmatmul.f32.gmra.mxu0 %v467
    %v518 = vpop.f32.mrf.mxu0
    %v519 = vadd.f32 0.0, %v518
    %520 = vmatmul.f32.gmra.mxu0 %v468
    %v521 = vpop.f32.mrf.mxu0
    %v522 = vadd.f32 0.0, %v521
    %523 = vmatmul.f32.gmra.mxu0 %v469
    %v524 = vpop.f32.mrf.mxu0
    %v525 = vadd.f32 0.0, %v524
    %526 = vmatmul.f32.gmra.mxu0 %v470
    %v527 = vpop.f32.mrf.mxu0
    %v528 = vadd.f32 0.0, %v527
    %529 = vmatmul.f32.gmra.mxu0 %v471
    %v530 = vpop.f32.mrf.mxu0
    %v531 = vadd.f32 0.0, %v530
    %532 = vmatmul.f32.gmra.mxu0 %v472
    %v533 = vpop.f32.mrf.mxu0
    %v534 = vadd.f32 0.0, %v533
    %535 = vmatmul.f32.gmra.mxu0 %v473
    %v536 = vpop.f32.mrf.mxu0
    %v537 = vadd.f32 0.0, %v536
    %538 = vdwg.mxu0
    %555 = vrot.lane.b32.xlu0 %v492, 2
    %v556 = vpop.permute.xlu0 %555
    %557 = vrot.lane.b32.xlu0 %v495, 2
    %v558 = vpop.permute.xlu0 %557
    %559 = vrot.lane.b32.xlu0 %v498, 2
    %v560 = vpop.permute.xlu0 %559
    %561 = vrot.lane.b32.xlu0 %v501, 2
    %v562 = vpop.permute.xlu0 %561
    %563 = vrot.lane.b32.xlu0 %v504, 2
    %v564 = vpop.permute.xlu0 %563
    %565 = vrot.lane.b32.xlu0 %v507, 2
    %v566 = vpop.permute.xlu0 %565
    %567 = vrot.lane.b32.xlu0 %v510, 2
    %v568 = vpop.permute.xlu0 %567
    %569 = vrot.lane.b32.xlu0 %v513, 2
    %v570 = vpop.permute.xlu0 %569
    %571 = vrot.lane.b32.xlu0 %v516, 2
    %v572 = vpop.permute.xlu0 %571
    %573 = vrot.lane.b32.xlu0 %v519, 2
    %v574 = vpop.permute.xlu0 %573
    %575 = vrot.lane.b32.xlu0 %v522, 2
    %v576 = vpop.permute.xlu0 %575
    %577 = vrot.lane.b32.xlu0 %v525, 2
    %v578 = vpop.permute.xlu0 %577
    %579 = vrot.lane.b32.xlu0 %v528, 2
    %v580 = vpop.permute.xlu0 %579
    %581 = vrot.lane.b32.xlu0 %v531, 2
    %v582 = vpop.permute.xlu0 %581
    %583 = vrot.lane.b32.xlu0 %v534, 2
    %v584 = vpop.permute.xlu0 %583
    %585 = vrot.lane.b32.xlu0 %v537, 2
    %v586 = vpop.permute.xlu0 %585
    %vm603 = vcmask 31760
    %604 = vst.msk [vmem:[#allocation3] sm:$0xff] %vm603, %v556
    %605 = vst.msk [vmem:[#allocation3 + $0x8] sm:$0xff] %vm603, %v558
    %606 = vst.msk [vmem:[#allocation3 + $0x10] sm:$0xff] %vm603, %v560
    %607 = vst.msk [vmem:[#allocation3 + $0x18] sm:$0xff] %vm603, %v562
    %608 = vst.msk [vmem:[#allocation3 + $0x20] sm:$0xff] %vm603, %v564
    %609 = vst.msk [vmem:[#allocation3 + $0x28] sm:$0xff] %vm603, %v566
    %610 = vst.msk [vmem:[#allocation3 + $0x30] sm:$0xff] %vm603, %v568
    %611 = vst.msk [vmem:[#allocation3 + $0x38] sm:$0xff] %vm603, %v570
    %612 = vst.msk [vmem:[#allocation3 + $0x40] sm:$0xff] %vm603, %v572
    %613 = vst.msk [vmem:[#allocation3 + $0x48] sm:$0xff] %vm603, %v574
    %614 = vst.msk [vmem:[#allocation3 + $0x50] sm:$0xff] %vm603, %v576
    %615 = vst.msk [vmem:[#allocation3 + $0x58] sm:$0xff] %vm603, %v578
    %616 = vst.msk [vmem:[#allocation3 + $0x60] sm:$0xff] %vm603, %v580
    %617 = vst.msk [vmem:[#allocation3 + $0x68] sm:$0xff] %vm603, %v582
    %618 = vst.msk [vmem:[#allocation3 + $0x70] sm:$0xff] %vm603, %v584
    %619 = vst.msk [vmem:[#allocation3 + $0x78] sm:$0xff] %vm603, %v586
    %620 = vrot.lane.b32.xlu0 %v492, 126
    %v621 = vpop.permute.xlu0 %620
    %622 = vrot.lane.b32.xlu0 %v495, 126
    %v623 = vpop.permute.xlu0 %622
    %624 = vrot.lane.b32.xlu0 %v498, 126
    %v625 = vpop.permute.xlu0 %624
    %626 = vrot.lane.b32.xlu0 %v501, 126
    %v627 = vpop.permute.xlu0 %626
    %632 = vst.msk [vmem:[#allocation2] sm:$0xff] %vm369, %v621
    %633 = vst.msk [vmem:[#allocation2 + $0x8] sm:$0xff] %vm369, %v623
    %634 = vst.msk [vmem:[#allocation2 + $0x10] sm:$0xff] %vm369, %v625
    %635 = vst.msk [vmem:[#allocation2 + $0x18] sm:$0xff] %vm369, %v627
    %636 = vrot.lane.b32.xlu0 %v504, 30
    %v637 = vpop.permute.xlu0 %636
    %638 = vrot.lane.b32.xlu0 %v507, 30
    %v639 = vpop.permute.xlu0 %638
    %640 = vrot.lane.b32.xlu0 %v510, 30
    %v641 = vpop.permute.xlu0 %640
    %642 = vrot.lane.b32.xlu0 %v513, 30
    %v643 = vpop.permute.xlu0 %642
    %648 = vst.msk [vmem:[#allocation2 + $0x20] sm:$0xff] %vm386, %v637
    %649 = vst.msk [vmem:[#allocation2 + $0x28] sm:$0xff] %vm386, %v639
    %650 = vst.msk [vmem:[#allocation2 + $0x30] sm:$0xff] %vm386, %v641
    %651 = vst.msk [vmem:[#allocation2 + $0x38] sm:$0xff] %vm386, %v643
    %652 = vrot.lane.b32.xlu0 %v516, 62
    %v653 = vpop.permute.xlu0 %652
    %654 = vrot.lane.b32.xlu0 %v519, 62
    %v655 = vpop.permute.xlu0 %654
    %656 = vrot.lane.b32.xlu0 %v522, 62
    %v657 = vpop.permute.xlu0 %656
    %658 = vrot.lane.b32.xlu0 %v525, 62
    %v659 = vpop.permute.xlu0 %658
    %664 = vst.msk [vmem:[#allocation2 + $0x40] sm:$0xff] %vm403, %v653
    %665 = vst.msk [vmem:[#allocation2 + $0x48] sm:$0xff] %vm403, %v655
    %666 = vst.msk [vmem:[#allocation2 + $0x50] sm:$0xff] %vm403, %v657
    %667 = vst.msk [vmem:[#allocation2 + $0x58] sm:$0xff] %vm403, %v659
    %668 = vrot.lane.b32.xlu0 %v528, 94
    %v669 = vpop.permute.xlu0 %668
    %670 = vrot.lane.b32.xlu0 %v531, 94
    %v671 = vpop.permute.xlu0 %670
    %672 = vrot.lane.b32.xlu0 %v534, 94
    %v673 = vpop.permute.xlu0 %672
    %674 = vrot.lane.b32.xlu0 %v537, 94
    %v675 = vpop.permute.xlu0 %674
    %680 = vst.msk [vmem:[#allocation2 + $0x60] sm:$0xff] %vm420, %v669
    %681 = vst.msk [vmem:[#allocation2 + $0x68] sm:$0xff] %vm420, %v671
    %682 = vst.msk [vmem:[#allocation2 + $0x70] sm:$0xff] %vm420, %v673
    %683 = vst.msk [vmem:[#allocation2 + $0x78] sm:$0xff] %vm420, %v675
    %v684 = vld [vmem:[#allocation3] sm:$0xff]
    %v685 = vld [vmem:[#allocation3 + $0x8] sm:$0xff]
    %v686 = vld [vmem:[#allocation3 + $0x10] sm:$0xff]
    %v687 = vld [vmem:[#allocation3 + $0x18] sm:$0xff]
    %v688 = vld [vmem:[#allocation3 + $0x20] sm:$0xff]
    %v689 = vld [vmem:[#allocation3 + $0x28] sm:$0xff]
    %v690 = vld [vmem:[#allocation3 + $0x30] sm:$0xff]
    %v691 = vld [vmem:[#allocation3 + $0x38] sm:$0xff]
    %v692 = vld [vmem:[#allocation3 + $0x40] sm:$0xff]
    %v693 = vld [vmem:[#allocation3 + $0x48] sm:$0xff]
    %v694 = vld [vmem:[#allocation3 + $0x50] sm:$0xff]
    %v695 = vld [vmem:[#allocation3 + $0x58] sm:$0xff]
    %v696 = vld [vmem:[#allocation3 + $0x60] sm:$0xff]
    %v697 = vld [vmem:[#allocation3 + $0x68] sm:$0xff]
    %v698 = vld [vmem:[#allocation3 + $0x70] sm:$0xff]
    %v699 = vld [vmem:[#allocation3 + $0x78] sm:$0xff]
    %vm700 = vcmask 31744
    %v701 = vsel %vm700, %v684, %v556
    %v702 = vsel %vm700, %v685, %v558
    %v703 = vsel %vm700, %v686, %v560
    %v704 = vsel %vm700, %v687, %v562
    %v705 = vsel %vm700, %v688, %v564
    %v706 = vsel %vm700, %v689, %v566
    %v707 = vsel %vm700, %v690, %v568
    %v708 = vsel %vm700, %v691, %v570
    %v709 = vsel %vm700, %v692, %v572
    %v710 = vsel %vm700, %v693, %v574
    %v711 = vsel %vm700, %v694, %v576
    %v712 = vsel %vm700, %v695, %v578
    %v713 = vsel %vm700, %v696, %v580
    %v714 = vsel %vm700, %v697, %v582
    %v715 = vsel %vm700, %v698, %v584
    %v716 = vsel %vm700, %v699, %v586
    %v717 = vld [vmem:[#allocation2] sm:$0xff]
    %v718 = vld [vmem:[#allocation2 + $0x8] sm:$0xff]
    %v719 = vld [vmem:[#allocation2 + $0x10] sm:$0xff]
    %v720 = vld [vmem:[#allocation2 + $0x18] sm:$0xff]
    %v721 = vld [vmem:[#allocation2 + $0x20] sm:$0xff]
    %v722 = vld [vmem:[#allocation2 + $0x28] sm:$0xff]
    %v723 = vld [vmem:[#allocation2 + $0x30] sm:$0xff]
    %v724 = vld [vmem:[#allocation2 + $0x38] sm:$0xff]
    %v725 = vld [vmem:[#allocation2 + $0x40] sm:$0xff]
    %v726 = vld [vmem:[#allocation2 + $0x48] sm:$0xff]
    %v727 = vld [vmem:[#allocation2 + $0x50] sm:$0xff]
    %v728 = vld [vmem:[#allocation2 + $0x58] sm:$0xff]
    %v729 = vld [vmem:[#allocation2 + $0x60] sm:$0xff]
    %v730 = vld [vmem:[#allocation2 + $0x68] sm:$0xff]
    %v731 = vld [vmem:[#allocation2 + $0x70] sm:$0xff]
    %v732 = vld [vmem:[#allocation2 + $0x78] sm:$0xff]
    %733 = vmatpush.msra.mxu0 %v716
    %734 = vmatpush.msra.mxu0 %v715
    %735 = vmatpush.msra.mxu0 %v714
    %736 = vmatpush.msra.mxu0 %v713
    %737 = vmatpush.msra.mxu0 %v712
    %738 = vmatpush.msra.mxu0 %v711
    %739 = vmatpush.msra.mxu0 %v710
    %740 = vmatpush.msra.mxu0 %v709
    %741 = vmatpush.msra.mxu0 %v708
    %742 = vmatpush.msra.mxu0 %v707
    %743 = vmatpush.msra.mxu0 %v706
    %744 = vmatpush.msra.mxu0 %v705
    %745 = vmatpush.msra.mxu0 %v704
    %746 = vmatpush.msra.mxu0 %v703
    %747 = vmatpush.msra.mxu0 %v702
    %748 = vmatpush.msra.mxu0 %v701
    %749 = vmatmul.f32.gmra.mxu0 %v717
    %v750 = vpop.f32.mrf.mxu0
    %v751 = vadd.f32 0.0, %v750
    %752 = vmatmul.f32.gmra.mxu0 %v718
    %v753 = vpop.f32.mrf.mxu0
    %v754 = vadd.f32 0.0, %v753
    %755 = vmatmul.f32.gmra.mxu0 %v719
    %v756 = vpop.f32.mrf.mxu0
    %v757 = vadd.f32 0.0, %v756
    %758 = vmatmul.f32.gmra.mxu0 %v720
    %v759 = vpop.f32.mrf.mxu0
    %v760 = vadd.f32 0.0, %v759
    %761 = vmatmul.f32.gmra.mxu0 %v721
    %v762 = vpop.f32.mrf.mxu0
    %v763 = vadd.f32 0.0, %v762
    %764 = vmatmul.f32.gmra.mxu0 %v722
    %v765 = vpop.f32.mrf.mxu0
    %v766 = vadd.f32 0.0, %v765
    %767 = vmatmul.f32.gmra.mxu0 %v723
    %v768 = vpop.f32.mrf.mxu0
    %v769 = vadd.f32 0.0, %v768
    %770 = vmatmul.f32.gmra.mxu0 %v724
    %v771 = vpop.f32.mrf.mxu0
    %v772 = vadd.f32 0.0, %v771
    %773 = vmatmul.f32.gmra.mxu0 %v725
    %v774 = vpop.f32.mrf.mxu0
    %v775 = vadd.f32 0.0, %v774
    %776 = vmatmul.f32.gmra.mxu0 %v726
    %v777 = vpop.f32.mrf.mxu0
    %v778 = vadd.f32 0.0, %v777
    %779 = vmatmul.f32.gmra.mxu0 %v727
    %v780 = vpop.f32.mrf.mxu0
    %v781 = vadd.f32 0.0, %v780
    %782 = vmatmul.f32.gmra.mxu0 %v728
    %v783 = vpop.f32.mrf.mxu0
    %v784 = vadd.f32 0.0, %v783
    %785 = vmatmul.f32.gmra.mxu0 %v729
    %v786 = vpop.f32.mrf.mxu0
    %v787 = vadd.f32 0.0, %v786
    %788 = vmatmul.f32.gmra.mxu0 %v730
    %v789 = vpop.f32.mrf.mxu0
    %v790 = vadd.f32 0.0, %v789
    %791 = vmatmul.f32.gmra.mxu0 %v731
    %v792 = vpop.f32.mrf.mxu0
    %v793 = vadd.f32 0.0, %v792
    %794 = vmatmul.f32.gmra.mxu0 %v732
    %v795 = vpop.f32.mrf.mxu0
    %v796 = vadd.f32 0.0, %v795
    %797 = vdwg.mxu0
    %814 = vrot.lane.b32.xlu0 %v751, 4
    %v815 = vpop.permute.xlu0 %814
    %816 = vrot.lane.b32.xlu0 %v754, 4
    %v817 = vpop.permute.xlu0 %816
    %818 = vrot.lane.b32.xlu0 %v757, 4
    %v819 = vpop.permute.xlu0 %818
    %820 = vrot.lane.b32.xlu0 %v760, 4
    %v821 = vpop.permute.xlu0 %820
    %822 = vrot.lane.b32.xlu0 %v763, 4
    %v823 = vpop.permute.xlu0 %822
    %824 = vrot.lane.b32.xlu0 %v766, 4
    %v825 = vpop.permute.xlu0 %824
    %826 = vrot.lane.b32.xlu0 %v769, 4
    %v827 = vpop.permute.xlu0 %826
    %828 = vrot.lane.b32.xlu0 %v772, 4
    %v829 = vpop.permute.xlu0 %828
    %830 = vrot.lane.b32.xlu0 %v775, 4
    %v831 = vpop.permute.xlu0 %830
    %832 = vrot.lane.b32.xlu0 %v778, 4
    %v833 = vpop.permute.xlu0 %832
    %834 = vrot.lane.b32.xlu0 %v781, 4
    %v835 = vpop.permute.xlu0 %834
    %836 = vrot.lane.b32.xlu0 %v784, 4
    %v837 = vpop.permute.xlu0 %836
    %838 = vrot.lane.b32.xlu0 %v787, 4
    %v839 = vpop.permute.xlu0 %838
    %840 = vrot.lane.b32.xlu0 %v790, 4
    %v841 = vpop.permute.xlu0 %840
    %842 = vrot.lane.b32.xlu0 %v793, 4
    %v843 = vpop.permute.xlu0 %842
    %844 = vrot.lane.b32.xlu0 %v796, 4
    %v845 = vpop.permute.xlu0 %844
    %vm862 = vcmask 64544
    %863 = vst.msk [vmem:[#allocation3] sm:$0xff] %vm862, %v815
    %864 = vst.msk [vmem:[#allocation3 + $0x8] sm:$0xff] %vm862, %v817
    %865 = vst.msk [vmem:[#allocation3 + $0x10] sm:$0xff] %vm862, %v819
    %866 = vst.msk [vmem:[#allocation3 + $0x18] sm:$0xff] %vm862, %v821
    %867 = vst.msk [vmem:[#allocation3 + $0x20] sm:$0xff] %vm862, %v823
    %868 = vst.msk [vmem:[#allocation3 + $0x28] sm:$0xff] %vm862, %v825
    %869 = vst.msk [vmem:[#allocation3 + $0x30] sm:$0xff] %vm862, %v827
    %870 = vst.msk [vmem:[#allocation3 + $0x38] sm:$0xff] %vm862, %v829
    %871 = vst.msk [vmem:[#allocation3 + $0x40] sm:$0xff] %vm862, %v831
    %872 = vst.msk [vmem:[#allocation3 + $0x48] sm:$0xff] %vm862, %v833
    %873 = vst.msk [vmem:[#allocation3 + $0x50] sm:$0xff] %vm862, %v835
    %874 = vst.msk [vmem:[#allocation3 + $0x58] sm:$0xff] %vm862, %v837
    %875 = vst.msk [vmem:[#allocation3 + $0x60] sm:$0xff] %vm862, %v839
    %876 = vst.msk [vmem:[#allocation3 + $0x68] sm:$0xff] %vm862, %v841
    %877 = vst.msk [vmem:[#allocation3 + $0x70] sm:$0xff] %vm862, %v843
    %878 = vst.msk [vmem:[#allocation3 + $0x78] sm:$0xff] %vm862, %v845
    %879 = vrot.lane.b32.xlu0 %v751, 124
    %v880 = vpop.permute.xlu0 %879
    %881 = vrot.lane.b32.xlu0 %v754, 124
    %v882 = vpop.permute.xlu0 %881
    %883 = vrot.lane.b32.xlu0 %v757, 124
    %v884 = vpop.permute.xlu0 %883
    %885 = vrot.lane.b32.xlu0 %v760, 124
    %v886 = vpop.permute.xlu0 %885
    %891 = vst.msk [vmem:[#allocation2] sm:$0xff] %vm369, %v880
    %892 = vst.msk [vmem:[#allocation2 + $0x8] sm:$0xff] %vm369, %v882
    %893 = vst.msk [vmem:[#allocation2 + $0x10] sm:$0xff] %vm369, %v884
    %894 = vst.msk [vmem:[#allocation2 + $0x18] sm:$0xff] %vm369, %v886
    %895 = vrot.lane.b32.xlu0 %v763, 28
    %v896 = vpop.permute.xlu0 %895
    %897 = vrot.lane.b32.xlu0 %v766, 28
    %v898 = vpop.permute.xlu0 %897
    %899 = vrot.lane.b32.xlu0 %v769, 28
    %v900 = vpop.permute.xlu0 %899
    %901 = vrot.lane.b32.xlu0 %v772, 28
    %v902 = vpop.permute.xlu0 %901
    %907 = vst.msk [vmem:[#allocation2 + $0x20] sm:$0xff] %vm386, %v896
    %908 = vst.msk [vmem:[#allocation2 + $0x28] sm:$0xff] %vm386, %v898
    %909 = vst.msk [vmem:[#allocation2 + $0x30] sm:$0xff] %vm386, %v900
    %910 = vst.msk [vmem:[#allocation2 + $0x38] sm:$0xff] %vm386, %v902
    %911 = vrot.lane.b32.xlu0 %v775, 60
    %v912 = vpop.permute.xlu0 %911
    %913 = vrot.lane.b32.xlu0 %v778, 60
    %v914 = vpop.permute.xlu0 %913
    %915 = vrot.lane.b32.xlu0 %v781, 60
    %v916 = vpop.permute.xlu0 %915
    %917 = vrot.lane.b32.xlu0 %v784, 60
    %v918 = vpop.permute.xlu0 %917
    %923 = vst.msk [vmem:[#allocation2 + $0x40] sm:$0xff] %vm403, %v912
    %924 = vst.msk [vmem:[#allocation2 + $0x48] sm:$0xff] %vm403, %v914
    %925 = vst.msk [vmem:[#allocation2 + $0x50] sm:$0xff] %vm403, %v916
    %926 = vst.msk [vmem:[#allocation2 + $0x58] sm:$0xff] %vm403, %v918
    %927 = vrot.lane.b32.xlu0 %v787, 92
    %v928 = vpop.permute.xlu0 %927
    %929 = vrot.lane.b32.xlu0 %v790, 92
    %v930 = vpop.permute.xlu0 %929
    %931 = vrot.lane.b32.xlu0 %v793, 92
    %v932 = vpop.permute.xlu0 %931
    %933 = vrot.lane.b32.xlu0 %v796, 92
    %v934 = vpop.permute.xlu0 %933
    %939 = vst.msk [vmem:[#allocation2 + $0x60] sm:$0xff] %vm420, %v928
    %940 = vst.msk [vmem:[#allocation2 + $0x68] sm:$0xff] %vm420, %v930
    %941 = vst.msk [vmem:[#allocation2 + $0x70] sm:$0xff] %vm420, %v932
    %942 = vst.msk [vmem:[#allocation2 + $0x78] sm:$0xff] %vm420, %v934
    %v943 = vld [vmem:[#allocation3] sm:$0xff]
    %v944 = vld [vmem:[#allocation3 + $0x8] sm:$0xff]
    %v945 = vld [vmem:[#allocation3 + $0x10] sm:$0xff]
    %v946 = vld [vmem:[#allocation3 + $0x18] sm:$0xff]
    %v947 = vld [vmem:[#allocation3 + $0x20] sm:$0xff]
    %v948 = vld [vmem:[#allocation3 + $0x28] sm:$0xff]
    %v949 = vld [vmem:[#allocation3 + $0x30] sm:$0xff]
    %v950 = vld [vmem:[#allocation3 + $0x38] sm:$0xff]
    %v951 = vld [vmem:[#allocation3 + $0x40] sm:$0xff]
    %v952 = vld [vmem:[#allocation3 + $0x48] sm:$0xff]
    %v953 = vld [vmem:[#allocation3 + $0x50] sm:$0xff]
    %v954 = vld [vmem:[#allocation3 + $0x58] sm:$0xff]
    %v955 = vld [vmem:[#allocation3 + $0x60] sm:$0xff]
    %v956 = vld [vmem:[#allocation3 + $0x68] sm:$0xff]
    %v957 = vld [vmem:[#allocation3 + $0x70] sm:$0xff]
    %v958 = vld [vmem:[#allocation3 + $0x78] sm:$0xff]
    %vm959 = vcmask 64512
    %v960 = vsel %vm959, %v943, %v815
    %v961 = vsel %vm959, %v944, %v817
    %v962 = vsel %vm959, %v945, %v819
    %v963 = vsel %vm959, %v946, %v821
    %v964 = vsel %vm959, %v947, %v823
    %v965 = vsel %vm959, %v948, %v825
    %v966 = vsel %vm959, %v949, %v827
    %v967 = vsel %vm959, %v950, %v829
    %v968 = vsel %vm959, %v951, %v831
    %v969 = vsel %vm959, %v952, %v833
    %v970 = vsel %vm959, %v953, %v835
    %v971 = vsel %vm959, %v954, %v837
    %v972 = vsel %vm959, %v955, %v839
    %v973 = vsel %vm959, %v956, %v841
    %v974 = vsel %vm959, %v957, %v843
    %v975 = vsel %vm959, %v958, %v845
    %v976 = vld [vmem:[#allocation2] sm:$0xff]
    %v977 = vld [vmem:[#allocation2 + $0x8] sm:$0xff]
    %v978 = vld [vmem:[#allocation2 + $0x10] sm:$0xff]
    %v979 = vld [vmem:[#allocation2 + $0x18] sm:$0xff]
    %v980 = vld [vmem:[#allocation2 + $0x20] sm:$0xff]
    %v981 = vld [vmem:[#allocation2 + $0x28] sm:$0xff]
    %v982 = vld [vmem:[#allocation2 + $0x30] sm:$0xff]
    %v983 = vld [vmem:[#allocation2 + $0x38] sm:$0xff]
    %v984 = vld [vmem:[#allocation2 + $0x40] sm:$0xff]
    %v985 = vld [vmem:[#allocation2 + $0x48] sm:$0xff]
    %v986 = vld [vmem:[#allocation2 + $0x50] sm:$0xff]
    %v987 = vld [vmem:[#allocation2 + $0x58] sm:$0xff]
    %v988 = vld [vmem:[#allocation2 + $0x60] sm:$0xff]
    %v989 = vld [vmem:[#allocation2 + $0x68] sm:$0xff]
    %v990 = vld [vmem:[#allocation2 + $0x70] sm:$0xff]
    %v991 = vld [vmem:[#allocation2 + $0x78] sm:$0xff]
    %992 = vmatpush.msra.mxu0 %v975
    %993 = vmatpush.msra.mxu0 %v974
    %994 = vmatpush.msra.mxu0 %v973
    %995 = vmatpush.msra.mxu0 %v972
    %996 = vmatpush.msra.mxu0 %v971
    %997 = vmatpush.msra.mxu0 %v970
    %998 = vmatpush.msra.mxu0 %v969
    %999 = vmatpush.msra.mxu0 %v968
    %1000 = vmatpush.msra.mxu0 %v967
    %1001 = vmatpush.msra.mxu0 %v966
    %1002 = vmatpush.msra.mxu0 %v965
    %1003 = vmatpush.msra.mxu0 %v964
    %1004 = vmatpush.msra.mxu0 %v963
    %1005 = vmatpush.msra.mxu0 %v962
    %1006 = vmatpush.msra.mxu0 %v961
    %1007 = vmatpush.msra.mxu0 %v960
    %1008 = vmatmul.f32.gmra.mxu0 %v976
    %v1009 = vpop.f32.mrf.mxu0
    %v1010 = vadd.f32 0.0, %v1009
    %1011 = vmatmul.f32.gmra.mxu0 %v977
    %v1012 = vpop.f32.mrf.mxu0
    %v1013 = vadd.f32 0.0, %v1012
    %1014 = vmatmul.f32.gmra.mxu0 %v978
    %v1015 = vpop.f32.mrf.mxu0
    %v1016 = vadd.f32 0.0, %v1015
    %1017 = vmatmul.f32.gmra.mxu0 %v979
    %v1018 = vpop.f32.mrf.mxu0
    %v1019 = vadd.f32 0.0, %v1018
    %1020 = vmatmul.f32.gmra.mxu0 %v980
    %v1021 = vpop.f32.mrf.mxu0
    %v1022 = vadd.f32 0.0, %v1021
    %1023 = vmatmul.f32.gmra.mxu0 %v981
    %v1024 = vpop.f32.mrf.mxu0
    %v1025 = vadd.f32 0.0, %v1024
    %1026 = vmatmul.f32.gmra.mxu0 %v982
    %v1027 = vpop.f32.mrf.mxu0
    %v1028 = vadd.f32 0.0, %v1027
    %1029 = vmatmul.f32.gmra.mxu0 %v983
    %v1030 = vpop.f32.mrf.mxu0
    %v1031 = vadd.f32 0.0, %v1030
    %1032 = vmatmul.f32.gmra.mxu0 %v984
    %v1033 = vpop.f32.mrf.mxu0
    %v1034 = vadd.f32 0.0, %v1033
    %1035 = vmatmul.f32.gmra.mxu0 %v985
    %v1036 = vpop.f32.mrf.mxu0
    %v1037 = vadd.f32 0.0, %v1036
    %1038 = vmatmul.f32.gmra.mxu0 %v986
    %v1039 = vpop.f32.mrf.mxu0
    %v1040 = vadd.f32 0.0, %v1039
    %1041 = vmatmul.f32.gmra.mxu0 %v987
    %v1042 = vpop.f32.mrf.mxu0
    %v1043 = vadd.f32 0.0, %v1042
    %1044 = vmatmul.f32.gmra.mxu0 %v988
    %v1045 = vpop.f32.mrf.mxu0
    %v1046 = vadd.f32 0.0, %v1045
    %1047 = vmatmul.f32.gmra.mxu0 %v989
    %v1048 = vpop.f32.mrf.mxu0
    %v1049 = vadd.f32 0.0, %v1048
    %1050 = vmatmul.f32.gmra.mxu0 %v990
    %v1051 = vpop.f32.mrf.mxu0
    %v1052 = vadd.f32 0.0, %v1051
    %1053 = vmatmul.f32.gmra.mxu0 %v991
    %v1054 = vpop.f32.mrf.mxu0
    %v1055 = vadd.f32 0.0, %v1054
    %1056 = vdwg.mxu0
    %1073 = vrot.lane.b32.xlu0 %v1010, 8
    %v1074 = vpop.permute.xlu0 %1073
    %1075 = vrot.lane.b32.xlu0 %v1013, 8
    %v1076 = vpop.permute.xlu0 %1075
    %1077 = vrot.lane.b32.xlu0 %v1016, 8
    %v1078 = vpop.permute.xlu0 %1077
    %1079 = vrot.lane.b32.xlu0 %v1019, 8
    %v1080 = vpop.permute.xlu0 %1079
    %1081 = vrot.lane.b32.xlu0 %v1022, 8
    %v1082 = vpop.permute.xlu0 %1081
    %1083 = vrot.lane.b32.xlu0 %v1025, 8
    %v1084 = vpop.permute.xlu0 %1083
    %1085 = vrot.lane.b32.xlu0 %v1028, 8
    %v1086 = vpop.permute.xlu0 %1085
    %1087 = vrot.lane.b32.xlu0 %v1031, 8
    %v1088 = vpop.permute.xlu0 %1087
    %1089 = vrot.lane.b32.xlu0 %v1034, 8
    %v1090 = vpop.permute.xlu0 %1089
    %1091 = vrot.lane.b32.xlu0 %v1037, 8
    %v1092 = vpop.permute.xlu0 %1091
    %1093 = vrot.lane.b32.xlu0 %v1040, 8
    %v1094 = vpop.permute.xlu0 %1093
    %1095 = vrot.lane.b32.xlu0 %v1043, 8
    %v1096 = vpop.permute.xlu0 %1095
    %1097 = vrot.lane.b32.xlu0 %v1046, 8
    %v1098 = vpop.permute.xlu0 %1097
    %1099 = vrot.lane.b32.xlu0 %v1049, 8
    %v1100 = vpop.permute.xlu0 %1099
    %1101 = vrot.lane.b32.xlu0 %v1052, 8
    %v1102 = vpop.permute.xlu0 %1101
    %1103 = vrot.lane.b32.xlu0 %v1055, 8
    %v1104 = vpop.permute.xlu0 %1103
    %vm1121 = vcmask 130112
    %1122 = vst.msk [vmem:[#allocation3] sm:$0xff] %vm1121, %v1074
    %1123 = vst.msk [vmem:[#allocation3 + $0x8] sm:$0xff] %vm1121, %v1076
    %1124 = vst.msk [vmem:[#allocation3 + $0x10] sm:$0xff] %vm1121, %v1078
    %1125 = vst.msk [vmem:[#allocation3 + $0x18] sm:$0xff] %vm1121, %v1080
    %1126 = vst.msk [vmem:[#allocation3 + $0x20] sm:$0xff] %vm1121, %v1082
    %1127 = vst.msk [vmem:[#allocation3 + $0x28] sm:$0xff] %vm1121, %v1084
    %1128 = vst.msk [vmem:[#allocation3 + $0x30] sm:$0xff] %vm1121, %v1086
    %1129 = vst.msk [vmem:[#allocation3 + $0x38] sm:$0xff] %vm1121, %v1088
    %1130 = vst.msk [vmem:[#allocation3 + $0x40] sm:$0xff] %vm1121, %v1090
    %1131 = vst.msk [vmem:[#allocation3 + $0x48] sm:$0xff] %vm1121, %v1092
    %1132 = vst.msk [vmem:[#allocation3 + $0x50] sm:$0xff] %vm1121, %v1094
    %1133 = vst.msk [vmem:[#allocation3 + $0x58] sm:$0xff] %vm1121, %v1096
    %1134 = vst.msk [vmem:[#allocation3 + $0x60] sm:$0xff] %vm1121, %v1098
    %1135 = vst.msk [vmem:[#allocation3 + $0x68] sm:$0xff] %vm1121, %v1100
    %1136 = vst.msk [vmem:[#allocation3 + $0x70] sm:$0xff] %vm1121, %v1102
    %1137 = vst.msk [vmem:[#allocation3 + $0x78] sm:$0xff] %vm1121, %v1104
    %1138 = vrot.lane.b32.xlu0 %v1010, 120
    %v1139 = vpop.permute.xlu0 %1138
    %1140 = vrot.lane.b32.xlu0 %v1013, 120
    %v1141 = vpop.permute.xlu0 %1140
    %1142 = vrot.lane.b32.xlu0 %v1016, 120
    %v1143 = vpop.permute.xlu0 %1142
    %1144 = vrot.lane.b32.xlu0 %v1019, 120
    %v1145 = vpop.permute.xlu0 %1144
    %1150 = vst.msk [vmem:[#allocation2] sm:$0xff] %vm369, %v1139
    %1151 = vst.msk [vmem:[#allocation2 + $0x8] sm:$0xff] %vm369, %v1141
    %1152 = vst.msk [vmem:[#allocation2 + $0x10] sm:$0xff] %vm369, %v1143
    %1153 = vst.msk [vmem:[#allocation2 + $0x18] sm:$0xff] %vm369, %v1145
    %1154 = vrot.lane.b32.xlu0 %v1022, 24
    %v1155 = vpop.permute.xlu0 %1154
    %1156 = vrot.lane.b32.xlu0 %v1025, 24
    %v1157 = vpop.permute.xlu0 %1156
    %1158 = vrot.lane.b32.xlu0 %v1028, 24
    %v1159 = vpop.permute.xlu0 %1158
    %1160 = vrot.lane.b32.xlu0 %v1031, 24
    %v1161 = vpop.permute.xlu0 %1160
    %1166 = vst.msk [vmem:[#allocation2 + $0x20] sm:$0xff] %vm386, %v1155
    %1167 = vst.msk [vmem:[#allocation2 + $0x28] sm:$0xff] %vm386, %v1157
    %1168 = vst.msk [vmem:[#allocation2 + $0x30] sm:$0xff] %vm386, %v1159
    %1169 = vst.msk [vmem:[#allocation2 + $0x38] sm:$0xff] %vm386, %v1161
    %1170 = vrot.lane.b32.xlu0 %v1034, 56
    %v1171 = vpop.permute.xlu0 %1170
    %1172 = vrot.lane.b32.xlu0 %v1037, 56
    %v1173 = vpop.permute.xlu0 %1172
    %1174 = vrot.lane.b32.xlu0 %v1040, 56
    %v1175 = vpop.permute.xlu0 %1174
    %1176 = vrot.lane.b32.xlu0 %v1043, 56
    %v1177 = vpop.permute.xlu0 %1176
    %1182 = vst.msk [vmem:[#allocation2 + $0x40] sm:$0xff] %vm403, %v1171
    %1183 = vst.msk [vmem:[#allocation2 + $0x48] sm:$0xff] %vm403, %v1173
    %1184 = vst.msk [vmem:[#allocation2 + $0x50] sm:$0xff] %vm403, %v1175
    %1185 = vst.msk [vmem:[#allocation2 + $0x58] sm:$0xff] %vm403, %v1177
    %1186 = vrot.lane.b32.xlu0 %v1046, 88
    %v1187 = vpop.permute.xlu0 %1186
    %1188 = vrot.lane.b32.xlu0 %v1049, 88
    %v1189 = vpop.permute.xlu0 %1188
    %1190 = vrot.lane.b32.xlu0 %v1052, 88
    %v1191 = vpop.permute.xlu0 %1190
    %1192 = vrot.lane.b32.xlu0 %v1055, 88
    %v1193 = vpop.permute.xlu0 %1192
    %1198 = vst.msk [vmem:[#allocation2 + $0x60] sm:$0xff] %vm420, %v1187
    %1199 = vst.msk [vmem:[#allocation2 + $0x68] sm:$0xff] %vm420, %v1189
    %1200 = vst.msk [vmem:[#allocation2 + $0x70] sm:$0xff] %vm420, %v1191
    %1201 = vst.msk [vmem:[#allocation2 + $0x78] sm:$0xff] %vm420, %v1193
    %v1202 = vld [vmem:[#allocation3] sm:$0xff]
    %v1203 = vld [vmem:[#allocation3 + $0x8] sm:$0xff]
    %v1204 = vld [vmem:[#allocation3 + $0x10] sm:$0xff]
    %v1205 = vld [vmem:[#allocation3 + $0x18] sm:$0xff]
    %v1206 = vld [vmem:[#allocation3 + $0x20] sm:$0xff]
    %v1207 = vld [vmem:[#allocation3 + $0x28] sm:$0xff]
    %v1208 = vld [vmem:[#allocation3 + $0x30] sm:$0xff]
    %v1209 = vld [vmem:[#allocation3 + $0x38] sm:$0xff]
    %v1210 = vld [vmem:[#allocation3 + $0x40] sm:$0xff]
    %v1211 = vld [vmem:[#allocation3 + $0x48] sm:$0xff]
    %v1212 = vld [vmem:[#allocation3 + $0x50] sm:$0xff]
    %v1213 = vld [vmem:[#allocation3 + $0x58] sm:$0xff]
    %v1214 = vld [vmem:[#allocation3 + $0x60] sm:$0xff]
    %v1215 = vld [vmem:[#allocation3 + $0x68] sm:$0xff]
    %v1216 = vld [vmem:[#allocation3 + $0x70] sm:$0xff]
    %v1217 = vld [vmem:[#allocation3 + $0x78] sm:$0xff]
    %vm1218 = vcmask 130048
    %v1219 = vsel %vm1218, %v1202, %v1074
    %v1220 = vsel %vm1218, %v1203, %v1076
    %v1221 = vsel %vm1218, %v1204, %v1078
    %v1222 = vsel %vm1218, %v1205, %v1080
    %v1223 = vsel %vm1218, %v1206, %v1082
    %v1224 = vsel %vm1218, %v1207, %v1084
    %v1225 = vsel %vm1218, %v1208, %v1086
    %v1226 = vsel %vm1218, %v1209, %v1088
    %v1227 = vsel %vm1218, %v1210, %v1090
    %v1228 = vsel %vm1218, %v1211, %v1092
    %v1229 = vsel %vm1218, %v1212, %v1094
    %v1230 = vsel %vm1218, %v1213, %v1096
    %v1231 = vsel %vm1218, %v1214, %v1098
    %v1232 = vsel %vm1218, %v1215, %v1100
    %v1233 = vsel %vm1218, %v1216, %v1102
    %v1234 = vsel %vm1218, %v1217, %v1104
    %v1235 = vld [vmem:[#allocation2] sm:$0xff]
    %v1236 = vld [vmem:[#allocation2 + $0x8] sm:$0xff]
    %v1237 = vld [vmem:[#allocation2 + $0x10] sm:$0xff]
    %v1238 = vld [vmem:[#allocation2 + $0x18] sm:$0xff]
    %v1239 = vld [vmem:[#allocation2 + $0x20] sm:$0xff]
    %v1240 = vld [vmem:[#allocation2 + $0x28] sm:$0xff]
    %v1241 = vld [vmem:[#allocation2 + $0x30] sm:$0xff]
    %v1242 = vld [vmem:[#allocation2 + $0x38] sm:$0xff]
    %v1243 = vld [vmem:[#allocation2 + $0x40] sm:$0xff]
    %v1244 = vld [vmem:[#allocation2 + $0x48] sm:$0xff]
    %v1245 = vld [vmem:[#allocation2 + $0x50] sm:$0xff]
    %v1246 = vld [vmem:[#allocation2 + $0x58] sm:$0xff]
    %v1247 = vld [vmem:[#allocation2 + $0x60] sm:$0xff]
    %v1248 = vld [vmem:[#allocation2 + $0x68] sm:$0xff]
    %v1249 = vld [vmem:[#allocation2 + $0x70] sm:$0xff]
    %v1250 = vld [vmem:[#allocation2 + $0x78] sm:$0xff]
    %1251 = vmatpush.msra.mxu0 %v1234
    %1252 = vmatpush.msra.mxu0 %v1233
    %1253 = vmatpush.msra.mxu0 %v1232
    %1254 = vmatpush.msra.mxu0 %v1231
    %1255 = vmatpush.msra.mxu0 %v1230
    %1256 = vmatpush.msra.mxu0 %v1229
    %1257 = vmatpush.msra.mxu0 %v1228
    %1258 = vmatpush.msra.mxu0 %v1227
    %1259 = vmatpush.msra.mxu0 %v1226
    %1260 = vmatpush.msra.mxu0 %v1225
    %1261 = vmatpush.msra.mxu0 %v1224
    %1262 = vmatpush.msra.mxu0 %v1223
    %1263 = vmatpush.msra.mxu0 %v1222
    %1264 = vmatpush.msra.mxu0 %v1221
    %1265 = vmatpush.msra.mxu0 %v1220
    %1266 = vmatpush.msra.mxu0 %v1219
    %1267 = vmatmul.f32.gmra.mxu0 %v1235
    %v1268 = vpop.f32.mrf.mxu0
    %v1269 = vadd.f32 0.0, %v1268
    %1270 = vmatmul.f32.gmra.mxu0 %v1236
    %v1271 = vpop.f32.mrf.mxu0
    %v1272 = vadd.f32 0.0, %v1271
    %1273 = vmatmul.f32.gmra.mxu0 %v1237
    %v1274 = vpop.f32.mrf.mxu0
    %v1275 = vadd.f32 0.0, %v1274
    %1276 = vmatmul.f32.gmra.mxu0 %v1238
    %v1277 = vpop.f32.mrf.mxu0
    %v1278 = vadd.f32 0.0, %v1277
    %1279 = vmatmul.f32.gmra.mxu0 %v1239
    %v1280 = vpop.f32.mrf.mxu0
    %v1281 = vadd.f32 0.0, %v1280
    %1282 = vmatmul.f32.gmra.mxu0 %v1240
    %v1283 = vpop.f32.mrf.mxu0
    %v1284 = vadd.f32 0.0, %v1283
    %1285 = vmatmul.f32.gmra.mxu0 %v1241
    %v1286 = vpop.f32.mrf.mxu0
    %v1287 = vadd.f32 0.0, %v1286
    %1288 = vmatmul.f32.gmra.mxu0 %v1242
    %v1289 = vpop.f32.mrf.mxu0
    %v1290 = vadd.f32 0.0, %v1289
    %1291 = vmatmul.f32.gmra.mxu0 %v1243
    %v1292 = vpop.f32.mrf.mxu0
    %v1293 = vadd.f32 0.0, %v1292
    %1294 = vmatmul.f32.gmra.mxu0 %v1244
    %v1295 = vpop.f32.mrf.mxu0
    %v1296 = vadd.f32 0.0, %v1295
    %1297 = vmatmul.f32.gmra.mxu0 %v1245
    %v1298 = vpop.f32.mrf.mxu0
    %v1299 = vadd.f32 0.0, %v1298
    %1300 = vmatmul.f32.gmra.mxu0 %v1246
    %v1301 = vpop.f32.mrf.mxu0
    %v1302 = vadd.f32 0.0, %v1301
    %1303 = vmatmul.f32.gmra.mxu0 %v1247
    %v1304 = vpop.f32.mrf.mxu0
    %v1305 = vadd.f32 0.0, %v1304
    %1306 = vmatmul.f32.gmra.mxu0 %v1248
    %v1307 = vpop.f32.mrf.mxu0
    %v1308 = vadd.f32 0.0, %v1307
    %1309 = vmatmul.f32.gmra.mxu0 %v1249
    %v1310 = vpop.f32.mrf.mxu0
    %v1311 = vadd.f32 0.0, %v1310
    %1312 = vmatmul.f32.gmra.mxu0 %v1250
    %v1313 = vpop.f32.mrf.mxu0
    %v1314 = vadd.f32 0.0, %v1313
    %1315 = vdwg.mxu0
    %1332 = vrot.lane.b32.xlu0 %v1269, 16
    %v1333 = vpop.permute.xlu0 %1332
    %1334 = vrot.lane.b32.xlu0 %v1272, 16
    %v1335 = vpop.permute.xlu0 %1334
    %1336 = vrot.lane.b32.xlu0 %v1275, 16
    %v1337 = vpop.permute.xlu0 %1336
    %1338 = vrot.lane.b32.xlu0 %v1278, 16
    %v1339 = vpop.permute.xlu0 %1338
    %1340 = vrot.lane.b32.xlu0 %v1281, 16
    %v1341 = vpop.permute.xlu0 %1340
    %1342 = vrot.lane.b32.xlu0 %v1284, 16
    %v1343 = vpop.permute.xlu0 %1342
    %1344 = vrot.lane.b32.xlu0 %v1287, 16
    %v1345 = vpop.permute.xlu0 %1344
    %1346 = vrot.lane.b32.xlu0 %v1290, 16
    %v1347 = vpop.permute.xlu0 %1346
    %1348 = vrot.lane.b32.xlu0 %v1293, 16
    %v1349 = vpop.permute.xlu0 %1348
    %1350 = vrot.lane.b32.xlu0 %v1296, 16
    %v1351 = vpop.permute.xlu0 %1350
    %1352 = vrot.lane.b32.xlu0 %v1299, 16
    %v1353 = vpop.permute.xlu0 %1352
    %1354 = vrot.lane.b32.xlu0 %v1302, 16
    %v1355 = vpop.permute.xlu0 %1354
    %1356 = vrot.lane.b32.xlu0 %v1305, 16
    %v1357 = vpop.permute.xlu0 %1356
    %1358 = vrot.lane.b32.xlu0 %v1308, 16
    %v1359 = vpop.permute.xlu0 %1358
    %1360 = vrot.lane.b32.xlu0 %v1311, 16
    %v1361 = vpop.permute.xlu0 %1360
    %1362 = vrot.lane.b32.xlu0 %v1314, 16
    %v1363 = vpop.permute.xlu0 %1362
    %vm1380 = vcmask 261248
    %1381 = vst.msk [vmem:[#allocation3] sm:$0xff] %vm1380, %v1333
    %1382 = vst.msk [vmem:[#allocation3 + $0x8] sm:$0xff] %vm1380, %v1335
    %1383 = vst.msk [vmem:[#allocation3 + $0x10] sm:$0xff] %vm1380, %v1337
    %1384 = vst.msk [vmem:[#allocation3 + $0x18] sm:$0xff] %vm1380, %v1339
    %1385 = vst.msk [vmem:[#allocation3 + $0x20] sm:$0xff] %vm1380, %v1341
    %1386 = vst.msk [vmem:[#allocation3 + $0x28] sm:$0xff] %vm1380, %v1343
    %1387 = vst.msk [vmem:[#allocation3 + $0x30] sm:$0xff] %vm1380, %v1345
    %1388 = vst.msk [vmem:[#allocation3 + $0x38] sm:$0xff] %vm1380, %v1347
    %1389 = vst.msk [vmem:[#allocation3 + $0x40] sm:$0xff] %vm1380, %v1349
    %1390 = vst.msk [vmem:[#allocation3 + $0x48] sm:$0xff] %vm1380, %v1351
    %1391 = vst.msk [vmem:[#allocation3 + $0x50] sm:$0xff] %vm1380, %v1353
    %1392 = vst.msk [vmem:[#allocation3 + $0x58] sm:$0xff] %vm1380, %v1355
    %1393 = vst.msk [vmem:[#allocation3 + $0x60] sm:$0xff] %vm1380, %v1357
    %1394 = vst.msk [vmem:[#allocation3 + $0x68] sm:$0xff] %vm1380, %v1359
    %1395 = vst.msk [vmem:[#allocation3 + $0x70] sm:$0xff] %vm1380, %v1361
    %1396 = vst.msk [vmem:[#allocation3 + $0x78] sm:$0xff] %vm1380, %v1363
    %1397 = vrot.lane.b32.xlu0 %v1269, 112
    %v1398 = vpop.permute.xlu0 %1397
    %1399 = vrot.lane.b32.xlu0 %v1272, 112
    %v1400 = vpop.permute.xlu0 %1399
    %1401 = vrot.lane.b32.xlu0 %v1275, 112
    %v1402 = vpop.permute.xlu0 %1401
    %1403 = vrot.lane.b32.xlu0 %v1278, 112
    %v1404 = vpop.permute.xlu0 %1403
    %1409 = vst.msk [vmem:[#allocation2] sm:$0xff] %vm369, %v1398
    %1410 = vst.msk [vmem:[#allocation2 + $0x8] sm:$0xff] %vm369, %v1400
    %1411 = vst.msk [vmem:[#allocation2 + $0x10] sm:$0xff] %vm369, %v1402
    %1412 = vst.msk [vmem:[#allocation2 + $0x18] sm:$0xff] %vm369, %v1404
    %1413 = vst.msk [vmem:[#allocation2 + $0x20] sm:$0xff] %vm386, %v1341
    %1414 = vst.msk [vmem:[#allocation2 + $0x28] sm:$0xff] %vm386, %v1343
    %1415 = vst.msk [vmem:[#allocation2 + $0x30] sm:$0xff] %vm386, %v1345
    %1416 = vst.msk [vmem:[#allocation2 + $0x38] sm:$0xff] %vm386, %v1347
    %1417 = vrot.lane.b32.xlu0 %v1293, 48
    %v1418 = vpop.permute.xlu0 %1417
    %1419 = vrot.lane.b32.xlu0 %v1296, 48
    %v1420 = vpop.permute.xlu0 %1419
    %1421 = vrot.lane.b32.xlu0 %v1299, 48
    %v1422 = vpop.permute.xlu0 %1421
    %1423 = vrot.lane.b32.xlu0 %v1302, 48
    %v1424 = vpop.permute.xlu0 %1423
    %1429 = vst.msk [vmem:[#allocation2 + $0x40] sm:$0xff] %vm403, %v1418
    %1430 = vst.msk [vmem:[#allocation2 + $0x48] sm:$0xff] %vm403, %v1420
    %1431 = vst.msk [vmem:[#allocation2 + $0x50] sm:$0xff] %vm403, %v1422
    %1432 = vst.msk [vmem:[#allocation2 + $0x58] sm:$0xff] %vm403, %v1424
    %1433 = vrot.lane.b32.xlu0 %v1305, 80
    %v1434 = vpop.permute.xlu0 %1433
    %1435 = vrot.lane.b32.xlu0 %v1308, 80
    %v1436 = vpop.permute.xlu0 %1435
    %1437 = vrot.lane.b32.xlu0 %v1311, 80
    %v1438 = vpop.permute.xlu0 %1437
    %1439 = vrot.lane.b32.xlu0 %v1314, 80
    %v1440 = vpop.permute.xlu0 %1439
    %1445 = vst.msk [vmem:[#allocation2 + $0x60] sm:$0xff] %vm420, %v1434
    %1446 = vst.msk [vmem:[#allocation2 + $0x68] sm:$0xff] %vm420, %v1436
    %1447 = vst.msk [vmem:[#allocation2 + $0x70] sm:$0xff] %vm420, %v1438
    %1448 = vst.msk [vmem:[#allocation2 + $0x78] sm:$0xff] %vm420, %v1440
    %v1449 = vld [vmem:[#allocation3] sm:$0xff]
    %v1450 = vld [vmem:[#allocation3 + $0x8] sm:$0xff]
    %v1451 = vld [vmem:[#allocation3 + $0x10] sm:$0xff]
    %v1452 = vld [vmem:[#allocation3 + $0x18] sm:$0xff]
    %v1453 = vld [vmem:[#allocation3 + $0x20] sm:$0xff]
    %v1454 = vld [vmem:[#allocation3 + $0x28] sm:$0xff]
    %v1455 = vld [vmem:[#allocation3 + $0x30] sm:$0xff]
    %v1456 = vld [vmem:[#allocation3 + $0x38] sm:$0xff]
    %v1457 = vld [vmem:[#allocation3 + $0x40] sm:$0xff]
    %v1458 = vld [vmem:[#allocation3 + $0x48] sm:$0xff]
    %v1459 = vld [vmem:[#allocation3 + $0x50] sm:$0xff]
    %v1460 = vld [vmem:[#allocation3 + $0x58] sm:$0xff]
    %v1461 = vld [vmem:[#allocation3 + $0x60] sm:$0xff]
    %v1462 = vld [vmem:[#allocation3 + $0x68] sm:$0xff]
    %v1463 = vld [vmem:[#allocation3 + $0x70] sm:$0xff]
    %v1464 = vld [vmem:[#allocation3 + $0x78] sm:$0xff]
    %v1465 = vsel %vm369, %v1449, %v1333
    %v1466 = vsel %vm369, %v1450, %v1335
    %v1467 = vsel %vm369, %v1451, %v1337
    %v1468 = vsel %vm369, %v1452, %v1339
    %v1469 = vsel %vm369, %v1453, %v1341
    %v1470 = vsel %vm369, %v1454, %v1343
    %v1471 = vsel %vm369, %v1455, %v1345
    %v1472 = vsel %vm369, %v1456, %v1347
    %v1473 = vsel %vm369, %v1457, %v1349
    %v1474 = vsel %vm369, %v1458, %v1351
    %v1475 = vsel %vm369, %v1459, %v1353
    %v1476 = vsel %vm369, %v1460, %v1355
    %v1477 = vsel %vm369, %v1461, %v1357
    %v1478 = vsel %vm369, %v1462, %v1359
    %v1479 = vsel %vm369, %v1463, %v1361
    %v1480 = vsel %vm369, %v1464, %v1363
    %v1481 = vld [vmem:[#allocation2] sm:$0xff]
    %v1482 = vld [vmem:[#allocation2 + $0x8] sm:$0xff]
    %v1483 = vld [vmem:[#allocation2 + $0x10] sm:$0xff]
    %v1484 = vld [vmem:[#allocation2 + $0x18] sm:$0xff]
    %v1485 = vld [vmem:[#allocation2 + $0x20] sm:$0xff]
    %v1486 = vld [vmem:[#allocation2 + $0x28] sm:$0xff]
    %v1487 = vld [vmem:[#allocation2 + $0x30] sm:$0xff]
    %v1488 = vld [vmem:[#allocation2 + $0x38] sm:$0xff]
    %v1489 = vld [vmem:[#allocation2 + $0x40] sm:$0xff]
    %v1490 = vld [vmem:[#allocation2 + $0x48] sm:$0xff]
    %v1491 = vld [vmem:[#allocation2 + $0x50] sm:$0xff]
    %v1492 = vld [vmem:[#allocation2 + $0x58] sm:$0xff]
    %v1493 = vld [vmem:[#allocation2 + $0x60] sm:$0xff]
    %v1494 = vld [vmem:[#allocation2 + $0x68] sm:$0xff]
    %v1495 = vld [vmem:[#allocation2 + $0x70] sm:$0xff]
    %v1496 = vld [vmem:[#allocation2 + $0x78] sm:$0xff]
    %1497 = vmatpush.msra.mxu0 %v1480
    %1498 = vmatpush.msra.mxu0 %v1479
    %1499 = vmatpush.msra.mxu0 %v1478
    %1500 = vmatpush.msra.mxu0 %v1477
    %1501 = vmatpush.msra.mxu0 %v1476
    %1502 = vmatpush.msra.mxu0 %v1475
    %1503 = vmatpush.msra.mxu0 %v1474
    %1504 = vmatpush.msra.mxu0 %v1473
    %1505 = vmatpush.msra.mxu0 %v1472
    %1506 = vmatpush.msra.mxu0 %v1471
    %1507 = vmatpush.msra.mxu0 %v1470
    %1508 = vmatpush.msra.mxu0 %v1469
    %1509 = vmatpush.msra.mxu0 %v1468
    %1510 = vmatpush.msra.mxu0 %v1467
    %1511 = vmatpush.msra.mxu0 %v1466
    %1512 = vmatpush.msra.mxu0 %v1465
    %1513 = vmatmul.f32.gmra.mxu0 %v1481
    %v1514 = vpop.f32.mrf.mxu0
    %v1515 = vadd.f32 0.0, %v1514
    %1516 = vmatmul.f32.gmra.mxu0 %v1482
    %v1517 = vpop.f32.mrf.mxu0
    %v1518 = vadd.f32 0.0, %v1517
    %1519 = vmatmul.f32.gmra.mxu0 %v1483
    %v1520 = vpop.f32.mrf.mxu0
    %v1521 = vadd.f32 0.0, %v1520
    %1522 = vmatmul.f32.gmra.mxu0 %v1484
    %v1523 = vpop.f32.mrf.mxu0
    %v1524 = vadd.f32 0.0, %v1523
    %1525 = vmatmul.f32.gmra.mxu0 %v1485
    %v1526 = vpop.f32.mrf.mxu0
    %v1527 = vadd.f32 0.0, %v1526
    %1528 = vmatmul.f32.gmra.mxu0 %v1486
    %v1529 = vpop.f32.mrf.mxu0
    %v1530 = vadd.f32 0.0, %v1529
    %1531 = vmatmul.f32.gmra.mxu0 %v1487
    %v1532 = vpop.f32.mrf.mxu0
    %v1533 = vadd.f32 0.0, %v1532
    %1534 = vmatmul.f32.gmra.mxu0 %v1488
    %v1535 = vpop.f32.mrf.mxu0
    %v1536 = vadd.f32 0.0, %v1535
    %1537 = vmatmul.f32.gmra.mxu0 %v1489
    %v1538 = vpop.f32.mrf.mxu0
    %v1539 = vadd.f32 0.0, %v1538
    %1540 = vmatmul.f32.gmra.mxu0 %v1490
    %v1541 = vpop.f32.mrf.mxu0
    %v1542 = vadd.f32 0.0, %v1541
    %1543 = vmatmul.f32.gmra.mxu0 %v1491
    %v1544 = vpop.f32.mrf.mxu0
    %v1545 = vadd.f32 0.0, %v1544
    %1546 = vmatmul.f32.gmra.mxu0 %v1492
    %v1547 = vpop.f32.mrf.mxu0
    %v1548 = vadd.f32 0.0, %v1547
    %1549 = vmatmul.f32.gmra.mxu0 %v1493
    %v1550 = vpop.f32.mrf.mxu0
    %v1551 = vadd.f32 0.0, %v1550
    %1552 = vmatmul.f32.gmra.mxu0 %v1494
    %v1553 = vpop.f32.mrf.mxu0
    %v1554 = vadd.f32 0.0, %v1553
    %1555 = vmatmul.f32.gmra.mxu0 %v1495
    %v1556 = vpop.f32.mrf.mxu0
    %v1557 = vadd.f32 0.0, %v1556
    %1558 = vmatmul.f32.gmra.mxu0 %v1496
    %v1559 = vpop.f32.mrf.mxu0
    %v1560 = vadd.f32 0.0, %v1559
    %1561 = vdwg.mxu0
    %1578 = vrot.lane.b32.xlu0 %v1515, 32
    %v1579 = vpop.permute.xlu0 %1578
    %1580 = vrot.lane.b32.xlu0 %v1518, 32
    %v1581 = vpop.permute.xlu0 %1580
    %1582 = vrot.lane.b32.xlu0 %v1521, 32
    %v1583 = vpop.permute.xlu0 %1582
    %1584 = vrot.lane.b32.xlu0 %v1524, 32
    %v1585 = vpop.permute.xlu0 %1584
    %1586 = vrot.lane.b32.xlu0 %v1527, 32
    %v1587 = vpop.permute.xlu0 %1586
    %1588 = vrot.lane.b32.xlu0 %v1530, 32
    %v1589 = vpop.permute.xlu0 %1588
    %1590 = vrot.lane.b32.xlu0 %v1533, 32
    %v1591 = vpop.permute.xlu0 %1590
    %1592 = vrot.lane.b32.xlu0 %v1536, 32
    %v1593 = vpop.permute.xlu0 %1592
    %1594 = vrot.lane.b32.xlu0 %v1539, 32
    %v1595 = vpop.permute.xlu0 %1594
    %1596 = vrot.lane.b32.xlu0 %v1542, 32
    %v1597 = vpop.permute.xlu0 %1596
    %1598 = vrot.lane.b32.xlu0 %v1545, 32
    %v1599 = vpop.permute.xlu0 %1598
    %1600 = vrot.lane.b32.xlu0 %v1548, 32
    %v1601 = vpop.permute.xlu0 %1600
    %1602 = vrot.lane.b32.xlu0 %v1551, 32
    %v1603 = vpop.permute.xlu0 %1602
    %1604 = vrot.lane.b32.xlu0 %v1554, 32
    %v1605 = vpop.permute.xlu0 %1604
    %1606 = vrot.lane.b32.xlu0 %v1557, 32
    %v1607 = vpop.permute.xlu0 %1606
    %1608 = vrot.lane.b32.xlu0 %v1560, 32
    %v1609 = vpop.permute.xlu0 %1608
    %1626 = vst.msk [vmem:[#allocation3] sm:$0xff] %vm386, %v1579
    %1627 = vst.msk [vmem:[#allocation3 + $0x8] sm:$0xff] %vm386, %v1581
    %1628 = vst.msk [vmem:[#allocation3 + $0x10] sm:$0xff] %vm386, %v1583
    %1629 = vst.msk [vmem:[#allocation3 + $0x18] sm:$0xff] %vm386, %v1585
    %1630 = vst.msk [vmem:[#allocation3 + $0x20] sm:$0xff] %vm386, %v1587
    %1631 = vst.msk [vmem:[#allocation3 + $0x28] sm:$0xff] %vm386, %v1589
    %1632 = vst.msk [vmem:[#allocation3 + $0x30] sm:$0xff] %vm386, %v1591
    %1633 = vst.msk [vmem:[#allocation3 + $0x38] sm:$0xff] %vm386, %v1593
    %1634 = vst.msk [vmem:[#allocation3 + $0x40] sm:$0xff] %vm386, %v1595
    %1635 = vst.msk [vmem:[#allocation3 + $0x48] sm:$0xff] %vm386, %v1597
    %1636 = vst.msk [vmem:[#allocation3 + $0x50] sm:$0xff] %vm386, %v1599
    %1637 = vst.msk [vmem:[#allocation3 + $0x58] sm:$0xff] %vm386, %v1601
    %1638 = vst.msk [vmem:[#allocation3 + $0x60] sm:$0xff] %vm386, %v1603
    %1639 = vst.msk [vmem:[#allocation3 + $0x68] sm:$0xff] %vm386, %v1605
    %1640 = vst.msk [vmem:[#allocation3 + $0x70] sm:$0xff] %vm386, %v1607
    %1641 = vst.msk [vmem:[#allocation3 + $0x78] sm:$0xff] %vm386, %v1609
    %1642 = vrot.lane.b32.xlu0 %v1515, 96
    %v1643 = vpop.permute.xlu0 %1642
    %1644 = vrot.lane.b32.xlu0 %v1518, 96
    %v1645 = vpop.permute.xlu0 %1644
    %1646 = vrot.lane.b32.xlu0 %v1521, 96
    %v1647 = vpop.permute.xlu0 %1646
    %1648 = vrot.lane.b32.xlu0 %v1524, 96
    %v1649 = vpop.permute.xlu0 %1648
    %1654 = vst.msk [vmem:[#allocation2] sm:$0xff] %vm369, %v1643
    %1655 = vst.msk [vmem:[#allocation2 + $0x8] sm:$0xff] %vm369, %v1645
    %1656 = vst.msk [vmem:[#allocation2 + $0x10] sm:$0xff] %vm369, %v1647
    %1657 = vst.msk [vmem:[#allocation2 + $0x18] sm:$0xff] %vm369, %v1649
    %1658 = vst.msk [vmem:[#allocation2 + $0x20] sm:$0xff] %vm386, %v1527
    %1659 = vst.msk [vmem:[#allocation2 + $0x28] sm:$0xff] %vm386, %v1530
    %1660 = vst.msk [vmem:[#allocation2 + $0x30] sm:$0xff] %vm386, %v1533
    %1661 = vst.msk [vmem:[#allocation2 + $0x38] sm:$0xff] %vm386, %v1536
    %1662 = vst.msk [vmem:[#allocation2 + $0x40] sm:$0xff] %vm403, %v1595
    %1663 = vst.msk [vmem:[#allocation2 + $0x48] sm:$0xff] %vm403, %v1597
    %1664 = vst.msk [vmem:[#allocation2 + $0x50] sm:$0xff] %vm403, %v1599
    %1665 = vst.msk [vmem:[#allocation2 + $0x58] sm:$0xff] %vm403, %v1601
    %1666 = vrot.lane.b32.xlu0 %v1551, 64
    %v1667 = vpop.permute.xlu0 %1666
    %1668 = vrot.lane.b32.xlu0 %v1554, 64
    %v1669 = vpop.permute.xlu0 %1668
    %1670 = vrot.lane.b32.xlu0 %v1557, 64
    %v1671 = vpop.permute.xlu0 %1670
    %1672 = vrot.lane.b32.xlu0 %v1560, 64
    %v1673 = vpop.permute.xlu0 %1672
    %1678 = vst.msk [vmem:[#allocation2 + $0x60] sm:$0xff] %vm420, %v1667
    %1679 = vst.msk [vmem:[#allocation2 + $0x68] sm:$0xff] %vm420, %v1669
    %1680 = vst.msk [vmem:[#allocation2 + $0x70] sm:$0xff] %vm420, %v1671
    %1681 = vst.msk [vmem:[#allocation2 + $0x78] sm:$0xff] %vm420, %v1673
    %v1682 = vld [vmem:[#allocation2] sm:$0xff]
    %v1683 = vld [vmem:[#allocation2 + $0x8] sm:$0xff]
    %v1684 = vld [vmem:[#allocation2 + $0x10] sm:$0xff]
    %v1685 = vld [vmem:[#allocation2 + $0x18] sm:$0xff]
    %v1686 = vld [vmem:[#allocation2 + $0x20] sm:$0xff]
    %v1687 = vld [vmem:[#allocation2 + $0x28] sm:$0xff]
    %v1688 = vld [vmem:[#allocation2 + $0x30] sm:$0xff]
    %v1689 = vld [vmem:[#allocation2 + $0x38] sm:$0xff]
    %v1690 = vld [vmem:[#allocation2 + $0x40] sm:$0xff]
    %v1691 = vld [vmem:[#allocation2 + $0x48] sm:$0xff]
    %v1692 = vld [vmem:[#allocation2 + $0x50] sm:$0xff]
    %v1693 = vld [vmem:[#allocation2 + $0x58] sm:$0xff]
    %v1694 = vld [vmem:[#allocation2 + $0x60] sm:$0xff]
    %v1695 = vld [vmem:[#allocation2 + $0x68] sm:$0xff]
    %v1696 = vld [vmem:[#allocation2 + $0x70] sm:$0xff]
    %v1697 = vld [vmem:[#allocation2 + $0x78] sm:$0xff]
    %v1698 = vld [vmem:[#allocation3] sm:$0xff]
    %v1699 = vld [vmem:[#allocation3 + $0x8] sm:$0xff]
    %v1700 = vld [vmem:[#allocation3 + $0x10] sm:$0xff]
    %v1701 = vld [vmem:[#allocation3 + $0x18] sm:$0xff]
    %v1702 = vld [vmem:[#allocation3 + $0x20] sm:$0xff]
    %v1703 = vld [vmem:[#allocation3 + $0x28] sm:$0xff]
    %v1704 = vld [vmem:[#allocation3 + $0x30] sm:$0xff]
    %v1705 = vld [vmem:[#allocation3 + $0x38] sm:$0xff]
    %v1706 = vld [vmem:[#allocation3 + $0x40] sm:$0xff]
    %v1707 = vld [vmem:[#allocation3 + $0x48] sm:$0xff]
    %v1708 = vld [vmem:[#allocation3 + $0x50] sm:$0xff]
    %v1709 = vld [vmem:[#allocation3 + $0x58] sm:$0xff]
    %v1710 = vld [vmem:[#allocation3 + $0x60] sm:$0xff]
    %v1711 = vld [vmem:[#allocation3 + $0x68] sm:$0xff]
    %v1712 = vld [vmem:[#allocation3 + $0x70] sm:$0xff]
    %v1713 = vld [vmem:[#allocation3 + $0x78] sm:$0xff]
    %1714 = vmatpush.msra.mxu0 %v1713
    %1715 = vmatpush.msra.mxu0 %v1712
    %1716 = vmatpush.msra.mxu0 %v1711
    %1717 = vmatpush.msra.mxu0 %v1710
    %1718 = vmatpush.msra.mxu0 %v1709
    %1719 = vmatpush.msra.mxu0 %v1708
    %1720 = vmatpush.msra.mxu0 %v1707
    %1721 = vmatpush.msra.mxu0 %v1706
    %1722 = vmatpush.msra.mxu0 %v1705
    %1723 = vmatpush.msra.mxu0 %v1704
    %1724 = vmatpush.msra.mxu0 %v1703
    %1725 = vmatpush.msra.mxu0 %v1702
    %1726 = vmatpush.msra.mxu0 %v1701
    %1727 = vmatpush.msra.mxu0 %v1700
    %1728 = vmatpush.msra.mxu0 %v1699
    %1729 = vmatpush.msra.mxu0 %v1698
    %1730 = vmatmul.f32.gmra.mxu0 %v1682
    %v1731 = vpop.f32.mrf.mxu0
    %v1732 = vadd.f32 0.0, %v1731
    %1733 = vmatmul.f32.gmra.mxu0 %v1683
    %v1734 = vpop.f32.mrf.mxu0
    %v1735 = vadd.f32 0.0, %v1734
    %1736 = vmatmul.f32.gmra.mxu0 %v1684
    %v1737 = vpop.f32.mrf.mxu0
    %v1738 = vadd.f32 0.0, %v1737
    %1739 = vmatmul.f32.gmra.mxu0 %v1685
    %v1740 = vpop.f32.mrf.mxu0
    %v1741 = vadd.f32 0.0, %v1740
    %1742 = vmatmul.f32.gmra.mxu0 %v1686
    %v1743 = vpop.f32.mrf.mxu0
    %v1744 = vadd.f32 0.0, %v1743
    %1745 = vmatmul.f32.gmra.mxu0 %v1687
    %v1746 = vpop.f32.mrf.mxu0
    %v1747 = vadd.f32 0.0, %v1746
    %1748 = vmatmul.f32.gmra.mxu0 %v1688
    %v1749 = vpop.f32.mrf.mxu0
    %v1750 = vadd.f32 0.0, %v1749
    %1751 = vmatmul.f32.gmra.mxu0 %v1689
    %v1752 = vpop.f32.mrf.mxu0
    %v1753 = vadd.f32 0.0, %v1752
    %1754 = vmatmul.f32.gmra.mxu0 %v1690
    %v1755 = vpop.f32.mrf.mxu0
    %v1756 = vadd.f32 0.0, %v1755
    %1757 = vmatmul.f32.gmra.mxu0 %v1691
    %v1758 = vpop.f32.mrf.mxu0
    %v1759 = vadd.f32 0.0, %v1758
    %1760 = vmatmul.f32.gmra.mxu0 %v1692
    %v1761 = vpop.f32.mrf.mxu0
    %v1762 = vadd.f32 0.0, %v1761
    %1763 = vmatmul.f32.gmra.mxu0 %v1693
    %v1764 = vpop.f32.mrf.mxu0
    %v1765 = vadd.f32 0.0, %v1764
    %1766 = vmatmul.f32.gmra.mxu0 %v1694
    %v1767 = vpop.f32.mrf.mxu0
    %v1768 = vadd.f32 0.0, %v1767
    %1769 = vmatmul.f32.gmra.mxu0 %v1695
    %v1770 = vpop.f32.mrf.mxu0
    %v1771 = vadd.f32 0.0, %v1770
    %1772 = vmatmul.f32.gmra.mxu0 %v1696
    %v1773 = vpop.f32.mrf.mxu0
    %v1774 = vadd.f32 0.0, %v1773
    %1775 = vmatmul.f32.gmra.mxu0 %v1697
    %v1776 = vpop.f32.mrf.mxu0
    %v1777 = vadd.f32 0.0, %v1776
    %1778 = vdwg.mxu0
    %1795 = vrot.lane.b32.xlu0 %v1732, 64
    %v1796 = vpop.permute.xlu0 %1795
    %1797 = vrot.lane.b32.xlu0 %v1735, 64
    %v1798 = vpop.permute.xlu0 %1797
    %1799 = vrot.lane.b32.xlu0 %v1738, 64
    %v1800 = vpop.permute.xlu0 %1799
    %1801 = vrot.lane.b32.xlu0 %v1741, 64
    %v1802 = vpop.permute.xlu0 %1801
    %1803 = vrot.lane.b32.xlu0 %v1744, 64
    %v1804 = vpop.permute.xlu0 %1803
    %1805 = vrot.lane.b32.xlu0 %v1747, 64
    %v1806 = vpop.permute.xlu0 %1805
    %1807 = vrot.lane.b32.xlu0 %v1750, 64
    %v1808 = vpop.permute.xlu0 %1807
    %1809 = vrot.lane.b32.xlu0 %v1753, 64
    %v1810 = vpop.permute.xlu0 %1809
    %1811 = vrot.lane.b32.xlu0 %v1756, 64
    %v1812 = vpop.permute.xlu0 %1811
    %1813 = vrot.lane.b32.xlu0 %v1759, 64
    %v1814 = vpop.permute.xlu0 %1813
    %1815 = vrot.lane.b32.xlu0 %v1762, 64
    %v1816 = vpop.permute.xlu0 %1815
    %1817 = vrot.lane.b32.xlu0 %v1765, 64
    %v1818 = vpop.permute.xlu0 %1817
    %1819 = vrot.lane.b32.xlu0 %v1768, 64
    %v1820 = vpop.permute.xlu0 %1819
    %1821 = vrot.lane.b32.xlu0 %v1771, 64
    %v1822 = vpop.permute.xlu0 %1821
    %1823 = vrot.lane.b32.xlu0 %v1774, 64
    %v1824 = vpop.permute.xlu0 %1823
    %1825 = vrot.lane.b32.xlu0 %v1777, 64
    %v1826 = vpop.permute.xlu0 %1825
    %vm1843 = vcmask 1048064
    %1844 = vst.msk [vmem:[#allocation3] sm:$0xff] %vm1843, %v1796
    %1845 = vst.msk [vmem:[#allocation3 + $0x8] sm:$0xff] %vm1843, %v1798
    %1846 = vst.msk [vmem:[#allocation3 + $0x10] sm:$0xff] %vm1843, %v1800
    %1847 = vst.msk [vmem:[#allocation3 + $0x18] sm:$0xff] %vm1843, %v1802
    %1848 = vst.msk [vmem:[#allocation3 + $0x20] sm:$0xff] %vm1843, %v1804
    %1849 = vst.msk [vmem:[#allocation3 + $0x28] sm:$0xff] %vm1843, %v1806
    %1850 = vst.msk [vmem:[#allocation3 + $0x30] sm:$0xff] %vm1843, %v1808
    %1851 = vst.msk [vmem:[#allocation3 + $0x38] sm:$0xff] %vm1843, %v1810
    %1852 = vst.msk [vmem:[#allocation3 + $0x40] sm:$0xff] %vm1843, %v1812
    %1853 = vst.msk [vmem:[#allocation3 + $0x48] sm:$0xff] %vm1843, %v1814
    %1854 = vst.msk [vmem:[#allocation3 + $0x50] sm:$0xff] %vm1843, %v1816
    %1855 = vst.msk [vmem:[#allocation3 + $0x58] sm:$0xff] %vm1843, %v1818
    %1856 = vst.msk [vmem:[#allocation3 + $0x60] sm:$0xff] %vm1843, %v1820
    %1857 = vst.msk [vmem:[#allocation3 + $0x68] sm:$0xff] %vm1843, %v1822
    %1858 = vst.msk [vmem:[#allocation3 + $0x70] sm:$0xff] %vm1843, %v1824
    %1859 = vst.msk [vmem:[#allocation3 + $0x78] sm:$0xff] %vm1843, %v1826
    %v1860 = vld [vmem:[%s3] sm:$0xff]
    %v1861 = vld [vmem:[#allocation3] sm:$0xff]
    %v1862 = vld [vmem:[#allocation3 + $0x8] sm:$0xff]
    %v1863 = vld [vmem:[#allocation3 + $0x10] sm:$0xff]
    %v1864 = vld [vmem:[#allocation3 + $0x18] sm:$0xff]
    %v1865 = vld [vmem:[#allocation3 + $0x20] sm:$0xff]
    %v1866 = vld [vmem:[#allocation3 + $0x28] sm:$0xff]
    %v1867 = vld [vmem:[#allocation3 + $0x30] sm:$0xff]
    %v1868 = vld [vmem:[#allocation3 + $0x38] sm:$0xff]
    %v1869 = vld [vmem:[#allocation3 + $0x40] sm:$0xff]
    %v1870 = vld [vmem:[#allocation3 + $0x48] sm:$0xff]
    %v1871 = vld [vmem:[#allocation3 + $0x50] sm:$0xff]
    %v1872 = vld [vmem:[#allocation3 + $0x58] sm:$0xff]
    %v1873 = vld [vmem:[#allocation3 + $0x60] sm:$0xff]
    %v1874 = vld [vmem:[#allocation3 + $0x68] sm:$0xff]
    %v1875 = vld [vmem:[#allocation3 + $0x70] sm:$0xff]
    %v1876 = vld [vmem:[#allocation3 + $0x78] sm:$0xff]
    %1877 = vmatpush.msra.mxu0 %v1876
    %1878 = vmatpush.msra.mxu0 %v1875
    %1879 = vmatpush.msra.mxu0 %v1874
    %1880 = vmatpush.msra.mxu0 %v1873
    %1881 = vmatpush.msra.mxu0 %v1872
    %1882 = vmatpush.msra.mxu0 %v1871
    %1883 = vmatpush.msra.mxu0 %v1870
    %1884 = vmatpush.msra.mxu0 %v1869
    %1885 = vmatpush.msra.mxu0 %v1868
    %1886 = vmatpush.msra.mxu0 %v1867
    %1887 = vmatpush.msra.mxu0 %v1866
    %1888 = vmatpush.msra.mxu0 %v1865
    %1889 = vmatpush.msra.mxu0 %v1864
    %1890 = vmatpush.msra.mxu0 %v1863
    %1891 = vmatpush.msra.mxu0 %v1862
    %1892 = vmatpush.msra.mxu0 %v1861
    %1893 = vmatmul.f32.gmra.mxu0 %v1860
    %v1894 = vpop.f32.mrf.mxu0
    %v1895 = vadd.f32 0.0, %v1894
    %1896 = vdwg.mxu0
    %1897 = vst [vmem:[#allocation4] sm:$0xff] %v1895
    // Predicated region
    $region18: #{sskernel_forward.1} parent=1 // pred_check
      _
    $region19: #{sskernel_forward.1} parent=1 // pred_check_branch
      %1899 = sbr.rel (0) target = $region21
    $region20: #{sskernel_forward.1} parent=1 // pred_region
      %1901 = vsyncadd [#allocation5], 0
      %s1903 = sshll.u32 [#allocation4], 4
      %s1904 = int_to_ptr.vmem [resolvable:$true] %s1903
      %s1905 = sshll.u32 %s4, 4
      %s1906 = int_to_ptr.hbm [resolvable:$true] %s1905
      %1908 = dma.vmem_to_hbm [thread:$0]  %s1904, 128, %s1906, [#allocation5]
    $region21: #{sskernel_forward.1} parent=1 // pred_fallthru
      _
    // Predicated region
    $region22: #{sskernel_forward.1} parent=1 // pred_check
      _
    $region23: #{sskernel_forward.1} parent=1 // pred_check_branch
      %1910 = sbr.rel (0) target = $region25
    $region24: #{sskernel_forward.1} parent=1 // pred_region
      %1912 = dma.done [#allocation5], 128
    $region25: #{sskernel_forward.1} parent=1 // pred_fallthru
      _
    %1913 = vsyncpa [#allocation5], 1

</llo_original>
